<compile_context>
chip_gen: v7x
topology: tpu7x:2x2x1
jax: 0.10.0
libtpu: 0.0.40
codegen_flags: <defaults>
</compile_context>

<pallas_src>
import functools

import jax
import jax.numpy as jnp
from jax import lax
from jax.experimental import pallas as pl
from jax.experimental.pallas import tpu as pltpu


# ----------------------------------------------------------------------------
# Fused kernel
# ----------------------------------------------------------------------------
def _bilstm_kernel(*refs, T, B, H, num_layers):
    f32 = jnp.float32
    bf16 = jnp.bfloat16
    G = 2 * H                                  # per-gate width: [fwd H | bwd H]
    n_in = 1 + 3 * num_layers + 4
    x_ref = refs[0]
    wfc1_ref, bfc1_ref, wfc2_ref, bfc2_ref = refs[1 + 3 * num_layers:n_in]
    out_ref = refs[n_in]
    gx_ref, sq_ref = refs[n_in + 1:]

    # Lane masks, hoisted once: fwd lanes are the first H of every 2H gate
    # block; for the 2H-wide hidden state fwd is lanes [0, H).
    gate_lane = lax.broadcasted_iota(jnp.int32, (B, 8 * H), 1)
    fwd_gate_mask = (gate_lane % G) < H
    h_lane = lax.broadcasted_iota(jnp.int32, (B, G), 1)
    fwd_h_mask = h_lane < H

    h = None
    h_t0 = None        # h at loop index 0 of the last layer (bwd hidden @ T-1)
    for layer in range(num_layers):
        wx_ref, b_ref, whh_ref = refs[1 + 3 * layer:1 + 3 * (layer + 1)]
        last = layer == num_layers - 1

        # Input projection for the whole sequence: ONE dense bf16
        # (T*B, Din) @ (Din, 8H) MXU matmul, bias folded in (both the fwd and
        # bwd halves of every row carry their own bias; the per-step select
        # picks each column from exactly one row -> bias counted once).
        xin = x_ref[...] if layer == 0 else sq_ref[...].astype(bf16)
        gx_ref[...] = (jnp.dot(xin, wx_ref[...], preferred_element_type=f32)
                       + b_ref[...])

        whh = whh_ref[...]                     # (2H, 8H) bf16, held in vregs

        # ---- step s == 0 peeled: h = c = 0 -> no h @ W_hh, no f-gate -------
        g0 = jnp.where(fwd_gate_mask,
                       gx_ref[pl.ds(0, B)],
                       gx_ref[pl.ds((T - 1) * B, B)])
        i0 = jax.nn.sigmoid(g0[:, 0 * G:1 * G])
        n0 = jnp.tanh(g0[:, 2 * G:3 * G])
        o0 = jax.nn.sigmoid(g0[:, 3 * G:4 * G])
        c = i0 * n0
        h = o0 * jnp.tanh(c)
        h_t0 = h                               # bwd half is h_bwd(T-1)
        if not last:
            sq_ref[pl.ds(0, B), :H] = h[:, :H]
            sq_ref[pl.ds((T - 1) * B, B), H:] = h[:, H:]

        # ---- steps 1 .. T-1 -------------------------------------------------
        def step(s, carry):
            h, c = carry
            rf = pl.multiple_of(s * B, B)              # fwd reads time s
            rb = pl.multiple_of((T - 1 - s) * B, B)    # bwd reads time T-1-s
            gates = jnp.where(fwd_gate_mask,
                              gx_ref[pl.ds(rf, B)],
                              gx_ref[pl.ds(rb, B)])
            gates = gates + jnp.dot(h.astype(bf16), whh,
                                    preferred_element_type=f32)
            i = jax.nn.sigmoid(gates[:, 0 * G:1 * G])
            f = jax.nn.sigmoid(gates[:, 1 * G:2 * G])
            n = jnp.tanh(gates[:, 2 * G:3 * G])
            o = jax.nn.sigmoid(gates[:, 3 * G:4 * G])
            c = f * c + i * n
            h = o * jnp.tanh(c)
            if not last:
                sq_ref[pl.ds(rf, B), :H] = h[:, :H]
                sq_ref[pl.ds(rb, B), H:] = h[:, H:]
            return h, c

        h, c = lax.fori_loop(1, T, step, (h, c), unroll=True)

    # MLP head on [h_fwd(T-1) | h_bwd(T-1)]: fwd half from the final carry,
    # bwd half from the peeled step -- single lane select, no concat.
    feat = jnp.where(fwd_h_mask, h, h_t0).astype(bf16)              # (B, 2H)
    z = (jnp.dot(feat, wfc1_ref[...], preferred_element_type=f32)
         + bfc1_ref[...])
    z = jnp.maximum(z, 0.0)
    out_ref[...] = (jnp.dot(z.astype(bf16), wfc2_ref[...],
                            preferred_element_type=f32) + bfc2_ref[...])


# ----------------------------------------------------------------------------
# Wrapper
# ----------------------------------------------------------------------------
def bilstm_forward(x, packed, hidden_size):
    """x: (B, T, input_size) -> (B, output_size)."""
    B, T, Din = x.shape
    assert T >= 1
    H = hidden_size
    num_layers = len(packed["layers"])
    out_dim = packed["fc2_w"].shape[-1]
    # time-major flat rows (t, b) so per-step reads are aligned (B, 8H) slabs
    xf = jnp.transpose(x, (1, 0, 2)).reshape(T * B, Din).astype(jnp.bfloat16)

    args = [xf]
    for wx, bias, whh in packed["layers"]:
        args += [wx, bias, whh]
    args += [packed["fc1_w"], packed["fc1_b"], packed["fc2_w"], packed["fc2_b"]]

    kernel = functools.partial(_bilstm_kernel, T=T, B=B, H=H,
                               num_layers=num_layers)
    return pl.pallas_call(
        kernel,
        out_shape=jax.ShapeDtypeStruct((B, out_dim), jnp.float32),
        in_specs=[pl.BlockSpec(memory_space=pltpu.MemorySpace.VMEM)] * len(args),
        out_specs=pl.BlockSpec(memory_space=pltpu.MemorySpace.VMEM),
        scratch_shapes=[
            pltpu.VMEM((T * B, 8 * H), jnp.float32),   # gx: x@W_x + b, all t
            pltpu.VMEM((T * B, 2 * H), jnp.float32),   # layer output sequence
        ],
        compiler_params=pltpu.CompilerParams(
            vmem_limit_bytes=32 * 1024 * 1024),
    )(*args)


# ----------------------------------------------------------------------------
# Parameter init (matches nn.LSTM / nn.Linear shapes) + kernel-layout packing
# ----------------------------------------------------------------------------
def init_params(key, input_size, hidden_size, num_layers, output_size, fc_size):
    params = {"lstm": []}
    k_lstm = 1.0 / float(hidden_size) ** 0.5
    for layer in range(num_layers):
        din = input_size if layer == 0 else 2 * hidden_size
        dirs = []
        for _d in range(2):                                # fwd, bwd
            key, k1, k2, k3, k4 = jax.random.split(key, 5)
            w_ih = jax.random.uniform(k1, (din, 4 * hidden_size),
                                      jnp.float32, -k_lstm, k_lstm)
            w_hh = jax.random.uniform(k2, (hidden_size, 4 * hidden_size),
                                      jnp.float32, -k_lstm, k_lstm)
            b_ih = jax.random.uniform(k3, (4 * hidden_size,),
                                      jnp.float32, -k_lstm, k_lstm)
            b_hh = jax.random.uniform(k4, (4 * hidden_size,),
                                      jnp.float32, -k_lstm, k_lstm)
            dirs.append((w_ih, w_hh, (b_ih + b_hh).reshape(1, -1)))
        params["lstm"].append(tuple(dirs))

    k1v = 1.0 / float(2 * hidden_size) ** 0.5
    k2v = 1.0 / float(fc_size) ** 0.5
    key, a, b, c, d = jax.random.split(key, 5)
    params["fc1_w"] = jax.random.uniform(a, (2 * hidden_size, fc_size),
                                         jnp.float32, -k1v, k1v)
    params["fc1_b"] = jax.random.uniform(b, (1, fc_size), jnp.float32, -k1v, k1v)
    params["fc2_w"] = jax.random.uniform(c, (fc_size, output_size),
                                         jnp.float32, -k2v, k2v)
    params["fc2_b"] = jax.random.uniform(d, (1, output_size),
                                         jnp.float32, -k2v, k2v)
    return params


def pack_params(params, hidden_size):
    """Arrange weights so both directions share one 8H-wide gate vector.

    Column layout: [i(2H) | f(2H) | g(2H) | o(2H)], each gate = [fwd H | bwd H].
    The fwd and bwd input-projection weights land in disjoint columns, so they
    are summed into ONE dense W_x (no zero-padded duplicate). Only the
    recurrent W_hh keeps its (2H, 8H) block-diagonal form (zeros materialized
    once here, never per step). MXU weights are pre-cast to bf16; biases f32.
    """
    H = hidden_size
    bf16 = jnp.bfloat16

    def arrange_cols(w, d):                    # w: (R, 4H), d: 0=fwd, 1=bwd
        R = w.shape[0]
        out = jnp.zeros((R, 8 * H), w.dtype)
        for g in range(4):
            out = out.at[:, g * 2 * H + d * H: g * 2 * H + (d + 1) * H].set(
                w[:, g * H:(g + 1) * H])
        return out

    packed = {"layers": []}
    for (wih_f, whh_f, b_f), (wih_b, whh_b, b_b) in params["lstm"]:
        wx = (arrange_cols(wih_f, 0) + arrange_cols(wih_b, 1)).astype(bf16)
        bias = (arrange_cols(b_f, 0) + arrange_cols(b_b, 1)).astype(jnp.float32)
        whh = jnp.concatenate(
            [arrange_cols(whh_f, 0), arrange_cols(whh_b, 1)],
            axis=0).astype(bf16)                                   # (2H, 8H)
        packed["layers"].append((wx, bias, whh))
    packed["fc1_w"] = params["fc1_w"].astype(bf16)
    packed["fc1_b"] = params["fc1_b"]
    packed["fc2_w"] = params["fc2_w"].astype(bf16)
    packed["fc2_b"] = params["fc2_b"]
    return packed


# ----------------------------------------------------------------------------
# Pure-JAX reference (uses the un-packed f32 params -> validates the packing)
# ----------------------------------------------------------------------------
def _ref_lstm_dir(x_tbd, w_ih, w_hh, b, H, reverse):
    T, B, _ = x_tbd.shape
    xs = x_tbd[::-1] if reverse else x_tbd

    def step(carry, xt):
        h, c = carry
        gates = xt @ w_ih + h @ w_hh + b
        i = jax.nn.sigmoid(gates[:, :H])
        f = jax.nn.sigmoid(gates[:, H:2 * H])
        g = jnp.tanh(gates[:, 2 * H:3 * H])
        o = jax.nn.sigmoid(gates[:, 3 * H:])
        c = f * c + i * g
        h = o * jnp.tanh(c)
        return (h, c), h

    init = (jnp.zeros((B, H), jnp.float32), jnp.zeros((B, H), jnp.float32))
    _, hs = lax.scan(step, init, xs)
    return hs[::-1] if reverse else hs


def reference_forward(x, params, hidden_size):
    seq = jnp.transpose(x, (1, 0, 2))
    for fwd_p, bwd_p in params["lstm"]:
        h_f = _ref_lstm_dir(seq, *fwd_p, hidden_size, reverse=False)
        h_b = _ref_lstm_dir(seq, *bwd_p, hidden_size, reverse=True)
        seq = jnp.concatenate([h_f, h_b], axis=-1)
    last = seq[-1]
    h = jnp.maximum(last @ params["fc1_w"] + params["fc1_b"], 0.0)
    return h @ params["fc2_w"] + params["fc2_b"]


# ----------------------------------------------------------------------------
if __name__ == "__main__":
    B, T = 8, 8
    input_size, hidden_size, num_layers = 16, 32, 2
    output_size, fc_size = 8, 64

    key = jax.random.PRNGKey(0)
    pkey, xkey = jax.random.split(key)
    params = init_params(pkey, input_size, hidden_size, num_layers,
                         output_size, fc_size)
    packed = pack_params(params, hidden_size)
    x = jax.random.normal(xkey, (B, T, input_size), jnp.float32)

    out = bilstm_forward(x, packed, hidden_size)
    out = jax.block_until_ready(out)
    assert out.shape == (B, output_size), out.shape

    ref = jax.block_until_ready(reference_forward(x, params, hidden_size))
    # Tolerance covers bf16 MXU operands (weights + activation casts); the
    # reference path is full f32. Structural bugs produce >> 3e-2 errors.
    assert jnp.allclose(out, ref, atol=3e-2, rtol=3e-2), \
        float(jnp.max(jnp.abs(out - ref)))

    print("KERNEL_OK")
</pallas_src>

<mosaic_0001>
module attributes {stable_mosaic.version = 11 : i64} {
  func.func @_bilstm_kernel(%arg0: memref<64x16xbf16, #tpu.memory_space<vmem>>, %arg1: memref<16x256xbf16, #tpu.memory_space<vmem>>, %arg2: memref<1x256xf32, #tpu.memory_space<vmem>>, %arg3: memref<64x256xbf16, #tpu.memory_space<vmem>>, %arg4: memref<64x256xbf16, #tpu.memory_space<vmem>>, %arg5: memref<1x256xf32, #tpu.memory_space<vmem>>, %arg6: memref<64x256xbf16, #tpu.memory_space<vmem>>, %arg7: memref<64x64xbf16, #tpu.memory_space<vmem>>, %arg8: memref<1x64xf32, #tpu.memory_space<vmem>>, %arg9: memref<64x8xbf16, #tpu.memory_space<vmem>>, %arg10: memref<1x8xf32, #tpu.memory_space<vmem>>, %arg11: memref<8x8xf32, #tpu.memory_space<vmem>>, %arg12: memref<64x256xf32, #tpu.memory_space<vmem>>, %arg13: memref<64x64xf32, #tpu.memory_space<vmem>>) attributes {dimension_semantics = [], scalar_prefetch = 0 : i64, scratch_operands = 2 : i64, tpu.core_type = #tpu.core_type<tc>} {
    %0 = tpu.iota {dimensions = array<i32: 1>} : vector<8x256xi32>
    %c64_i32 = arith.constant 64 : i32
    %c0_i32 = arith.constant 0 : i32
    %1 = arith.cmpi eq, %c64_i32, %c0_i32 : i32
    %c1_i32 = arith.constant 1 : i32
    %2 = arith.select %1, %c1_i32, %c64_i32 : i32
    %3 = vector.broadcast %2 : i32 to vector<8x256xi32>
    %4 = arith.remsi %0, %3 : vector<8x256xi32>
    %c0_i32_0 = arith.constant 0 : i32
    %5 = vector.broadcast %c0_i32_0 : i32 to vector<8x256xi32>
    %6 = arith.cmpi ne, %4, %5 : vector<8x256xi32>
    %c0_i32_1 = arith.constant 0 : i32
    %7 = vector.broadcast %c0_i32_1 : i32 to vector<8x256xi32>
    %8 = arith.cmpi slt, %4, %7 : vector<8x256xi32>
    %c0_i32_2 = arith.constant 0 : i32
    %9 = arith.cmpi slt, %2, %c0_i32_2 : i32
    %10 = vector.broadcast %9 : i1 to vector<8x256xi1>
    %11 = vector.broadcast %10 : vector<8x256xi1> to vector<8x256xi1>
    %12 = arith.xori %8, %11 : vector<8x256xi1>
    %13 = arith.andi %12, %6 : vector<8x256xi1>
    %14 = vector.broadcast %2 : i32 to vector<8x256xi32>
    %15 = arith.addi %4, %14 : vector<8x256xi32>
    %16 = arith.select %13, %15, %4 : vector<8x256xi1>, vector<8x256xi32>
    %c32_i32 = arith.constant 32 : i32
    %17 = vector.broadcast %c32_i32 : i32 to vector<8x256xi32>
    %18 = arith.cmpi slt, %16, %17 : vector<8x256xi32>
    %19 = tpu.iota {dimensions = array<i32: 1>} : vector<8x64xi32>
    %c32_i32_3 = arith.constant 32 : i32
    %20 = vector.broadcast %c32_i32_3 : i32 to vector<8x64xi32>
    %21 = arith.cmpi slt, %19, %20 : vector<8x64xi32>
    %c0 = arith.constant 0 : index
    %c0_4 = arith.constant 0 : index
    %22 = vector.load %arg0[%c0, %c0_4] : memref<64x16xbf16, #tpu.memory_space<vmem>>, vector<64x16xbf16>
    %c0_5 = arith.constant 0 : index
    %c0_6 = arith.constant 0 : index
    %23 = vector.load %arg1[%c0_5, %c0_6] : memref<16x256xbf16, #tpu.memory_space<vmem>>, vector<16x256xbf16>
    %cst = arith.constant dense<0.000000e+00> : vector<64x256xf32>
    %24 = tpu.matmul %22, %23, %cst {dimension_numbers = #tpu.dot_dimension_numbers<[1], [0], [0], [1], [0, 0, 1, 1], [], []>} : vector<64x16xbf16>, vector<16x256xbf16>, vector<64x256xf32> -> vector<64x256xf32>
    %c0_7 = arith.constant 0 : index
    %c0_8 = arith.constant 0 : index
    %25 = vector.load %arg2[%c0_7, %c0_8] : memref<1x256xf32, #tpu.memory_space<vmem>>, vector<1x256xf32>
    %26 = vector.broadcast %25 : vector<1x256xf32> to vector<64x256xf32>
    %27 = arith.addf %24, %26 : vector<64x256xf32>
    %c0_9 = arith.constant 0 : index
    %c0_10 = arith.constant 0 : index
    %28 = vector.load %arg12[%c0_9, %c0_10] : memref<64x256xf32, #tpu.memory_space<vmem>>, vector<64x256xf32>
    tpu.vector_store %arg12[%c0_9, %c0_10], %27 {strides = array<i32>} : memref<64x256xf32, #tpu.memory_space<vmem>>, vector<64x256xf32>,
    %c0_11 = arith.constant 0 : index
    %c0_12 = arith.constant 0 : index
    %29 = vector.load %arg3[%c0_11, %c0_12] : memref<64x256xbf16, #tpu.memory_space<vmem>>, vector<64x256xbf16>
    %c0_13 = arith.constant 0 : index
    %c0_14 = arith.constant 0 : index
    %30 = vector.load %arg12[%c0_13, %c0_14] : memref<64x256xf32, #tpu.memory_space<vmem>>, vector<8x256xf32>
    %c56 = arith.constant 56 : index
    %c0_15 = arith.constant 0 : index
    %31 = vector.load %arg12[%c56, %c0_15] : memref<64x256xf32, #tpu.memory_space<vmem>>, vector<8x256xf32>
    %32 = arith.select %18, %30, %31 : vector<8x256xi1>, vector<8x256xf32>
    %33 = vector.extract_strided_slice %32 {offsets = [0, 0], sizes = [8, 64], strides = [1, 1]} : vector<8x256xf32> to vector<8x64xf32>
    %34 = arith.negf %33 : vector<8x64xf32>
    %35 = math.exp %34 : vector<8x64xf32>
    %cst_16 = arith.constant 1.000000e+00 : f32
    %36 = vector.broadcast %cst_16 : f32 to vector<8x64xf32>
    %37 = arith.addf %36, %35 : vector<8x64xf32>
    %38 = arith.divf %36, %37 : vector<8x64xf32>
    %39 = vector.extract_strided_slice %32 {offsets = [0, 128], sizes = [8, 64], strides = [1, 1]} : vector<8x256xf32> to vector<8x64xf32>
    %40 = math.tanh %39 : vector<8x64xf32>
    %41 = vector.extract_strided_slice %32 {offsets = [0, 192], sizes = [8, 64], strides = [1, 1]} : vector<8x256xf32> to vector<8x64xf32>
    %42 = arith.negf %41 : vector<8x64xf32>
    %43 = math.exp %42 : vector<8x64xf32>
    %cst_17 = arith.constant 1.000000e+00 : f32
    %44 = vector.broadcast %cst_17 : f32 to vector<8x64xf32>
    %45 = arith.addf %44, %43 : vector<8x64xf32>
    %46 = arith.divf %44, %45 : vector<8x64xf32>
    %47 = arith.mulf %38, %40 : vector<8x64xf32>
    %48 = math.tanh %47 : vector<8x64xf32>
    %49 = arith.mulf %46, %48 : vector<8x64xf32>
    %50 = vector.extract_strided_slice %49 {offsets = [0, 0], sizes = [8, 32], strides = [1, 1]} : vector<8x64xf32> to vector<8x32xf32>
    %c0_18 = arith.constant 0 : index
    %c0_19 = arith.constant 0 : index
    %51 = vector.load %arg13[%c0_18, %c0_19] : memref<64x64xf32, #tpu.memory_space<vmem>>, vector<8x32xf32>
    tpu.vector_store %arg13[%c0_18, %c0_19], %50 {strides = array<i32>} : memref<64x64xf32, #tpu.memory_space<vmem>>, vector<8x32xf32>,
    %52 = vector.extract_strided_slice %49 {offsets = [0, 32], sizes = [8, 32], strides = [1, 1]} : vector<8x64xf32> to vector<8x32xf32>
    %c56_20 = arith.constant 56 : index
    %c32 = arith.constant 32 : index
    %53 = vector.load %arg13[%c56_20, %c32] : memref<64x64xf32, #tpu.memory_space<vmem>>, vector<8x32xf32>
    tpu.vector_store %arg13[%c56_20, %c32], %52 {strides = array<i32>} : memref<64x64xf32, #tpu.memory_space<vmem>>, vector<8x32xf32>,
    %c1_i32_21 = arith.constant 1 : i32
    %c8_i32 = arith.constant 8 : i32
    %54 = arith.muli %c1_i32_21, %c8_i32 : i32
    %55 = tpu.assume_multiple %54, 8 : i32
    %c7_i32 = arith.constant 7 : i32
    %56 = arith.subi %c7_i32, %c1_i32_21 : i32
    %c8_i32_22 = arith.constant 8 : i32
    %57 = arith.muli %56, %c8_i32_22 : i32
    %58 = tpu.assume_multiple %57, 8 : i32
    %59 = arith.index_cast %55 : i32 to index
    %c0_23 = arith.constant 0 : index
    %60 = vector.load %arg12[%59, %c0_23] : memref<64x256xf32, #tpu.memory_space<vmem>>, vector<8x256xf32>
    %61 = arith.index_cast %58 : i32 to index
    %c0_24 = arith.constant 0 : index
    %62 = vector.load %arg12[%61, %c0_24] : memref<64x256xf32, #tpu.memory_space<vmem>>, vector<8x256xf32>
    %63 = arith.select %18, %60, %62 : vector<8x256xi1>, vector<8x256xf32>
    %64 = arith.truncf %49 : vector<8x64xf32> to vector<8x64xbf16>
    %cst_25 = arith.constant dense<0.000000e+00> : vector<8x256xf32>
    %65 = tpu.matmul %64, %29, %cst_25 {dimension_numbers = #tpu.dot_dimension_numbers<[1], [0], [0], [1], [0, 0, 1, 1], [], []>} : vector<8x64xbf16>, vector<64x256xbf16>, vector<8x256xf32> -> vector<8x256xf32>
    %66 = arith.addf %63, %65 : vector<8x256xf32>
    %67 = vector.extract_strided_slice %66 {offsets = [0, 0], sizes = [8, 64], strides = [1, 1]} : vector<8x256xf32> to vector<8x64xf32>
    %68 = arith.negf %67 : vector<8x64xf32>
    %69 = math.exp %68 : vector<8x64xf32>
    %cst_26 = arith.constant 1.000000e+00 : f32
    %70 = vector.broadcast %cst_26 : f32 to vector<8x64xf32>
    %71 = arith.addf %70, %69 : vector<8x64xf32>
    %72 = arith.divf %70, %71 : vector<8x64xf32>
    %73 = vector.extract_strided_slice %66 {offsets = [0, 64], sizes = [8, 64], strides = [1, 1]} : vector<8x256xf32> to vector<8x64xf32>
    %74 = arith.negf %73 : vector<8x64xf32>
    %75 = math.exp %74 : vector<8x64xf32>
    %cst_27 = arith.constant 1.000000e+00 : f32
    %76 = vector.broadcast %cst_27 : f32 to vector<8x64xf32>
    %77 = arith.addf %76, %75 : vector<8x64xf32>
    %78 = arith.divf %76, %77 : vector<8x64xf32>
    %79 = vector.extract_strided_slice %66 {offsets = [0, 128], sizes = [8, 64], strides = [1, 1]} : vector<8x256xf32> to vector<8x64xf32>
    %80 = math.tanh %79 : vector<8x64xf32>
    %81 = vector.extract_strided_slice %66 {offsets = [0, 192], sizes = [8, 64], strides = [1, 1]} : vector<8x256xf32> to vector<8x64xf32>
    %82 = arith.negf %81 : vector<8x64xf32>
    %83 = math.exp %82 : vector<8x64xf32>
    %cst_28 = arith.constant 1.000000e+00 : f32
    %84 = vector.broadcast %cst_28 : f32 to vector<8x64xf32>
    %85 = arith.addf %84, %83 : vector<8x64xf32>
    %86 = arith.divf %84, %85 : vector<8x64xf32>
    %87 = arith.mulf %78, %47 : vector<8x64xf32>
    %88 = arith.mulf %72, %80 : vector<8x64xf32>
    %89 = arith.addf %87, %88 : vector<8x64xf32>
    %90 = math.tanh %89 : vector<8x64xf32>
    %91 = arith.mulf %86, %90 : vector<8x64xf32>
    %92 = vector.extract_strided_slice %91 {offsets = [0, 0], sizes = [8, 32], strides = [1, 1]} : vector<8x64xf32> to vector<8x32xf32>
    %93 = arith.index_cast %55 : i32 to index
    %c0_29 = arith.constant 0 : index
    %94 = vector.load %arg13[%93, %c0_29] : memref<64x64xf32, #tpu.memory_space<vmem>>, vector<8x32xf32>
    tpu.vector_store %arg13[%93, %c0_29], %92 {strides = array<i32>} : memref<64x64xf32, #tpu.memory_space<vmem>>, vector<8x32xf32>,
    %95 = vector.extract_strided_slice %91 {offsets = [0, 32], sizes = [8, 32], strides = [1, 1]} : vector<8x64xf32> to vector<8x32xf32>
    %96 = arith.index_cast %58 : i32 to index
    %c32_30 = arith.constant 32 : index
    %97 = vector.load %arg13[%96, %c32_30] : memref<64x64xf32, #tpu.memory_space<vmem>>, vector<8x32xf32>
    tpu.vector_store %arg13[%96, %c32_30], %95 {strides = array<i32>} : memref<64x64xf32, #tpu.memory_space<vmem>>, vector<8x32xf32>,
    %c2_i32 = arith.constant 2 : i32
    %c8_i32_31 = arith.constant 8 : i32
    %98 = arith.muli %c2_i32, %c8_i32_31 : i32
    %99 = tpu.assume_multiple %98, 8 : i32
    %c7_i32_32 = arith.constant 7 : i32
    %100 = arith.subi %c7_i32_32, %c2_i32 : i32
    %c8_i32_33 = arith.constant 8 : i32
    %101 = arith.muli %100, %c8_i32_33 : i32
    %102 = tpu.assume_multiple %101, 8 : i32
    %103 = arith.index_cast %99 : i32 to index
    %c0_34 = arith.constant 0 : index
    %104 = vector.load %arg12[%103, %c0_34] : memref<64x256xf32, #tpu.memory_space<vmem>>, vector<8x256xf32>
    %105 = arith.index_cast %102 : i32 to index
    %c0_35 = arith.constant 0 : index
    %106 = vector.load %arg12[%105, %c0_35] : memref<64x256xf32, #tpu.memory_space<vmem>>, vector<8x256xf32>
    %107 = arith.select %18, %104, %106 : vector<8x256xi1>, vector<8x256xf32>
    %108 = arith.truncf %91 : vector<8x64xf32> to vector<8x64xbf16>
    %cst_36 = arith.constant dense<0.000000e+00> : vector<8x256xf32>
    %109 = tpu.matmul %108, %29, %cst_36 {dimension_numbers = #tpu.dot_dimension_numbers<[1], [0], [0], [1], [0, 0, 1, 1], [], []>} : vector<8x64xbf16>, vector<64x256xbf16>, vector<8x256xf32> -> vector<8x256xf32>
    %110 = arith.addf %107, %109 : vector<8x256xf32>
    %111 = vector.extract_strided_slice %110 {offsets = [0, 0], sizes = [8, 64], strides = [1, 1]} : vector<8x256xf32> to vector<8x64xf32>
    %112 = arith.negf %111 : vector<8x64xf32>
    %113 = math.exp %112 : vector<8x64xf32>
    %cst_37 = arith.constant 1.000000e+00 : f32
    %114 = vector.broadcast %cst_37 : f32 to vector<8x64xf32>
    %115 = arith.addf %114, %113 : vector<8x64xf32>
    %116 = arith.divf %114, %115 : vector<8x64xf32>
    %117 = vector.extract_strided_slice %110 {offsets = [0, 64], sizes = [8, 64], strides = [1, 1]} : vector<8x256xf32> to vector<8x64xf32>
    %118 = arith.negf %117 : vector<8x64xf32>
    %119 = math.exp %118 : vector<8x64xf32>
    %cst_38 = arith.constant 1.000000e+00 : f32
    %120 = vector.broadcast %cst_38 : f32 to vector<8x64xf32>
    %121 = arith.addf %120, %119 : vector<8x64xf32>
    %122 = arith.divf %120, %121 : vector<8x64xf32>
    %123 = vector.extract_strided_slice %110 {offsets = [0, 128], sizes = [8, 64], strides = [1, 1]} : vector<8x256xf32> to vector<8x64xf32>
    %124 = math.tanh %123 : vector<8x64xf32>
    %125 = vector.extract_strided_slice %110 {offsets = [0, 192], sizes = [8, 64], strides = [1, 1]} : vector<8x256xf32> to vector<8x64xf32>
    %126 = arith.negf %125 : vector<8x64xf32>
    %127 = math.exp %126 : vector<8x64xf32>
    %cst_39 = arith.constant 1.000000e+00 : f32
    %128 = vector.broadcast %cst_39 : f32 to vector<8x64xf32>
    %129 = arith.addf %128, %127 : vector<8x64xf32>
    %130 = arith.divf %128, %129 : vector<8x64xf32>
    %131 = arith.mulf %122, %89 : vector<8x64xf32>
    %132 = arith.mulf %116, %124 : vector<8x64xf32>
    %133 = arith.addf %131, %132 : vector<8x64xf32>
    %134 = math.tanh %133 : vector<8x64xf32>
    %135 = arith.mulf %130, %134 : vector<8x64xf32>
    %136 = vector.extract_strided_slice %135 {offsets = [0, 0], sizes = [8, 32], strides = [1, 1]} : vector<8x64xf32> to vector<8x32xf32>
    %137 = arith.index_cast %99 : i32 to index
    %c0_40 = arith.constant 0 : index
    %138 = vector.load %arg13[%137, %c0_40] : memref<64x64xf32, #tpu.memory_space<vmem>>, vector<8x32xf32>
    tpu.vector_store %arg13[%137, %c0_40], %136 {strides = array<i32>} : memref<64x64xf32, #tpu.memory_space<vmem>>, vector<8x32xf32>,
    %139 = vector.extract_strided_slice %135 {offsets = [0, 32], sizes = [8, 32], strides = [1, 1]} : vector<8x64xf32> to vector<8x32xf32>
    %140 = arith.index_cast %102 : i32 to index
    %c32_41 = arith.constant 32 : index
    %141 = vector.load %arg13[%140, %c32_41] : memref<64x64xf32, #tpu.memory_space<vmem>>, vector<8x32xf32>
    tpu.vector_store %arg13[%140, %c32_41], %139 {strides = array<i32>} : memref<64x64xf32, #tpu.memory_space<vmem>>, vector<8x32xf32>,
    %c3_i32 = arith.constant 3 : i32
    %c8_i32_42 = arith.constant 8 : i32
    %142 = arith.muli %c3_i32, %c8_i32_42 : i32
    %143 = tpu.assume_multiple %142, 8 : i32
    %c7_i32_43 = arith.constant 7 : i32
    %144 = arith.subi %c7_i32_43, %c3_i32 : i32
    %c8_i32_44 = arith.constant 8 : i32
    %145 = arith.muli %144, %c8_i32_44 : i32
    %146 = tpu.assume_multiple %145, 8 : i32
    %147 = arith.index_cast %143 : i32 to index
    %c0_45 = arith.constant 0 : index
    %148 = vector.load %arg12[%147, %c0_45] : memref<64x256xf32, #tpu.memory_space<vmem>>, vector<8x256xf32>
    %149 = arith.index_cast %146 : i32 to index
    %c0_46 = arith.constant 0 : index
    %150 = vector.load %arg12[%149, %c0_46] : memref<64x256xf32, #tpu.memory_space<vmem>>, vector<8x256xf32>
    %151 = arith.select %18, %148, %150 : vector<8x256xi1>, vector<8x256xf32>
    %152 = arith.truncf %135 : vector<8x64xf32> to vector<8x64xbf16>
    %cst_47 = arith.constant dense<0.000000e+00> : vector<8x256xf32>
    %153 = tpu.matmul %152, %29, %cst_47 {dimension_numbers = #tpu.dot_dimension_numbers<[1], [0], [0], [1], [0, 0, 1, 1], [], []>} : vector<8x64xbf16>, vector<64x256xbf16>, vector<8x256xf32> -> vector<8x256xf32>
    %154 = arith.addf %151, %153 : vector<8x256xf32>
    %155 = vector.extract_strided_slice %154 {offsets = [0, 0], sizes = [8, 64], strides = [1, 1]} : vector<8x256xf32> to vector<8x64xf32>
    %156 = arith.negf %155 : vector<8x64xf32>
    %157 = math.exp %156 : vector<8x64xf32>
    %cst_48 = arith.constant 1.000000e+00 : f32
    %158 = vector.broadcast %cst_48 : f32 to vector<8x64xf32>
    %159 = arith.addf %158, %157 : vector<8x64xf32>
    %160 = arith.divf %158, %159 : vector<8x64xf32>
    %161 = vector.extract_strided_slice %154 {offsets = [0, 64], sizes = [8, 64], strides = [1, 1]} : vector<8x256xf32> to vector<8x64xf32>
    %162 = arith.negf %161 : vector<8x64xf32>
    %163 = math.exp %162 : vector<8x64xf32>
    %cst_49 = arith.constant 1.000000e+00 : f32
    %164 = vector.broadcast %cst_49 : f32 to vector<8x64xf32>
    %165 = arith.addf %164, %163 : vector<8x64xf32>
    %166 = arith.divf %164, %165 : vector<8x64xf32>
    %167 = vector.extract_strided_slice %154 {offsets = [0, 128], sizes = [8, 64], strides = [1, 1]} : vector<8x256xf32> to vector<8x64xf32>
    %168 = math.tanh %167 : vector<8x64xf32>
    %169 = vector.extract_strided_slice %154 {offsets = [0, 192], sizes = [8, 64], strides = [1, 1]} : vector<8x256xf32> to vector<8x64xf32>
    %170 = arith.negf %169 : vector<8x64xf32>
    %171 = math.exp %170 : vector<8x64xf32>
    %cst_50 = arith.constant 1.000000e+00 : f32
    %172 = vector.broadcast %cst_50 : f32 to vector<8x64xf32>
    %173 = arith.addf %172, %171 : vector<8x64xf32>
    %174 = arith.divf %172, %173 : vector<8x64xf32>
    %175 = arith.mulf %166, %133 : vector<8x64xf32>
    %176 = arith.mulf %160, %168 : vector<8x64xf32>
    %177 = arith.addf %175, %176 : vector<8x64xf32>
    %178 = math.tanh %177 : vector<8x64xf32>
    %179 = arith.mulf %174, %178 : vector<8x64xf32>
    %180 = vector.extract_strided_slice %179 {offsets = [0, 0], sizes = [8, 32], strides = [1, 1]} : vector<8x64xf32> to vector<8x32xf32>
    %181 = arith.index_cast %143 : i32 to index
    %c0_51 = arith.constant 0 : index
    %182 = vector.load %arg13[%181, %c0_51] : memref<64x64xf32, #tpu.memory_space<vmem>>, vector<8x32xf32>
    tpu.vector_store %arg13[%181, %c0_51], %180 {strides = array<i32>} : memref<64x64xf32, #tpu.memory_space<vmem>>, vector<8x32xf32>,
    %183 = vector.extract_strided_slice %179 {offsets = [0, 32], sizes = [8, 32], strides = [1, 1]} : vector<8x64xf32> to vector<8x32xf32>
    %184 = arith.index_cast %146 : i32 to index
    %c32_52 = arith.constant 32 : index
    %185 = vector.load %arg13[%184, %c32_52] : memref<64x64xf32, #tpu.memory_space<vmem>>, vector<8x32xf32>
    tpu.vector_store %arg13[%184, %c32_52], %183 {strides = array<i32>} : memref<64x64xf32, #tpu.memory_space<vmem>>, vector<8x32xf32>,
    %c4_i32 = arith.constant 4 : i32
    %c8_i32_53 = arith.constant 8 : i32
    %186 = arith.muli %c4_i32, %c8_i32_53 : i32
    %187 = tpu.assume_multiple %186, 8 : i32
    %c7_i32_54 = arith.constant 7 : i32
    %188 = arith.subi %c7_i32_54, %c4_i32 : i32
    %c8_i32_55 = arith.constant 8 : i32
    %189 = arith.muli %188, %c8_i32_55 : i32
    %190 = tpu.assume_multiple %189, 8 : i32
    %191 = arith.index_cast %187 : i32 to index
    %c0_56 = arith.constant 0 : index
    %192 = vector.load %arg12[%191, %c0_56] : memref<64x256xf32, #tpu.memory_space<vmem>>, vector<8x256xf32>
    %193 = arith.index_cast %190 : i32 to index
    %c0_57 = arith.constant 0 : index
    %194 = vector.load %arg12[%193, %c0_57] : memref<64x256xf32, #tpu.memory_space<vmem>>, vector<8x256xf32>
    %195 = arith.select %18, %192, %194 : vector<8x256xi1>, vector<8x256xf32>
    %196 = arith.truncf %179 : vector<8x64xf32> to vector<8x64xbf16>
    %cst_58 = arith.constant dense<0.000000e+00> : vector<8x256xf32>
    %197 = tpu.matmul %196, %29, %cst_58 {dimension_numbers = #tpu.dot_dimension_numbers<[1], [0], [0], [1], [0, 0, 1, 1], [], []>} : vector<8x64xbf16>, vector<64x256xbf16>, vector<8x256xf32> -> vector<8x256xf32>
    %198 = arith.addf %195, %197 : vector<8x256xf32>
    %199 = vector.extract_strided_slice %198 {offsets = [0, 0], sizes = [8, 64], strides = [1, 1]} : vector<8x256xf32> to vector<8x64xf32>
    %200 = arith.negf %199 : vector<8x64xf32>
    %201 = math.exp %200 : vector<8x64xf32>
    %cst_59 = arith.constant 1.000000e+00 : f32
    %202 = vector.broadcast %cst_59 : f32 to vector<8x64xf32>
    %203 = arith.addf %202, %201 : vector<8x64xf32>
    %204 = arith.divf %202, %203 : vector<8x64xf32>
    %205 = vector.extract_strided_slice %198 {offsets = [0, 64], sizes = [8, 64], strides = [1, 1]} : vector<8x256xf32> to vector<8x64xf32>
    %206 = arith.negf %205 : vector<8x64xf32>
    %207 = math.exp %206 : vector<8x64xf32>
    %cst_60 = arith.constant 1.000000e+00 : f32
    %208 = vector.broadcast %cst_60 : f32 to vector<8x64xf32>
    %209 = arith.addf %208, %207 : vector<8x64xf32>
    %210 = arith.divf %208, %209 : vector<8x64xf32>
    %211 = vector.extract_strided_slice %198 {offsets = [0, 128], sizes = [8, 64], strides = [1, 1]} : vector<8x256xf32> to vector<8x64xf32>
    %212 = math.tanh %211 : vector<8x64xf32>
    %213 = vector.extract_strided_slice %198 {offsets = [0, 192], sizes = [8, 64], strides = [1, 1]} : vector<8x256xf32> to vector<8x64xf32>
    %214 = arith.negf %213 : vector<8x64xf32>
    %215 = math.exp %214 : vector<8x64xf32>
    %cst_61 = arith.constant 1.000000e+00 : f32
    %216 = vector.broadcast %cst_61 : f32 to vector<8x64xf32>
    %217 = arith.addf %216, %215 : vector<8x64xf32>
    %218 = arith.divf %216, %217 : vector<8x64xf32>
    %219 = arith.mulf %210, %177 : vector<8x64xf32>
    %220 = arith.mulf %204, %212 : vector<8x64xf32>
    %221 = arith.addf %219, %220 : vector<8x64xf32>
    %222 = math.tanh %221 : vector<8x64xf32>
    %223 = arith.mulf %218, %222 : vector<8x64xf32>
    %224 = vector.extract_strided_slice %223 {offsets = [0, 0], sizes = [8, 32], strides = [1, 1]} : vector<8x64xf32> to vector<8x32xf32>
    %225 = arith.index_cast %187 : i32 to index
    %c0_62 = arith.constant 0 : index
    %226 = vector.load %arg13[%225, %c0_62] : memref<64x64xf32, #tpu.memory_space<vmem>>, vector<8x32xf32>
    tpu.vector_store %arg13[%225, %c0_62], %224 {strides = array<i32>} : memref<64x64xf32, #tpu.memory_space<vmem>>, vector<8x32xf32>,
    %227 = vector.extract_strided_slice %223 {offsets = [0, 32], sizes = [8, 32], strides = [1, 1]} : vector<8x64xf32> to vector<8x32xf32>
    %228 = arith.index_cast %190 : i32 to index
    %c32_63 = arith.constant 32 : index
    %229 = vector.load %arg13[%228, %c32_63] : memref<64x64xf32, #tpu.memory_space<vmem>>, vector<8x32xf32>
    tpu.vector_store %arg13[%228, %c32_63], %227 {strides = array<i32>} : memref<64x64xf32, #tpu.memory_space<vmem>>, vector<8x32xf32>,
    %c5_i32 = arith.constant 5 : i32
    %c8_i32_64 = arith.constant 8 : i32
    %230 = arith.muli %c5_i32, %c8_i32_64 : i32
    %231 = tpu.assume_multiple %230, 8 : i32
    %c7_i32_65 = arith.constant 7 : i32
    %232 = arith.subi %c7_i32_65, %c5_i32 : i32
    %c8_i32_66 = arith.constant 8 : i32
    %233 = arith.muli %232, %c8_i32_66 : i32
    %234 = tpu.assume_multiple %233, 8 : i32
    %235 = arith.index_cast %231 : i32 to index
    %c0_67 = arith.constant 0 : index
    %236 = vector.load %arg12[%235, %c0_67] : memref<64x256xf32, #tpu.memory_space<vmem>>, vector<8x256xf32>
    %237 = arith.index_cast %234 : i32 to index
    %c0_68 = arith.constant 0 : index
    %238 = vector.load %arg12[%237, %c0_68] : memref<64x256xf32, #tpu.memory_space<vmem>>, vector<8x256xf32>
    %239 = arith.select %18, %236, %238 : vector<8x256xi1>, vector<8x256xf32>
    %240 = arith.truncf %223 : vector<8x64xf32> to vector<8x64xbf16>
    %cst_69 = arith.constant dense<0.000000e+00> : vector<8x256xf32>
    %241 = tpu.matmul %240, %29, %cst_69 {dimension_numbers = #tpu.dot_dimension_numbers<[1], [0], [0], [1], [0, 0, 1, 1], [], []>} : vector<8x64xbf16>, vector<64x256xbf16>, vector<8x256xf32> -> vector<8x256xf32>
    %242 = arith.addf %239, %241 : vector<8x256xf32>
    %243 = vector.extract_strided_slice %242 {offsets = [0, 0], sizes = [8, 64], strides = [1, 1]} : vector<8x256xf32> to vector<8x64xf32>
    %244 = arith.negf %243 : vector<8x64xf32>
    %245 = math.exp %244 : vector<8x64xf32>
    %cst_70 = arith.constant 1.000000e+00 : f32
    %246 = vector.broadcast %cst_70 : f32 to vector<8x64xf32>
    %247 = arith.addf %246, %245 : vector<8x64xf32>
    %248 = arith.divf %246, %247 : vector<8x64xf32>
    %249 = vector.extract_strided_slice %242 {offsets = [0, 64], sizes = [8, 64], strides = [1, 1]} : vector<8x256xf32> to vector<8x64xf32>
    %250 = arith.negf %249 : vector<8x64xf32>
    %251 = math.exp %250 : vector<8x64xf32>
    %cst_71 = arith.constant 1.000000e+00 : f32
    %252 = vector.broadcast %cst_71 : f32 to vector<8x64xf32>
    %253 = arith.addf %252, %251 : vector<8x64xf32>
    %254 = arith.divf %252, %253 : vector<8x64xf32>
    %255 = vector.extract_strided_slice %242 {offsets = [0, 128], sizes = [8, 64], strides = [1, 1]} : vector<8x256xf32> to vector<8x64xf32>
    %256 = math.tanh %255 : vector<8x64xf32>
    %257 = vector.extract_strided_slice %242 {offsets = [0, 192], sizes = [8, 64], strides = [1, 1]} : vector<8x256xf32> to vector<8x64xf32>
    %258 = arith.negf %257 : vector<8x64xf32>
    %259 = math.exp %258 : vector<8x64xf32>
    %cst_72 = arith.constant 1.000000e+00 : f32
    %260 = vector.broadcast %cst_72 : f32 to vector<8x64xf32>
    %261 = arith.addf %260, %259 : vector<8x64xf32>
    %262 = arith.divf %260, %261 : vector<8x64xf32>
    %263 = arith.mulf %254, %221 : vector<8x64xf32>
    %264 = arith.mulf %248, %256 : vector<8x64xf32>
    %265 = arith.addf %263, %264 : vector<8x64xf32>
    %266 = math.tanh %265 : vector<8x64xf32>
    %267 = arith.mulf %262, %266 : vector<8x64xf32>
    %268 = vector.extract_strided_slice %267 {offsets = [0, 0], sizes = [8, 32], strides = [1, 1]} : vector<8x64xf32> to vector<8x32xf32>
    %269 = arith.index_cast %231 : i32 to index
    %c0_73 = arith.constant 0 : index
    %270 = vector.load %arg13[%269, %c0_73] : memref<64x64xf32, #tpu.memory_space<vmem>>, vector<8x32xf32>
    tpu.vector_store %arg13[%269, %c0_73], %268 {strides = array<i32>} : memref<64x64xf32, #tpu.memory_space<vmem>>, vector<8x32xf32>,
    %271 = vector.extract_strided_slice %267 {offsets = [0, 32], sizes = [8, 32], strides = [1, 1]} : vector<8x64xf32> to vector<8x32xf32>
    %272 = arith.index_cast %234 : i32 to index
    %c32_74 = arith.constant 32 : index
    %273 = vector.load %arg13[%272, %c32_74] : memref<64x64xf32, #tpu.memory_space<vmem>>, vector<8x32xf32>
    tpu.vector_store %arg13[%272, %c32_74], %271 {strides = array<i32>} : memref<64x64xf32, #tpu.memory_space<vmem>>, vector<8x32xf32>,
    %c6_i32 = arith.constant 6 : i32
    %c8_i32_75 = arith.constant 8 : i32
    %274 = arith.muli %c6_i32, %c8_i32_75 : i32
    %275 = tpu.assume_multiple %274, 8 : i32
    %c7_i32_76 = arith.constant 7 : i32
    %276 = arith.subi %c7_i32_76, %c6_i32 : i32
    %c8_i32_77 = arith.constant 8 : i32
    %277 = arith.muli %276, %c8_i32_77 : i32
    %278 = tpu.assume_multiple %277, 8 : i32
    %279 = arith.index_cast %275 : i32 to index
    %c0_78 = arith.constant 0 : index
    %280 = vector.load %arg12[%279, %c0_78] : memref<64x256xf32, #tpu.memory_space<vmem>>, vector<8x256xf32>
    %281 = arith.index_cast %278 : i32 to index
    %c0_79 = arith.constant 0 : index
    %282 = vector.load %arg12[%281, %c0_79] : memref<64x256xf32, #tpu.memory_space<vmem>>, vector<8x256xf32>
    %283 = arith.select %18, %280, %282 : vector<8x256xi1>, vector<8x256xf32>
    %284 = arith.truncf %267 : vector<8x64xf32> to vector<8x64xbf16>
    %cst_80 = arith.constant dense<0.000000e+00> : vector<8x256xf32>
    %285 = tpu.matmul %284, %29, %cst_80 {dimension_numbers = #tpu.dot_dimension_numbers<[1], [0], [0], [1], [0, 0, 1, 1], [], []>} : vector<8x64xbf16>, vector<64x256xbf16>, vector<8x256xf32> -> vector<8x256xf32>
    %286 = arith.addf %283, %285 : vector<8x256xf32>
    %287 = vector.extract_strided_slice %286 {offsets = [0, 0], sizes = [8, 64], strides = [1, 1]} : vector<8x256xf32> to vector<8x64xf32>
    %288 = arith.negf %287 : vector<8x64xf32>
    %289 = math.exp %288 : vector<8x64xf32>
    %cst_81 = arith.constant 1.000000e+00 : f32
    %290 = vector.broadcast %cst_81 : f32 to vector<8x64xf32>
    %291 = arith.addf %290, %289 : vector<8x64xf32>
    %292 = arith.divf %290, %291 : vector<8x64xf32>
    %293 = vector.extract_strided_slice %286 {offsets = [0, 64], sizes = [8, 64], strides = [1, 1]} : vector<8x256xf32> to vector<8x64xf32>
    %294 = arith.negf %293 : vector<8x64xf32>
    %295 = math.exp %294 : vector<8x64xf32>
    %cst_82 = arith.constant 1.000000e+00 : f32
    %296 = vector.broadcast %cst_82 : f32 to vector<8x64xf32>
    %297 = arith.addf %296, %295 : vector<8x64xf32>
    %298 = arith.divf %296, %297 : vector<8x64xf32>
    %299 = vector.extract_strided_slice %286 {offsets = [0, 128], sizes = [8, 64], strides = [1, 1]} : vector<8x256xf32> to vector<8x64xf32>
    %300 = math.tanh %299 : vector<8x64xf32>
    %301 = vector.extract_strided_slice %286 {offsets = [0, 192], sizes = [8, 64], strides = [1, 1]} : vector<8x256xf32> to vector<8x64xf32>
    %302 = arith.negf %301 : vector<8x64xf32>
    %303 = math.exp %302 : vector<8x64xf32>
    %cst_83 = arith.constant 1.000000e+00 : f32
    %304 = vector.broadcast %cst_83 : f32 to vector<8x64xf32>
    %305 = arith.addf %304, %303 : vector<8x64xf32>
    %306 = arith.divf %304, %305 : vector<8x64xf32>
    %307 = arith.mulf %298, %265 : vector<8x64xf32>
    %308 = arith.mulf %292, %300 : vector<8x64xf32>
    %309 = arith.addf %307, %308 : vector<8x64xf32>
    %310 = math.tanh %309 : vector<8x64xf32>
    %311 = arith.mulf %306, %310 : vector<8x64xf32>
    %312 = vector.extract_strided_slice %311 {offsets = [0, 0], sizes = [8, 32], strides = [1, 1]} : vector<8x64xf32> to vector<8x32xf32>
    %313 = arith.index_cast %275 : i32 to index
    %c0_84 = arith.constant 0 : index
    %314 = vector.load %arg13[%313, %c0_84] : memref<64x64xf32, #tpu.memory_space<vmem>>, vector<8x32xf32>
    tpu.vector_store %arg13[%313, %c0_84], %312 {strides = array<i32>} : memref<64x64xf32, #tpu.memory_space<vmem>>, vector<8x32xf32>,
    %315 = vector.extract_strided_slice %311 {offsets = [0, 32], sizes = [8, 32], strides = [1, 1]} : vector<8x64xf32> to vector<8x32xf32>
    %316 = arith.index_cast %278 : i32 to index
    %c32_85 = arith.constant 32 : index
    %317 = vector.load %arg13[%316, %c32_85] : memref<64x64xf32, #tpu.memory_space<vmem>>, vector<8x32xf32>
    tpu.vector_store %arg13[%316, %c32_85], %315 {strides = array<i32>} : memref<64x64xf32, #tpu.memory_space<vmem>>, vector<8x32xf32>,
    %c7_i32_86 = arith.constant 7 : i32
    %c8_i32_87 = arith.constant 8 : i32
    %318 = arith.muli %c7_i32_86, %c8_i32_87 : i32
    %319 = tpu.assume_multiple %318, 8 : i32
    %c7_i32_88 = arith.constant 7 : i32
    %320 = arith.subi %c7_i32_88, %c7_i32_86 : i32
    %c8_i32_89 = arith.constant 8 : i32
    %321 = arith.muli %320, %c8_i32_89 : i32
    %322 = tpu.assume_multiple %321, 8 : i32
    %323 = arith.index_cast %319 : i32 to index
    %c0_90 = arith.constant 0 : index
    %324 = vector.load %arg12[%323, %c0_90] : memref<64x256xf32, #tpu.memory_space<vmem>>, vector<8x256xf32>
    %325 = arith.index_cast %322 : i32 to index
    %c0_91 = arith.constant 0 : index
    %326 = vector.load %arg12[%325, %c0_91] : memref<64x256xf32, #tpu.memory_space<vmem>>, vector<8x256xf32>
    %327 = arith.select %18, %324, %326 : vector<8x256xi1>, vector<8x256xf32>
    %328 = arith.truncf %311 : vector<8x64xf32> to vector<8x64xbf16>
    %cst_92 = arith.constant dense<0.000000e+00> : vector<8x256xf32>
    %329 = tpu.matmul %328, %29, %cst_92 {dimension_numbers = #tpu.dot_dimension_numbers<[1], [0], [0], [1], [0, 0, 1, 1], [], []>} : vector<8x64xbf16>, vector<64x256xbf16>, vector<8x256xf32> -> vector<8x256xf32>
    %330 = arith.addf %327, %329 : vector<8x256xf32>
    %331 = vector.extract_strided_slice %330 {offsets = [0, 0], sizes = [8, 64], strides = [1, 1]} : vector<8x256xf32> to vector<8x64xf32>
    %332 = arith.negf %331 : vector<8x64xf32>
    %333 = math.exp %332 : vector<8x64xf32>
    %cst_93 = arith.constant 1.000000e+00 : f32
    %334 = vector.broadcast %cst_93 : f32 to vector<8x64xf32>
    %335 = arith.addf %334, %333 : vector<8x64xf32>
    %336 = arith.divf %334, %335 : vector<8x64xf32>
    %337 = vector.extract_strided_slice %330 {offsets = [0, 64], sizes = [8, 64], strides = [1, 1]} : vector<8x256xf32> to vector<8x64xf32>
    %338 = arith.negf %337 : vector<8x64xf32>
    %339 = math.exp %338 : vector<8x64xf32>
    %cst_94 = arith.constant 1.000000e+00 : f32
    %340 = vector.broadcast %cst_94 : f32 to vector<8x64xf32>
    %341 = arith.addf %340, %339 : vector<8x64xf32>
    %342 = arith.divf %340, %341 : vector<8x64xf32>
    %343 = vector.extract_strided_slice %330 {offsets = [0, 128], sizes = [8, 64], strides = [1, 1]} : vector<8x256xf32> to vector<8x64xf32>
    %344 = math.tanh %343 : vector<8x64xf32>
    %345 = vector.extract_strided_slice %330 {offsets = [0, 192], sizes = [8, 64], strides = [1, 1]} : vector<8x256xf32> to vector<8x64xf32>
    %346 = arith.negf %345 : vector<8x64xf32>
    %347 = math.exp %346 : vector<8x64xf32>
    %cst_95 = arith.constant 1.000000e+00 : f32
    %348 = vector.broadcast %cst_95 : f32 to vector<8x64xf32>
    %349 = arith.addf %348, %347 : vector<8x64xf32>
    %350 = arith.divf %348, %349 : vector<8x64xf32>
    %351 = arith.mulf %342, %309 : vector<8x64xf32>
    %352 = arith.mulf %336, %344 : vector<8x64xf32>
    %353 = arith.addf %351, %352 : vector<8x64xf32>
    %354 = math.tanh %353 : vector<8x64xf32>
    %355 = arith.mulf %350, %354 : vector<8x64xf32>
    %356 = vector.extract_strided_slice %355 {offsets = [0, 0], sizes = [8, 32], strides = [1, 1]} : vector<8x64xf32> to vector<8x32xf32>
    %357 = arith.index_cast %319 : i32 to index
    %c0_96 = arith.constant 0 : index
    %358 = vector.load %arg13[%357, %c0_96] : memref<64x64xf32, #tpu.memory_space<vmem>>, vector<8x32xf32>
    tpu.vector_store %arg13[%357, %c0_96], %356 {strides = array<i32>} : memref<64x64xf32, #tpu.memory_space<vmem>>, vector<8x32xf32>,
    %359 = vector.extract_strided_slice %355 {offsets = [0, 32], sizes = [8, 32], strides = [1, 1]} : vector<8x64xf32> to vector<8x32xf32>
    %360 = arith.index_cast %322 : i32 to index
    %c32_97 = arith.constant 32 : index
    %361 = vector.load %arg13[%360, %c32_97] : memref<64x64xf32, #tpu.memory_space<vmem>>, vector<8x32xf32>
    tpu.vector_store %arg13[%360, %c32_97], %359 {strides = array<i32>} : memref<64x64xf32, #tpu.memory_space<vmem>>, vector<8x32xf32>,
    %c7_i32_98 = arith.constant 7 : i32
    %c0_99 = arith.constant 0 : index
    %c0_100 = arith.constant 0 : index
    %362 = vector.load %arg13[%c0_99, %c0_100] : memref<64x64xf32, #tpu.memory_space<vmem>>, vector<64x64xf32>
    %363 = arith.truncf %362 : vector<64x64xf32> to vector<64x64xbf16>
    %c0_101 = arith.constant 0 : index
    %c0_102 = arith.constant 0 : index
    %364 = vector.load %arg4[%c0_101, %c0_102] : memref<64x256xbf16, #tpu.memory_space<vmem>>, vector<64x256xbf16>
    %cst_103 = arith.constant dense<0.000000e+00> : vector<64x256xf32>
    %365 = tpu.matmul %363, %364, %cst_103 {dimension_numbers = #tpu.dot_dimension_numbers<[1], [0], [0], [1], [0, 0, 1, 1], [], []>} : vector<64x64xbf16>, vector<64x256xbf16>, vector<64x256xf32> -> vector<64x256xf32>
    %c0_104 = arith.constant 0 : index
    %c0_105 = arith.constant 0 : index
    %366 = vector.load %arg5[%c0_104, %c0_105] : memref<1x256xf32, #tpu.memory_space<vmem>>, vector<1x256xf32>
    %367 = vector.broadcast %366 : vector<1x256xf32> to vector<64x256xf32>
    %368 = arith.addf %365, %367 : vector<64x256xf32>
    %c0_106 = arith.constant 0 : index
    %c0_107 = arith.constant 0 : index
    %369 = vector.load %arg12[%c0_106, %c0_107] : memref<64x256xf32, #tpu.memory_space<vmem>>, vector<64x256xf32>
    tpu.vector_store %arg12[%c0_106, %c0_107], %368 {strides = array<i32>} : memref<64x256xf32, #tpu.memory_space<vmem>>, vector<64x256xf32>,
    %c0_108 = arith.constant 0 : index
    %c0_109 = arith.constant 0 : index
    %370 = vector.load %arg6[%c0_108, %c0_109] : memref<64x256xbf16, #tpu.memory_space<vmem>>, vector<64x256xbf16>
    %c0_110 = arith.constant 0 : index
    %c0_111 = arith.constant 0 : index
    %371 = vector.load %arg12[%c0_110, %c0_111] : memref<64x256xf32, #tpu.memory_space<vmem>>, vector<8x256xf32>
    %c56_112 = arith.constant 56 : index
    %c0_113 = arith.constant 0 : index
    %372 = vector.load %arg12[%c56_112, %c0_113] : memref<64x256xf32, #tpu.memory_space<vmem>>, vector<8x256xf32>
    %373 = arith.select %18, %371, %372 : vector<8x256xi1>, vector<8x256xf32>
    %374 = vector.extract_strided_slice %373 {offsets = [0, 0], sizes = [8, 64], strides = [1, 1]} : vector<8x256xf32> to vector<8x64xf32>
    %375 = arith.negf %374 : vector<8x64xf32>
    %376 = math.exp %375 : vector<8x64xf32>
    %cst_114 = arith.constant 1.000000e+00 : f32
    %377 = vector.broadcast %cst_114 : f32 to vector<8x64xf32>
    %378 = arith.addf %377, %376 : vector<8x64xf32>
    %379 = arith.divf %377, %378 : vector<8x64xf32>
    %380 = vector.extract_strided_slice %373 {offsets = [0, 128], sizes = [8, 64], strides = [1, 1]} : vector<8x256xf32> to vector<8x64xf32>
    %381 = math.tanh %380 : vector<8x64xf32>
    %382 = vector.extract_strided_slice %373 {offsets = [0, 192], sizes = [8, 64], strides = [1, 1]} : vector<8x256xf32> to vector<8x64xf32>
    %383 = arith.negf %382 : vector<8x64xf32>
    %384 = math.exp %383 : vector<8x64xf32>
    %cst_115 = arith.constant 1.000000e+00 : f32
    %385 = vector.broadcast %cst_115 : f32 to vector<8x64xf32>
    %386 = arith.addf %385, %384 : vector<8x64xf32>
    %387 = arith.divf %385, %386 : vector<8x64xf32>
    %388 = arith.mulf %379, %381 : vector<8x64xf32>
    %389 = math.tanh %388 : vector<8x64xf32>
    %390 = arith.mulf %387, %389 : vector<8x64xf32>
    %c1_i32_116 = arith.constant 1 : i32
    %c8_i32_117 = arith.constant 8 : i32
    %391 = arith.muli %c1_i32_116, %c8_i32_117 : i32
    %392 = tpu.assume_multiple %391, 8 : i32
    %c7_i32_118 = arith.constant 7 : i32
    %393 = arith.subi %c7_i32_118, %c1_i32_116 : i32
    %c8_i32_119 = arith.constant 8 : i32
    %394 = arith.muli %393, %c8_i32_119 : i32
    %395 = tpu.assume_multiple %394, 8 : i32
    %396 = arith.index_cast %392 : i32 to index
    %c0_120 = arith.constant 0 : index
    %397 = vector.load %arg12[%396, %c0_120] : memref<64x256xf32, #tpu.memory_space<vmem>>, vector<8x256xf32>
    %398 = arith.index_cast %395 : i32 to index
    %c0_121 = arith.constant 0 : index
    %399 = vector.load %arg12[%398, %c0_121] : memref<64x256xf32, #tpu.memory_space<vmem>>, vector<8x256xf32>
    %400 = arith.select %18, %397, %399 : vector<8x256xi1>, vector<8x256xf32>
    %401 = arith.truncf %390 : vector<8x64xf32> to vector<8x64xbf16>
    %cst_122 = arith.constant dense<0.000000e+00> : vector<8x256xf32>
    %402 = tpu.matmul %401, %370, %cst_122 {dimension_numbers = #tpu.dot_dimension_numbers<[1], [0], [0], [1], [0, 0, 1, 1], [], []>} : vector<8x64xbf16>, vector<64x256xbf16>, vector<8x256xf32> -> vector<8x256xf32>
    %403 = arith.addf %400, %402 : vector<8x256xf32>
    %404 = vector.extract_strided_slice %403 {offsets = [0, 0], sizes = [8, 64], strides = [1, 1]} : vector<8x256xf32> to vector<8x64xf32>
    %405 = arith.negf %404 : vector<8x64xf32>
    %406 = math.exp %405 : vector<8x64xf32>
    %cst_123 = arith.constant 1.000000e+00 : f32
    %407 = vector.broadcast %cst_123 : f32 to vector<8x64xf32>
    %408 = arith.addf %407, %406 : vector<8x64xf32>
    %409 = arith.divf %407, %408 : vector<8x64xf32>
    %410 = vector.extract_strided_slice %403 {offsets = [0, 64], sizes = [8, 64], strides = [1, 1]} : vector<8x256xf32> to vector<8x64xf32>
    %411 = arith.negf %410 : vector<8x64xf32>
    %412 = math.exp %411 : vector<8x64xf32>
    %cst_124 = arith.constant 1.000000e+00 : f32
    %413 = vector.broadcast %cst_124 : f32 to vector<8x64xf32>
    %414 = arith.addf %413, %412 : vector<8x64xf32>
    %415 = arith.divf %413, %414 : vector<8x64xf32>
    %416 = vector.extract_strided_slice %403 {offsets = [0, 128], sizes = [8, 64], strides = [1, 1]} : vector<8x256xf32> to vector<8x64xf32>
    %417 = math.tanh %416 : vector<8x64xf32>
    %418 = vector.extract_strided_slice %403 {offsets = [0, 192], sizes = [8, 64], strides = [1, 1]} : vector<8x256xf32> to vector<8x64xf32>
    %419 = arith.negf %418 : vector<8x64xf32>
    %420 = math.exp %419 : vector<8x64xf32>
    %cst_125 = arith.constant 1.000000e+00 : f32
    %421 = vector.broadcast %cst_125 : f32 to vector<8x64xf32>
    %422 = arith.addf %421, %420 : vector<8x64xf32>
    %423 = arith.divf %421, %422 : vector<8x64xf32>
    %424 = arith.mulf %415, %388 : vector<8x64xf32>
    %425 = arith.mulf %409, %417 : vector<8x64xf32>
    %426 = arith.addf %424, %425 : vector<8x64xf32>
    %427 = math.tanh %426 : vector<8x64xf32>
    %428 = arith.mulf %423, %427 : vector<8x64xf32>
    %c2_i32_126 = arith.constant 2 : i32
    %c8_i32_127 = arith.constant 8 : i32
    %429 = arith.muli %c2_i32_126, %c8_i32_127 : i32
    %430 = tpu.assume_multiple %429, 8 : i32
    %c7_i32_128 = arith.constant 7 : i32
    %431 = arith.subi %c7_i32_128, %c2_i32_126 : i32
    %c8_i32_129 = arith.constant 8 : i32
    %432 = arith.muli %431, %c8_i32_129 : i32
    %433 = tpu.assume_multiple %432, 8 : i32
    %434 = arith.index_cast %430 : i32 to index
    %c0_130 = arith.constant 0 : index
    %435 = vector.load %arg12[%434, %c0_130] : memref<64x256xf32, #tpu.memory_space<vmem>>, vector<8x256xf32>
    %436 = arith.index_cast %433 : i32 to index
    %c0_131 = arith.constant 0 : index
    %437 = vector.load %arg12[%436, %c0_131] : memref<64x256xf32, #tpu.memory_space<vmem>>, vector<8x256xf32>
    %438 = arith.select %18, %435, %437 : vector<8x256xi1>, vector<8x256xf32>
    %439 = arith.truncf %428 : vector<8x64xf32> to vector<8x64xbf16>
    %cst_132 = arith.constant dense<0.000000e+00> : vector<8x256xf32>
    %440 = tpu.matmul %439, %370, %cst_132 {dimension_numbers = #tpu.dot_dimension_numbers<[1], [0], [0], [1], [0, 0, 1, 1], [], []>} : vector<8x64xbf16>, vector<64x256xbf16>, vector<8x256xf32> -> vector<8x256xf32>
    %441 = arith.addf %438, %440 : vector<8x256xf32>
    %442 = vector.extract_strided_slice %441 {offsets = [0, 0], sizes = [8, 64], strides = [1, 1]} : vector<8x256xf32> to vector<8x64xf32>
    %443 = arith.negf %442 : vector<8x64xf32>
    %444 = math.exp %443 : vector<8x64xf32>
    %cst_133 = arith.constant 1.000000e+00 : f32
    %445 = vector.broadcast %cst_133 : f32 to vector<8x64xf32>
    %446 = arith.addf %445, %444 : vector<8x64xf32>
    %447 = arith.divf %445, %446 : vector<8x64xf32>
    %448 = vector.extract_strided_slice %441 {offsets = [0, 64], sizes = [8, 64], strides = [1, 1]} : vector<8x256xf32> to vector<8x64xf32>
    %449 = arith.negf %448 : vector<8x64xf32>
    %450 = math.exp %449 : vector<8x64xf32>
    %cst_134 = arith.constant 1.000000e+00 : f32
    %451 = vector.broadcast %cst_134 : f32 to vector<8x64xf32>
    %452 = arith.addf %451, %450 : vector<8x64xf32>
    %453 = arith.divf %451, %452 : vector<8x64xf32>
    %454 = vector.extract_strided_slice %441 {offsets = [0, 128], sizes = [8, 64], strides = [1, 1]} : vector<8x256xf32> to vector<8x64xf32>
    %455 = math.tanh %454 : vector<8x64xf32>
    %456 = vector.extract_strided_slice %441 {offsets = [0, 192], sizes = [8, 64], strides = [1, 1]} : vector<8x256xf32> to vector<8x64xf32>
    %457 = arith.negf %456 : vector<8x64xf32>
    %458 = math.exp %457 : vector<8x64xf32>
    %cst_135 = arith.constant 1.000000e+00 : f32
    %459 = vector.broadcast %cst_135 : f32 to vector<8x64xf32>
    %460 = arith.addf %459, %458 : vector<8x64xf32>
    %461 = arith.divf %459, %460 : vector<8x64xf32>
    %462 = arith.mulf %453, %426 : vector<8x64xf32>
    %463 = arith.mulf %447, %455 : vector<8x64xf32>
    %464 = arith.addf %462, %463 : vector<8x64xf32>
    %465 = math.tanh %464 : vector<8x64xf32>
    %466 = arith.mulf %461, %465 : vector<8x64xf32>
    %c3_i32_136 = arith.constant 3 : i32
    %c8_i32_137 = arith.constant 8 : i32
    %467 = arith.muli %c3_i32_136, %c8_i32_137 : i32
    %468 = tpu.assume_multiple %467, 8 : i32
    %c7_i32_138 = arith.constant 7 : i32
    %469 = arith.subi %c7_i32_138, %c3_i32_136 : i32
    %c8_i32_139 = arith.constant 8 : i32
    %470 = arith.muli %469, %c8_i32_139 : i32
    %471 = tpu.assume_multiple %470, 8 : i32
    %472 = arith.index_cast %468 : i32 to index
    %c0_140 = arith.constant 0 : index
    %473 = vector.load %arg12[%472, %c0_140] : memref<64x256xf32, #tpu.memory_space<vmem>>, vector<8x256xf32>
    %474 = arith.index_cast %471 : i32 to index
    %c0_141 = arith.constant 0 : index
    %475 = vector.load %arg12[%474, %c0_141] : memref<64x256xf32, #tpu.memory_space<vmem>>, vector<8x256xf32>
    %476 = arith.select %18, %473, %475 : vector<8x256xi1>, vector<8x256xf32>
    %477 = arith.truncf %466 : vector<8x64xf32> to vector<8x64xbf16>
    %cst_142 = arith.constant dense<0.000000e+00> : vector<8x256xf32>
    %478 = tpu.matmul %477, %370, %cst_142 {dimension_numbers = #tpu.dot_dimension_numbers<[1], [0], [0], [1], [0, 0, 1, 1], [], []>} : vector<8x64xbf16>, vector<64x256xbf16>, vector<8x256xf32> -> vector<8x256xf32>
    %479 = arith.addf %476, %478 : vector<8x256xf32>
    %480 = vector.extract_strided_slice %479 {offsets = [0, 0], sizes = [8, 64], strides = [1, 1]} : vector<8x256xf32> to vector<8x64xf32>
    %481 = arith.negf %480 : vector<8x64xf32>
    %482 = math.exp %481 : vector<8x64xf32>
    %cst_143 = arith.constant 1.000000e+00 : f32
    %483 = vector.broadcast %cst_143 : f32 to vector<8x64xf32>
    %484 = arith.addf %483, %482 : vector<8x64xf32>
    %485 = arith.divf %483, %484 : vector<8x64xf32>
    %486 = vector.extract_strided_slice %479 {offsets = [0, 64], sizes = [8, 64], strides = [1, 1]} : vector<8x256xf32> to vector<8x64xf32>
    %487 = arith.negf %486 : vector<8x64xf32>
    %488 = math.exp %487 : vector<8x64xf32>
    %cst_144 = arith.constant 1.000000e+00 : f32
    %489 = vector.broadcast %cst_144 : f32 to vector<8x64xf32>
    %490 = arith.addf %489, %488 : vector<8x64xf32>
    %491 = arith.divf %489, %490 : vector<8x64xf32>
    %492 = vector.extract_strided_slice %479 {offsets = [0, 128], sizes = [8, 64], strides = [1, 1]} : vector<8x256xf32> to vector<8x64xf32>
    %493 = math.tanh %492 : vector<8x64xf32>
    %494 = vector.extract_strided_slice %479 {offsets = [0, 192], sizes = [8, 64], strides = [1, 1]} : vector<8x256xf32> to vector<8x64xf32>
    %495 = arith.negf %494 : vector<8x64xf32>
    %496 = math.exp %495 : vector<8x64xf32>
    %cst_145 = arith.constant 1.000000e+00 : f32
    %497 = vector.broadcast %cst_145 : f32 to vector<8x64xf32>
    %498 = arith.addf %497, %496 : vector<8x64xf32>
    %499 = arith.divf %497, %498 : vector<8x64xf32>
    %500 = arith.mulf %491, %464 : vector<8x64xf32>
    %501 = arith.mulf %485, %493 : vector<8x64xf32>
    %502 = arith.addf %500, %501 : vector<8x64xf32>
    %503 = math.tanh %502 : vector<8x64xf32>
    %504 = arith.mulf %499, %503 : vector<8x64xf32>
    %c4_i32_146 = arith.constant 4 : i32
    %c8_i32_147 = arith.constant 8 : i32
    %505 = arith.muli %c4_i32_146, %c8_i32_147 : i32
    %506 = tpu.assume_multiple %505, 8 : i32
    %c7_i32_148 = arith.constant 7 : i32
    %507 = arith.subi %c7_i32_148, %c4_i32_146 : i32
    %c8_i32_149 = arith.constant 8 : i32
    %508 = arith.muli %507, %c8_i32_149 : i32
    %509 = tpu.assume_multiple %508, 8 : i32
    %510 = arith.index_cast %506 : i32 to index
    %c0_150 = arith.constant 0 : index
    %511 = vector.load %arg12[%510, %c0_150] : memref<64x256xf32, #tpu.memory_space<vmem>>, vector<8x256xf32>
    %512 = arith.index_cast %509 : i32 to index
    %c0_151 = arith.constant 0 : index
    %513 = vector.load %arg12[%512, %c0_151] : memref<64x256xf32, #tpu.memory_space<vmem>>, vector<8x256xf32>
    %514 = arith.select %18, %511, %513 : vector<8x256xi1>, vector<8x256xf32>
    %515 = arith.truncf %504 : vector<8x64xf32> to vector<8x64xbf16>
    %cst_152 = arith.constant dense<0.000000e+00> : vector<8x256xf32>
    %516 = tpu.matmul %515, %370, %cst_152 {dimension_numbers = #tpu.dot_dimension_numbers<[1], [0], [0], [1], [0, 0, 1, 1], [], []>} : vector<8x64xbf16>, vector<64x256xbf16>, vector<8x256xf32> -> vector<8x256xf32>
    %517 = arith.addf %514, %516 : vector<8x256xf32>
    %518 = vector.extract_strided_slice %517 {offsets = [0, 0], sizes = [8, 64], strides = [1, 1]} : vector<8x256xf32> to vector<8x64xf32>
    %519 = arith.negf %518 : vector<8x64xf32>
    %520 = math.exp %519 : vector<8x64xf32>
    %cst_153 = arith.constant 1.000000e+00 : f32
    %521 = vector.broadcast %cst_153 : f32 to vector<8x64xf32>
    %522 = arith.addf %521, %520 : vector<8x64xf32>
    %523 = arith.divf %521, %522 : vector<8x64xf32>
    %524 = vector.extract_strided_slice %517 {offsets = [0, 64], sizes = [8, 64], strides = [1, 1]} : vector<8x256xf32> to vector<8x64xf32>
    %525 = arith.negf %524 : vector<8x64xf32>
    %526 = math.exp %525 : vector<8x64xf32>
    %cst_154 = arith.constant 1.000000e+00 : f32
    %527 = vector.broadcast %cst_154 : f32 to vector<8x64xf32>
    %528 = arith.addf %527, %526 : vector<8x64xf32>
    %529 = arith.divf %527, %528 : vector<8x64xf32>
    %530 = vector.extract_strided_slice %517 {offsets = [0, 128], sizes = [8, 64], strides = [1, 1]} : vector<8x256xf32> to vector<8x64xf32>
    %531 = math.tanh %530 : vector<8x64xf32>
    %532 = vector.extract_strided_slice %517 {offsets = [0, 192], sizes = [8, 64], strides = [1, 1]} : vector<8x256xf32> to vector<8x64xf32>
    %533 = arith.negf %532 : vector<8x64xf32>
    %534 = math.exp %533 : vector<8x64xf32>
    %cst_155 = arith.constant 1.000000e+00 : f32
    %535 = vector.broadcast %cst_155 : f32 to vector<8x64xf32>
    %536 = arith.addf %535, %534 : vector<8x64xf32>
    %537 = arith.divf %535, %536 : vector<8x64xf32>
    %538 = arith.mulf %529, %502 : vector<8x64xf32>
    %539 = arith.mulf %523, %531 : vector<8x64xf32>
    %540 = arith.addf %538, %539 : vector<8x64xf32>
    %541 = math.tanh %540 : vector<8x64xf32>
    %542 = arith.mulf %537, %541 : vector<8x64xf32>
    %c5_i32_156 = arith.constant 5 : i32
    %c8_i32_157 = arith.constant 8 : i32
    %543 = arith.muli %c5_i32_156, %c8_i32_157 : i32
    %544 = tpu.assume_multiple %543, 8 : i32
    %c7_i32_158 = arith.constant 7 : i32
    %545 = arith.subi %c7_i32_158, %c5_i32_156 : i32
    %c8_i32_159 = arith.constant 8 : i32
    %546 = arith.muli %545, %c8_i32_159 : i32
    %547 = tpu.assume_multiple %546, 8 : i32
    %548 = arith.index_cast %544 : i32 to index
    %c0_160 = arith.constant 0 : index
    %549 = vector.load %arg12[%548, %c0_160] : memref<64x256xf32, #tpu.memory_space<vmem>>, vector<8x256xf32>
    %550 = arith.index_cast %547 : i32 to index
    %c0_161 = arith.constant 0 : index
    %551 = vector.load %arg12[%550, %c0_161] : memref<64x256xf32, #tpu.memory_space<vmem>>, vector<8x256xf32>
    %552 = arith.select %18, %549, %551 : vector<8x256xi1>, vector<8x256xf32>
    %553 = arith.truncf %542 : vector<8x64xf32> to vector<8x64xbf16>
    %cst_162 = arith.constant dense<0.000000e+00> : vector<8x256xf32>
    %554 = tpu.matmul %553, %370, %cst_162 {dimension_numbers = #tpu.dot_dimension_numbers<[1], [0], [0], [1], [0, 0, 1, 1], [], []>} : vector<8x64xbf16>, vector<64x256xbf16>, vector<8x256xf32> -> vector<8x256xf32>
    %555 = arith.addf %552, %554 : vector<8x256xf32>
    %556 = vector.extract_strided_slice %555 {offsets = [0, 0], sizes = [8, 64], strides = [1, 1]} : vector<8x256xf32> to vector<8x64xf32>
    %557 = arith.negf %556 : vector<8x64xf32>
    %558 = math.exp %557 : vector<8x64xf32>
    %cst_163 = arith.constant 1.000000e+00 : f32
    %559 = vector.broadcast %cst_163 : f32 to vector<8x64xf32>
    %560 = arith.addf %559, %558 : vector<8x64xf32>
    %561 = arith.divf %559, %560 : vector<8x64xf32>
    %562 = vector.extract_strided_slice %555 {offsets = [0, 64], sizes = [8, 64], strides = [1, 1]} : vector<8x256xf32> to vector<8x64xf32>
    %563 = arith.negf %562 : vector<8x64xf32>
    %564 = math.exp %563 : vector<8x64xf32>
    %cst_164 = arith.constant 1.000000e+00 : f32
    %565 = vector.broadcast %cst_164 : f32 to vector<8x64xf32>
    %566 = arith.addf %565, %564 : vector<8x64xf32>
    %567 = arith.divf %565, %566 : vector<8x64xf32>
    %568 = vector.extract_strided_slice %555 {offsets = [0, 128], sizes = [8, 64], strides = [1, 1]} : vector<8x256xf32> to vector<8x64xf32>
    %569 = math.tanh %568 : vector<8x64xf32>
    %570 = vector.extract_strided_slice %555 {offsets = [0, 192], sizes = [8, 64], strides = [1, 1]} : vector<8x256xf32> to vector<8x64xf32>
    %571 = arith.negf %570 : vector<8x64xf32>
    %572 = math.exp %571 : vector<8x64xf32>
    %cst_165 = arith.constant 1.000000e+00 : f32
    %573 = vector.broadcast %cst_165 : f32 to vector<8x64xf32>
    %574 = arith.addf %573, %572 : vector<8x64xf32>
    %575 = arith.divf %573, %574 : vector<8x64xf32>
    %576 = arith.mulf %567, %540 : vector<8x64xf32>
    %577 = arith.mulf %561, %569 : vector<8x64xf32>
    %578 = arith.addf %576, %577 : vector<8x64xf32>
    %579 = math.tanh %578 : vector<8x64xf32>
    %580 = arith.mulf %575, %579 : vector<8x64xf32>
    %c6_i32_166 = arith.constant 6 : i32
    %c8_i32_167 = arith.constant 8 : i32
    %581 = arith.muli %c6_i32_166, %c8_i32_167 : i32
    %582 = tpu.assume_multiple %581, 8 : i32
    %c7_i32_168 = arith.constant 7 : i32
    %583 = arith.subi %c7_i32_168, %c6_i32_166 : i32
    %c8_i32_169 = arith.constant 8 : i32
    %584 = arith.muli %583, %c8_i32_169 : i32
    %585 = tpu.assume_multiple %584, 8 : i32
    %586 = arith.index_cast %582 : i32 to index
    %c0_170 = arith.constant 0 : index
    %587 = vector.load %arg12[%586, %c0_170] : memref<64x256xf32, #tpu.memory_space<vmem>>, vector<8x256xf32>
    %588 = arith.index_cast %585 : i32 to index
    %c0_171 = arith.constant 0 : index
    %589 = vector.load %arg12[%588, %c0_171] : memref<64x256xf32, #tpu.memory_space<vmem>>, vector<8x256xf32>
    %590 = arith.select %18, %587, %589 : vector<8x256xi1>, vector<8x256xf32>
    %591 = arith.truncf %580 : vector<8x64xf32> to vector<8x64xbf16>
    %cst_172 = arith.constant dense<0.000000e+00> : vector<8x256xf32>
    %592 = tpu.matmul %591, %370, %cst_172 {dimension_numbers = #tpu.dot_dimension_numbers<[1], [0], [0], [1], [0, 0, 1, 1], [], []>} : vector<8x64xbf16>, vector<64x256xbf16>, vector<8x256xf32> -> vector<8x256xf32>
    %593 = arith.addf %590, %592 : vector<8x256xf32>
    %594 = vector.extract_strided_slice %593 {offsets = [0, 0], sizes = [8, 64], strides = [1, 1]} : vector<8x256xf32> to vector<8x64xf32>
    %595 = arith.negf %594 : vector<8x64xf32>
    %596 = math.exp %595 : vector<8x64xf32>
    %cst_173 = arith.constant 1.000000e+00 : f32
    %597 = vector.broadcast %cst_173 : f32 to vector<8x64xf32>
    %598 = arith.addf %597, %596 : vector<8x64xf32>
    %599 = arith.divf %597, %598 : vector<8x64xf32>
    %600 = vector.extract_strided_slice %593 {offsets = [0, 64], sizes = [8, 64], strides = [1, 1]} : vector<8x256xf32> to vector<8x64xf32>
    %601 = arith.negf %600 : vector<8x64xf32>
    %602 = math.exp %601 : vector<8x64xf32>
    %cst_174 = arith.constant 1.000000e+00 : f32
    %603 = vector.broadcast %cst_174 : f32 to vector<8x64xf32>
    %604 = arith.addf %603, %602 : vector<8x64xf32>
    %605 = arith.divf %603, %604 : vector<8x64xf32>
    %606 = vector.extract_strided_slice %593 {offsets = [0, 128], sizes = [8, 64], strides = [1, 1]} : vector<8x256xf32> to vector<8x64xf32>
    %607 = math.tanh %606 : vector<8x64xf32>
    %608 = vector.extract_strided_slice %593 {offsets = [0, 192], sizes = [8, 64], strides = [1, 1]} : vector<8x256xf32> to vector<8x64xf32>
    %609 = arith.negf %608 : vector<8x64xf32>
    %610 = math.exp %609 : vector<8x64xf32>
    %cst_175 = arith.constant 1.000000e+00 : f32
    %611 = vector.broadcast %cst_175 : f32 to vector<8x64xf32>
    %612 = arith.addf %611, %610 : vector<8x64xf32>
    %613 = arith.divf %611, %612 : vector<8x64xf32>
    %614 = arith.mulf %605, %578 : vector<8x64xf32>
    %615 = arith.mulf %599, %607 : vector<8x64xf32>
    %616 = arith.addf %614, %615 : vector<8x64xf32>
    %617 = math.tanh %616 : vector<8x64xf32>
    %618 = arith.mulf %613, %617 : vector<8x64xf32>
    %c7_i32_176 = arith.constant 7 : i32
    %c8_i32_177 = arith.constant 8 : i32
    %619 = arith.muli %c7_i32_176, %c8_i32_177 : i32
    %620 = tpu.assume_multiple %619, 8 : i32
    %c7_i32_178 = arith.constant 7 : i32
    %621 = arith.subi %c7_i32_178, %c7_i32_176 : i32
    %c8_i32_179 = arith.constant 8 : i32
    %622 = arith.muli %621, %c8_i32_179 : i32
    %623 = tpu.assume_multiple %622, 8 : i32
    %624 = arith.index_cast %620 : i32 to index
    %c0_180 = arith.constant 0 : index
    %625 = vector.load %arg12[%624, %c0_180] : memref<64x256xf32, #tpu.memory_space<vmem>>, vector<8x256xf32>
    %626 = arith.index_cast %623 : i32 to index
    %c0_181 = arith.constant 0 : index
    %627 = vector.load %arg12[%626, %c0_181] : memref<64x256xf32, #tpu.memory_space<vmem>>, vector<8x256xf32>
    %628 = arith.select %18, %625, %627 : vector<8x256xi1>, vector<8x256xf32>
    %629 = arith.truncf %618 : vector<8x64xf32> to vector<8x64xbf16>
    %cst_182 = arith.constant dense<0.000000e+00> : vector<8x256xf32>
    %630 = tpu.matmul %629, %370, %cst_182 {dimension_numbers = #tpu.dot_dimension_numbers<[1], [0], [0], [1], [0, 0, 1, 1], [], []>} : vector<8x64xbf16>, vector<64x256xbf16>, vector<8x256xf32> -> vector<8x256xf32>
    %631 = arith.addf %628, %630 : vector<8x256xf32>
    %632 = vector.extract_strided_slice %631 {offsets = [0, 0], sizes = [8, 64], strides = [1, 1]} : vector<8x256xf32> to vector<8x64xf32>
    %633 = arith.negf %632 : vector<8x64xf32>
    %634 = math.exp %633 : vector<8x64xf32>
    %cst_183 = arith.constant 1.000000e+00 : f32
    %635 = vector.broadcast %cst_183 : f32 to vector<8x64xf32>
    %636 = arith.addf %635, %634 : vector<8x64xf32>
    %637 = arith.divf %635, %636 : vector<8x64xf32>
    %638 = vector.extract_strided_slice %631 {offsets = [0, 64], sizes = [8, 64], strides = [1, 1]} : vector<8x256xf32> to vector<8x64xf32>
    %639 = arith.negf %638 : vector<8x64xf32>
    %640 = math.exp %639 : vector<8x64xf32>
    %cst_184 = arith.constant 1.000000e+00 : f32
    %641 = vector.broadcast %cst_184 : f32 to vector<8x64xf32>
    %642 = arith.addf %641, %640 : vector<8x64xf32>
    %643 = arith.divf %641, %642 : vector<8x64xf32>
    %644 = vector.extract_strided_slice %631 {offsets = [0, 128], sizes = [8, 64], strides = [1, 1]} : vector<8x256xf32> to vector<8x64xf32>
    %645 = math.tanh %644 : vector<8x64xf32>
    %646 = vector.extract_strided_slice %631 {offsets = [0, 192], sizes = [8, 64], strides = [1, 1]} : vector<8x256xf32> to vector<8x64xf32>
    %647 = arith.negf %646 : vector<8x64xf32>
    %648 = math.exp %647 : vector<8x64xf32>
    %cst_185 = arith.constant 1.000000e+00 : f32
    %649 = vector.broadcast %cst_185 : f32 to vector<8x64xf32>
    %650 = arith.addf %649, %648 : vector<8x64xf32>
    %651 = arith.divf %649, %650 : vector<8x64xf32>
    %652 = arith.mulf %643, %616 : vector<8x64xf32>
    %653 = arith.mulf %637, %645 : vector<8x64xf32>
    %654 = arith.addf %652, %653 : vector<8x64xf32>
    %655 = math.tanh %654 : vector<8x64xf32>
    %656 = arith.mulf %651, %655 : vector<8x64xf32>
    %c7_i32_186 = arith.constant 7 : i32
    %657 = arith.select %21, %656, %390 : vector<8x64xi1>, vector<8x64xf32>
    %658 = arith.truncf %657 : vector<8x64xf32> to vector<8x64xbf16>
    %c0_187 = arith.constant 0 : index
    %c0_188 = arith.constant 0 : index
    %659 = vector.load %arg7[%c0_187, %c0_188] : memref<64x64xbf16, #tpu.memory_space<vmem>>, vector<64x64xbf16>
    %cst_189 = arith.constant dense<0.000000e+00> : vector<8x64xf32>
    %660 = tpu.matmul %658, %659, %cst_189 {dimension_numbers = #tpu.dot_dimension_numbers<[1], [0], [0], [1], [0, 0, 1, 1], [], []>} : vector<8x64xbf16>, vector<64x64xbf16>, vector<8x64xf32> -> vector<8x64xf32>
    %c0_190 = arith.constant 0 : index
    %c0_191 = arith.constant 0 : index
    %661 = vector.load %arg8[%c0_190, %c0_191] : memref<1x64xf32, #tpu.memory_space<vmem>>, vector<1x64xf32>
    %662 = vector.broadcast %661 : vector<1x64xf32> to vector<8x64xf32>
    %663 = arith.addf %660, %662 : vector<8x64xf32>
    %cst_192 = arith.constant 0.000000e+00 : f32
    %664 = vector.broadcast %cst_192 : f32 to vector<8x64xf32>
    %665 = arith.maximumf %663, %664 : vector<8x64xf32>
    %666 = arith.truncf %665 : vector<8x64xf32> to vector<8x64xbf16>
    %c0_193 = arith.constant 0 : index
    %c0_194 = arith.constant 0 : index
    %667 = vector.load %arg9[%c0_193, %c0_194] : memref<64x8xbf16, #tpu.memory_space<vmem>>, vector<64x8xbf16>
    %cst_195 = arith.constant dense<0.000000e+00> : vector<8x8xf32>
    %668 = tpu.matmul %666, %667, %cst_195 {dimension_numbers = #tpu.dot_dimension_numbers<[1], [0], [0], [1], [0, 0, 1, 1], [], []>} : vector<8x64xbf16>, vector<64x8xbf16>, vector<8x8xf32> -> vector<8x8xf32>
    %c0_196 = arith.constant 0 : index
    %c0_197 = arith.constant 0 : index
    %669 = vector.load %arg10[%c0_196, %c0_197] : memref<1x8xf32, #tpu.memory_space<vmem>>, vector<1x8xf32>
    %670 = vector.broadcast %669 : vector<1x8xf32> to vector<8x8xf32>
    %671 = arith.addf %668, %670 : vector<8x8xf32>
    %c0_198 = arith.constant 0 : index
    %c0_199 = arith.constant 0 : index
    %672 = vector.load %arg11[%c0_198, %c0_199] : memref<8x8xf32, #tpu.memory_space<vmem>>, vector<8x8xf32>
    tpu.vector_store %arg11[%c0_198, %c0_199], %671 {strides = array<i32>} : memref<8x8xf32, #tpu.memory_space<vmem>>, vector<8x8xf32>,
    return
  }
}

</mosaic_0001>

<llo_original>
// kernel: tpu_custom_call.1
$region0: #{tpu_custom_call.1}
  #allocation0 [shape = 'u32[]', space=smem, size = 0x4, offset = 0x4, fixed_abs, tag = 'smem constant byte address 0x4 - core index']
  #allocation1 [shape = 'u32[144,128]{1,0:T(1,128)}', space=vmem, size = 0x12000, scoped, tag = 'internal scratch']
  #allocation2 [shape = 'f32[64,256]{1,0:T(8,128)}', space=vmem, size = 0x10000, scoped, tag = 'scratch operand']
  #allocation3 [shape = 'f32[64,64]{1,0:T(8,128)}', space=vmem, size = 0x8000, scoped, tag = 'scratch operand']
  %s0 = inlined_call_operand.vmem [shape: bf16[64,16], index: 0, kind: input, shape index: {}]
  %s1 = inlined_call_operand.hbm [shape: bf16[16,256], index: 1, kind: input, shape index: {}]
  %s2 = inlined_call_operand.vmem [shape: f32[1,256], index: 2, kind: input, shape index: {}]
  %s3 = inlined_call_operand.vmem [shape: bf16[64,256], index: 3, kind: input, shape index: {}]
  %s4 = inlined_call_operand.hbm [shape: bf16[64,256], index: 4, kind: input, shape index: {}]
  %s5 = inlined_call_operand.hbm [shape: f32[1,256], index: 5, kind: input, shape index: {}]
  %s6 = inlined_call_operand.hbm [shape: bf16[64,256], index: 6, kind: input, shape index: {}]
  %s7 = inlined_call_operand.vmem [shape: bf16[64,64], index: 7, kind: input, shape index: {}]
  %s8 = inlined_call_operand.vmem [shape: f32[1,64], index: 8, kind: input, shape index: {}]
  %s9 = inlined_call_operand.vmem [shape: bf16[64,8], index: 9, kind: input, shape index: {}]
  %s10 = inlined_call_operand.vmem [shape: f32[1,8], index: 10, kind: input, shape index: {}]
  %s11 = inlined_call_operand.hbm [shape: f32[8,8], index: 11, kind: output, shape index: {}]
  %s12 = sld [smem:[#allocation0]]
  $region70: #{tpu_custom_call.1} parent=0
    _
  %s14 = ssub.s32 1, %s12
  %s15 = scalar_select 0, %s14, %s12
  $region1: #{tpu_custom_call.1} parent=0
    #allocation4 [shape = 'u8[8192]{0}', space=vmem, size = 0x2000, scoped, tag = 'input window, operand 1, single buffered']
    #allocation5 [shape = 's32[1]{0}', space=sflag, size = 0x4, scoped, tag = 'scoped memory for tpu_custom_call.1']
    #allocation6 [shape = 's32[1]{0}', space=sflag, size = 0x4, scoped, tag = 'scoped memory for tpu_custom_call.1']
    #allocation7 [shape = 'u8[32768]{0}', space=vmem, size = 0x8000, scoped, tag = 'input window, operand 4, single buffered']
    #allocation8 [shape = 's32[1]{0}', space=sflag, size = 0x4, scoped, tag = 'scoped memory for tpu_custom_call.1']
    #allocation9 [shape = 'u8[1024]{0}', space=vmem, size = 0x400, scoped, tag = 'input window, operand 5, single buffered']
    #allocation10 [shape = 'u8[32768]{0}', space=vmem, size = 0x8000, scoped, tag = 'input window, operand 6, single buffered']
    #allocation11 [shape = 's32[1]{0}', space=sflag, size = 0x4, scoped, tag = 'scoped memory for tpu_custom_call.1']
    #allocation12 [shape = 'u8[4096]{0}', space=vmem, size = 0x1000, scoped, tag = 'output window, operand 0, single buffered']
    %16 = vsyncpa [#allocation5], 0
    %17 = vsyncpa [#allocation8], 0
    %18 = vsyncpa [#allocation11], 0
    %19 = vsyncpa [#allocation6], 0
    // Predicated region
    $region2: #{tpu_custom_call.1} parent=1 // pred_check
      _
    $region3: #{tpu_custom_call.1} parent=1 // pred_check_branch
      %21 = sbr.rel (0) target = $region5
    $region4: #{tpu_custom_call.1} parent=1 // pred_region
      _
    $region5: #{tpu_custom_call.1} parent=1 // pred_fallthru
      _
    // Predicated region
    $region6: #{tpu_custom_call.1} parent=1 // pred_check
      _
    $region7: #{tpu_custom_call.1} parent=1 // pred_check_branch
      %23 = sbr.rel (0) target = $region9
    $region8: #{tpu_custom_call.1} parent=1 // pred_region
      %s25 = ssub.s32 256, 256
      %26 = vsyncadd [#allocation5], %s25
      %s27 = sshll.u32 [#allocation4], 4
      %s28 = int_to_ptr.vmem [resolvable:$true] %s27
      %33 = dma.hbm_to_vmem [thread:$0]  %s1, 256, %s28, [#allocation5], 128, 128, 8
    $region9: #{tpu_custom_call.1} parent=1 // pred_fallthru
      _
    // Predicated region
    $region10: #{tpu_custom_call.1} parent=1 // pred_check
      _
    $region11: #{tpu_custom_call.1} parent=1 // pred_check_branch
      %35 = sbr.rel (0) target = $region13
    $region12: #{tpu_custom_call.1} parent=1 // pred_region
      _
    $region13: #{tpu_custom_call.1} parent=1 // pred_fallthru
      _
    // Predicated region
    $region14: #{tpu_custom_call.1} parent=1 // pred_check
      _
    $region15: #{tpu_custom_call.1} parent=1 // pred_check_branch
      %37 = sbr.rel (0) target = $region17
    $region16: #{tpu_custom_call.1} parent=1 // pred_region
      _
    $region17: #{tpu_custom_call.1} parent=1 // pred_fallthru
      _
    // Predicated region
    $region18: #{tpu_custom_call.1} parent=1 // pred_check
      _
    $region19: #{tpu_custom_call.1} parent=1 // pred_check_branch
      %39 = sbr.rel (0) target = $region21
    $region20: #{tpu_custom_call.1} parent=1 // pred_region
      %s41 = ssub.s32 1024, 1024
      %42 = vsyncadd [#allocation8], %s41
      %s43 = sshll.u32 [#allocation7], 4
      %s44 = int_to_ptr.vmem [resolvable:$true] %s43
      %49 = dma.hbm_to_vmem [thread:$0]  %s4, 1024, %s44, [#allocation8], 128, 128, 8
    $region21: #{tpu_custom_call.1} parent=1 // pred_fallthru
      _
    // Predicated region
    $region22: #{tpu_custom_call.1} parent=1 // pred_check
      _
    $region23: #{tpu_custom_call.1} parent=1 // pred_check_branch
      %51 = sbr.rel (0) target = $region25
    $region24: #{tpu_custom_call.1} parent=1 // pred_region
      %s53 = ssub.s32 32, 32
      %54 = vsyncadd [#allocation8], %s53
      %s56 = sshll.u32 [#allocation9], 4
      %s57 = int_to_ptr.vmem [resolvable:$true] %s56
      %59 = dma.hbm_to_vmem [thread:$0]  %s5, 32, %s57, [#allocation8]
    $region25: #{tpu_custom_call.1} parent=1 // pred_fallthru
      _
    // Predicated region
    $region26: #{tpu_custom_call.1} parent=1 // pred_check
      _
    $region27: #{tpu_custom_call.1} parent=1 // pred_check_branch
      %61 = sbr.rel (0) target = $region29
    $region28: #{tpu_custom_call.1} parent=1 // pred_region
      %s63 = ssub.s32 1024, 1024
      %64 = vsyncadd [#allocation11], %s63
      %s65 = sshll.u32 [#allocation10], 4
      %s66 = int_to_ptr.vmem [resolvable:$true] %s65
      %71 = dma.hbm_to_vmem [thread:$0]  %s6, 1024, %s66, [#allocation11], 128, 128, 8
    $region29: #{tpu_custom_call.1} parent=1 // pred_fallthru
      _
    // Predicated region
    $region30: #{tpu_custom_call.1} parent=1 // pred_check
      _
    $region31: #{tpu_custom_call.1} parent=1 // pred_check_branch
      %73 = sbr.rel (0) target = $region33
    $region32: #{tpu_custom_call.1} parent=1 // pred_region
      _
    $region33: #{tpu_custom_call.1} parent=1 // pred_fallthru
      _
    // Predicated region
    $region34: #{tpu_custom_call.1} parent=1 // pred_check
      _
    $region35: #{tpu_custom_call.1} parent=1 // pred_check_branch
      %75 = sbr.rel (0) target = $region37
    $region36: #{tpu_custom_call.1} parent=1 // pred_region
      _
    $region37: #{tpu_custom_call.1} parent=1 // pred_fallthru
      _
    // Predicated region
    $region38: #{tpu_custom_call.1} parent=1 // pred_check
      _
    $region39: #{tpu_custom_call.1} parent=1 // pred_check_branch
      %77 = sbr.rel (0) target = $region41
    $region40: #{tpu_custom_call.1} parent=1 // pred_region
      _
    $region41: #{tpu_custom_call.1} parent=1 // pred_fallthru
      _
    // Predicated region
    $region42: #{tpu_custom_call.1} parent=1 // pred_check
      _
    $region43: #{tpu_custom_call.1} parent=1 // pred_check_branch
      %79 = sbr.rel (0) target = $region45
    $region44: #{tpu_custom_call.1} parent=1 // pred_region
      _
    $region45: #{tpu_custom_call.1} parent=1 // pred_fallthru
      _
    // Predicated region
    $region46: #{tpu_custom_call.1} parent=1 // pred_check
      _
    $region47: #{tpu_custom_call.1} parent=1 // pred_check_branch
      %81 = sbr.rel (0) target = $region49
    $region48: #{tpu_custom_call.1} parent=1 // pred_region
      %82 = dma.done [#allocation5], 256
    $region49: #{tpu_custom_call.1} parent=1 // pred_fallthru
      _
    // Predicated region
    $region50: #{tpu_custom_call.1} parent=1 // pred_check
      _
    $region51: #{tpu_custom_call.1} parent=1 // pred_check_branch
      %84 = sbr.rel (0) target = $region53
    $region52: #{tpu_custom_call.1} parent=1 // pred_region
      %85 = dma.done [#allocation8], 1024
    $region53: #{tpu_custom_call.1} parent=1 // pred_fallthru
      _
    // Predicated region
    $region54: #{tpu_custom_call.1} parent=1 // pred_check
      _
    $region55: #{tpu_custom_call.1} parent=1 // pred_check_branch
      %87 = sbr.rel (0) target = $region57
    $region56: #{tpu_custom_call.1} parent=1 // pred_region
      %88 = dma.done [#allocation8], 32
    $region57: #{tpu_custom_call.1} parent=1 // pred_fallthru
      _
    // Predicated region
    $region58: #{tpu_custom_call.1} parent=1 // pred_check
      _
    $region59: #{tpu_custom_call.1} parent=1 // pred_check_branch
      %90 = sbr.rel (0) target = $region61
    $region60: #{tpu_custom_call.1} parent=1 // pred_region
      %91 = dma.done [#allocation11], 1024
    $region61: #{tpu_custom_call.1} parent=1 // pred_fallthru
      _
    %v93 = vlaneseq
    %v94 = vand.u32 %v93, 127
    %v95 = vadd.s32 %v94, 128
    %vm96 = vcmp.lt.s32.totalorder %v94, 0
    %v97 = vsub.s32 0, %v94
    %v98 = vsel %vm96, %v97, %v94
    %v99 = vshrl.u32 %v98, 6
    %v100 = vand.u32 %v98, 63
    %v101 = vsub.s32 0, %v100
    %v102 = vsel %vm96, %v101, %v100
    %vm103 = vcmp.lt.s32.totalorder %v95, 0
    %v104 = vsub.s32 0, %v95
    %v105 = vsel %vm103, %v104, %v95
    %v106 = vshrl.u32 %v105, 6
    %v107 = vand.u32 %v105, 63
    %v108 = vsub.s32 0, %v107
    %v109 = vsel %vm103, %v108, %v107
    %vm110 = vcmp.ne.s32.totalorder %v102, 0
    %vm111 = vcmp.ne.s32.totalorder %v109, 0
    %vm112 = vcmp.lt.s32.totalorder %v102, 0
    %vm113 = vcmp.lt.s32.totalorder %v109, 0
    %vm114 = vmand %vm112, %vm110
    %vm115 = vmand %vm113, %vm111
    %v116 = vadd.s32 %v102, 64
    %v117 = vadd.s32 %v109, 64
    %v118 = vsel %vm114, %v116, %v102
    %v119 = vsel %vm115, %v117, %v109
    %vm120 = vcmp.lt.s32.totalorder %v118, 32
    %vm121 = vcmp.lt.s32.totalorder %v119, 32
    %vm122 = vcmp.lt.s32.totalorder %v94, 32
    %v123 = vld [vmem:[%s0] sm:$0xf]
    %v124 = vld [vmem:[%s0 + $0x4] sm:$0xf]
    %v125 = vld [vmem:[%s0 + $0x8] sm:$0xf]
    %v126 = vld [vmem:[%s0 + $0xc] sm:$0xf]
    %v127 = vld [vmem:[%s0 + $0x10] sm:$0xf]
    %v128 = vld [vmem:[%s0 + $0x14] sm:$0xf]
    %v129 = vld [vmem:[%s0 + $0x18] sm:$0xf]
    %v130 = vld [vmem:[%s0 + $0x1c] sm:$0xf]
    %v131 = vld [vmem:[#allocation4] sm:$0xff]
    %v132 = vld [vmem:[#allocation4 + $0x8] sm:$0xff]
    %v133 = vld [vmem:[%s2] sm:$0x3]
    %v135 = vlaneseq
    %v136 = vshrl.u32 %v135, 7
    %v137 = vsub.s32 0, %v136
    %v138 = vrot.slane %v133, %v137
    %v139 = vlaneseq
    %v140 = vshrl.u32 %v139, 7
    %v141 = vsub.s32 1, %v140
    %v142 = vrot.slane %v133, %v141
    %v153 = vunpack.c.l.b16 %v123
    %v154 = vunpack.c.l.b16 %v124
    %v155 = vunpack.c.l.b16 %v125
    %v156 = vunpack.c.l.b16 %v126
    %v157 = vunpack.c.l.b16 %v127
    %v158 = vunpack.c.l.b16 %v128
    %v159 = vunpack.c.l.b16 %v129
    %v160 = vunpack.c.l.b16 %v130
    %v161 = vpack.c.b16 %v154, %v153
    %v162 = vpack.c.b16 %v156, %v155
    %v163 = vpack.c.b16 %v158, %v157
    %v164 = vpack.c.b16 %v160, %v159
    %v167 = vunpack.c.l.b16 %v131
    %v168 = vunpack.c.h.b16 %v131
    %v169 = vunpack.c.l.b16 %v132
    %v170 = vunpack.c.h.b16 %v132
    %v171 = vpack.c.b16 %v169, %v167
    %v172 = vpack.c.b16 %v170, %v168
    %vm175 = vcmask 130048
    %v177 = vsel %vm175, %v161, 0
    %v180 = vsel %vm175, %v162, 0
    %v183 = vsel %vm175, %v163, 0
    %v186 = vsel %vm175, %v164, 0
    %188 = vmatprep.subr.bf16.mxu0 %v172
    %189 = vmatpush1.bf16.msra.mxu0 %v171
    %190 = vmatprep.subr.bf16.mxu0 0
    %191 = vmatpush1.bf16.msra.mxu0 0
    %192 = vmatprep.subr.bf16.mxu0 0
    %193 = vmatpush1.bf16.msra.mxu0 0
    %194 = vmatprep.subr.bf16.mxu0 0
    %195 = vmatpush1.bf16.msra.mxu0 0
    %196 = vmatprep.subr.bf16.mxu0 0
    %197 = vmatpush1.bf16.msra.mxu0 0
    %198 = vmatprep.subr.bf16.mxu0 0
    %199 = vmatpush1.bf16.msra.mxu0 0
    %200 = vmatprep.subr.bf16.mxu0 0
    %201 = vmatpush1.bf16.msra.mxu0 0
    %202 = vmatprep.subr.bf16.mxu0 0
    %203 = vmatpush1.bf16.msra.mxu0 0
    %204 = vmatprep.subr.bf16.mxu0 0
    %205 = vmatpush1.bf16.msra.mxu0 0
    %206 = vmatprep.subr.bf16.mxu0 0
    %207 = vmatpush1.bf16.msra.mxu0 0
    %208 = vmatprep.subr.bf16.mxu0 0
    %209 = vmatpush1.bf16.msra.mxu0 0
    %210 = vmatprep.subr.bf16.mxu0 0
    %211 = vmatpush1.bf16.msra.mxu0 0
    %212 = vmatprep.subr.bf16.mxu0 0
    %213 = vmatpush1.bf16.msra.mxu0 0
    %214 = vmatprep.subr.bf16.mxu0 0
    %215 = vmatpush1.bf16.msra.mxu0 0
    %216 = vmatprep.subr.bf16.mxu0 0
    %217 = vmatpush1.bf16.msra.mxu0 0
    %218 = vmatprep.subr.bf16.mxu0 0
    %219 = vmatpush1.bf16.msra.mxu0 0
    %220 = vmatprep.mubr.bf16.mxu0 0
    %221 = vmatmul.mubr.bf16.gmra.mrb[0].mxu0 %v177
    %v222 = vpop.f32.mrb[0].mxu0
    %v223 = vadd.f32 %v138, %v222
    %v224 = vpop.f32.mrb[0].mxu0
    %v225 = vadd.f32 %v142, %v224
    %v226 = vpop.f32.mrb[0].mxu0
    %v227 = vadd.f32 %v138, %v226
    %v228 = vpop.f32.mrb[0].mxu0
    %v229 = vadd.f32 %v142, %v228
    %230 = vmatprep.mubr.bf16.mxu0 0
    %231 = vmatmul.mubr.bf16.gmra.mrb[0].mxu0 %v180
    %v232 = vpop.f32.mrb[0].mxu0
    %v233 = vadd.f32 %v138, %v232
    %v234 = vpop.f32.mrb[0].mxu0
    %v235 = vadd.f32 %v142, %v234
    %v236 = vpop.f32.mrb[0].mxu0
    %v237 = vadd.f32 %v138, %v236
    %v238 = vpop.f32.mrb[0].mxu0
    %v239 = vadd.f32 %v142, %v238
    %240 = vmatprep.mubr.bf16.mxu0 0
    %241 = vmatmul.mubr.bf16.gmra.mrb[0].mxu0 %v183
    %v242 = vpop.f32.mrb[0].mxu0
    %v243 = vadd.f32 %v138, %v242
    %v244 = vpop.f32.mrb[0].mxu0
    %v245 = vadd.f32 %v142, %v244
    %v246 = vpop.f32.mrb[0].mxu0
    %v247 = vadd.f32 %v138, %v246
    %v248 = vpop.f32.mrb[0].mxu0
    %v249 = vadd.f32 %v142, %v248
    %250 = vmatprep.mubr.bf16.mxu0 0
    %251 = vmatmul.mubr.bf16.gmra.mrb[0].mxu0 %v186
    %v252 = vpop.f32.mrb[0].mxu0
    %v253 = vadd.f32 %v138, %v252
    %v254 = vpop.f32.mrb[0].mxu0
    %v255 = vadd.f32 %v142, %v254
    %v256 = vpop.f32.mrb[0].mxu0
    %v257 = vadd.f32 %v138, %v256
    %v258 = vpop.f32.mrb[0].mxu0
    %v259 = vadd.f32 %v142, %v258
    %260 = vdwg.mxu0
    %261 = vst [vmem:[#allocation2] sm:$0xff] %v223
    %262 = vst [vmem:[#allocation2 + $0x8] sm:$0xff] %v225
    %263 = vst [vmem:[#allocation2 + $0x10] sm:$0xff] %v227
    %264 = vst [vmem:[#allocation2 + $0x18] sm:$0xff] %v229
    %265 = vst [vmem:[#allocation2 + $0x20] sm:$0xff] %v233
    %266 = vst [vmem:[#allocation2 + $0x28] sm:$0xff] %v235
    %267 = vst [vmem:[#allocation2 + $0x30] sm:$0xff] %v237
    %268 = vst [vmem:[#allocation2 + $0x38] sm:$0xff] %v239
    %269 = vst [vmem:[#allocation2 + $0x40] sm:$0xff] %v243
    %270 = vst [vmem:[#allocation2 + $0x48] sm:$0xff] %v245
    %271 = vst [vmem:[#allocation2 + $0x50] sm:$0xff] %v247
    %272 = vst [vmem:[#allocation2 + $0x58] sm:$0xff] %v249
    %273 = vst [vmem:[#allocation2 + $0x60] sm:$0xff] %v253
    %274 = vst [vmem:[#allocation2 + $0x68] sm:$0xff] %v255
    %275 = vst [vmem:[#allocation2 + $0x70] sm:$0xff] %v257
    %276 = vst [vmem:[#allocation2 + $0x78] sm:$0xff] %v259
    %v277 = vld [vmem:[%s3] sm:$0xff]
    %v278 = vld [vmem:[%s3 + $0x8] sm:$0xff]
    %v279 = vld [vmem:[%s3 + $0x10] sm:$0xff]
    %v280 = vld [vmem:[%s3 + $0x18] sm:$0xff]
    %v281 = vld [vmem:[%s3 + $0x20] sm:$0xff]
    %v282 = vld [vmem:[%s3 + $0x28] sm:$0xff]
    %v283 = vld [vmem:[%s3 + $0x30] sm:$0xff]
    %v284 = vld [vmem:[%s3 + $0x38] sm:$0xff]
    %v285 = vld [vmem:[#allocation2] sm:$0xff]
    %v286 = vld [vmem:[#allocation2 + $0x8] sm:$0xff]
    %v287 = vld [vmem:[#allocation2 + $0x70] sm:$0xff]
    %v288 = vld [vmem:[#allocation2 + $0x78] sm:$0xff]
    %v289 = vsel %vm120, %v285, %v287
    %v290 = vsel %vm121, %v286, %v288
    %v291 = vxor.u32 %v289, 2147483648
    %v292 = vmul.f32 %v291, 1.442695
    %v293 = vpow.pop %v292
    %v294 = vadd.f32 %v293, 1.0
    %v295 = vrcp.pop %v294
    %v296 = vmul.f32 1.0, %v295
    %v297 = vtanh.pop %v290
    %v298 = vxor.u32 %v290, 2147483648
    %v299 = vmul.f32 %v298, 1.442695
    %v300 = vpow.pop %v299
    %v301 = vadd.f32 %v300, 1.0
    %v302 = vrcp.pop %v301
    %v303 = vmul.f32 1.0, %v302
    %v304 = vmul.f32 %v296, %v297
    %v305 = vtanh.pop %v304
    %307 = vrot.lane.b32.xlu0 %v305, 64
    %v308 = vpop.permute.xlu0 %307
    %v310 = vmul.f32 %v303, %v308
    %312 = vrot.lane.b32.xlu0 %v310, 64
    %v313 = vpop.permute.xlu0 %312
    %vm315 = vcmask 261120
    %316 = vst.msk [vmem:[#allocation3] sm:$0xff] %vm315, %v313
    %vm317 = vcmask 523520
    %318 = vst.msk [vmem:[#allocation3 + $0x38] sm:$0xff] %vm317, %v313
    %s319 = smul.u32 1, 2
    %s320 = smul.addr %s319, 8
    %s321 = scalar_lea.vmem [#allocation2], %s320
    %v322 = vld [vmem:[%s321] sm:$0xff]
    %v323 = vld [vmem:[%s321 + $0x8] sm:$0xff]
    %s324 = smul.u32 6, 2
    %s325 = smul.addr %s324, 8
    %s326 = scalar_lea.vmem [#allocation2], %s325
    %v327 = vld [vmem:[%s326] sm:$0xff]
    %v328 = vld [vmem:[%s326 + $0x8] sm:$0xff]
    %v329 = vsel %vm120, %v322, %v327
    %v330 = vsel %vm121, %v323, %v328
    %v331 = vpack.c.bf16 %v310, %v310
    %333 = vrot.lane.b32.xlu0 %v331, 64
    %v334 = vpop.permute.xlu0 %333
    %v343 = vunpack.c.l.b16 %v277
    %v344 = vunpack.c.h.b16 %v277
    %v345 = vunpack.c.l.b16 %v278
    %v346 = vunpack.c.h.b16 %v278
    %v347 = vunpack.c.l.b16 %v279
    %v348 = vunpack.c.h.b16 %v279
    %v349 = vunpack.c.l.b16 %v280
    %v350 = vunpack.c.h.b16 %v280
    %v351 = vunpack.c.l.b16 %v281
    %v352 = vunpack.c.h.b16 %v281
    %v353 = vunpack.c.l.b16 %v282
    %v354 = vunpack.c.h.b16 %v282
    %v355 = vunpack.c.l.b16 %v283
    %v356 = vunpack.c.h.b16 %v283
    %v357 = vunpack.c.l.b16 %v284
    %v358 = vunpack.c.h.b16 %v284
    %v359 = vpack.c.b16 %v345, %v343
    %v360 = vpack.c.b16 %v346, %v344
    %v361 = vpack.c.b16 %v349, %v347
    %v362 = vpack.c.b16 %v350, %v348
    %v363 = vpack.c.b16 %v353, %v351
    %v364 = vpack.c.b16 %v354, %v352
    %v365 = vpack.c.b16 %v357, %v355
    %v366 = vpack.c.b16 %v358, %v356
    %vm375 = vcmask 523264
    %v377 = vsel %vm375, %v334, 0
    %379 = vmatprep.subr.bf16.mxu0 %v360
    %380 = vmatpush1.bf16.msra.mxu0 %v359
    %381 = vmatprep.subr.bf16.mxu0 %v362
    %382 = vmatpush1.bf16.msra.mxu0 %v361
    %383 = vmatprep.subr.bf16.mxu0 %v364
    %384 = vmatpush1.bf16.msra.mxu0 %v363
    %385 = vmatprep.subr.bf16.mxu0 %v366
    %386 = vmatpush1.bf16.msra.mxu0 %v365
    %387 = vmatprep.subr.bf16.mxu0 0
    %388 = vmatpush1.bf16.msra.mxu0 0
    %389 = vmatprep.subr.bf16.mxu0 0
    %390 = vmatpush1.bf16.msra.mxu0 0
    %391 = vmatprep.subr.bf16.mxu0 0
    %392 = vmatpush1.bf16.msra.mxu0 0
    %393 = vmatprep.subr.bf16.mxu0 0
    %394 = vmatpush1.bf16.msra.mxu0 0
    %395 = vmatprep.subr.bf16.mxu0 0
    %396 = vmatpush1.bf16.msra.mxu0 0
    %397 = vmatprep.subr.bf16.mxu0 0
    %398 = vmatpush1.bf16.msra.mxu0 0
    %399 = vmatprep.subr.bf16.mxu0 0
    %400 = vmatpush1.bf16.msra.mxu0 0
    %401 = vmatprep.subr.bf16.mxu0 0
    %402 = vmatpush1.bf16.msra.mxu0 0
    %403 = vmatprep.subr.bf16.mxu0 0
    %404 = vmatpush1.bf16.msra.mxu0 0
    %405 = vmatprep.subr.bf16.mxu0 0
    %406 = vmatpush1.bf16.msra.mxu0 0
    %407 = vmatprep.subr.bf16.mxu0 0
    %408 = vmatpush1.bf16.msra.mxu0 0
    %409 = vmatprep.subr.bf16.mxu0 0
    %410 = vmatpush1.bf16.msra.mxu0 0
    %411 = vmatprep.mubr.bf16.mxu0 0
    %412 = vmatmul.mubr.bf16.gmra.mrb[0].mxu0 %v377
    %v413 = vpop.f32.mrb[0].mxu0
    %v414 = vadd.f32 0.0, %v413
    %v415 = vpop.f32.mrb[0].mxu0
    %v416 = vadd.f32 0.0, %v415
    %v417 = vpop.f32.mrb[0].mxu0
    %v418 = vpop.f32.mrb[0].mxu0
    %419 = vdwg.mxu0
    %v420 = vadd.f32 %v329, %v414
    %v421 = vadd.f32 %v330, %v416
    %v422 = vxor.u32 %v420, 2147483648
    %v423 = vmul.f32 %v422, 1.442695
    %v424 = vpow.pop %v423
    %v425 = vadd.f32 %v424, 1.0
    %v426 = vrcp.pop %v425
    %v427 = vmul.f32 1.0, %v426
    %v428 = vtanh.pop %v421
    %v429 = vxor.u32 %v421, 2147483648
    %v430 = vmul.f32 %v429, 1.442695
    %v431 = vpow.pop %v430
    %v432 = vadd.f32 %v431, 1.0
    %v433 = vrcp.pop %v432
    %v434 = vmul.f32 1.0, %v433
    %436 = vrot.lane.b32.xlu0 %v304, 64
    %v437 = vpop.permute.xlu0 %436
    %v439 = vmul.f32 %v427, %v437
    %v440 = vmul.f32 %v427, %v428
    %442 = vrot.lane.b32.xlu0 %v440, 64
    %v443 = vpop.permute.xlu0 %442
    %v445 = vadd.f32 %v439, %v443
    %v446 = vtanh.pop %v445
    %v447 = vmul.f32 %v434, %v446
    %449 = vrot.lane.b32.xlu0 %v447, 64
    %v450 = vpop.permute.xlu0 %449
    %s452 = scalar_lea.vmem [#allocation3], 8
    %453 = vst.msk [vmem:[%s452] sm:$0xff] %vm315, %v450
    %s454 = scalar_lea.vmem [#allocation3], 48
    %455 = vst.msk [vmem:[%s454] sm:$0xff] %vm317, %v450
    %s456 = smul.u32 2, 2
    %s457 = smul.addr %s456, 8
    %s458 = scalar_lea.vmem [#allocation2], %s457
    %v459 = vld [vmem:[%s458] sm:$0xff]
    %v460 = vld [vmem:[%s458 + $0x8] sm:$0xff]
    %s461 = smul.u32 5, 2
    %s462 = smul.addr %s461, 8
    %s463 = scalar_lea.vmem [#allocation2], %s462
    %v464 = vld [vmem:[%s463] sm:$0xff]
    %v465 = vld [vmem:[%s463 + $0x8] sm:$0xff]
    %v466 = vsel %vm120, %v459, %v464
    %v467 = vsel %vm121, %v460, %v465
    %v468 = vpack.c.bf16 %v447, %v447
    %470 = vrot.lane.b32.xlu0 %v468, 64
    %v471 = vpop.permute.xlu0 %470
    %v473 = vsel %vm375, %v471, 0
    %475 = vmatprep.subr.bf16.mxu0 %v360
    %476 = vmatpush1.bf16.msra.mxu0 %v359
    %477 = vmatprep.subr.bf16.mxu0 %v362
    %478 = vmatpush1.bf16.msra.mxu0 %v361
    %479 = vmatprep.subr.bf16.mxu0 %v364
    %480 = vmatpush1.bf16.msra.mxu0 %v363
    %481 = vmatprep.subr.bf16.mxu0 %v366
    %482 = vmatpush1.bf16.msra.mxu0 %v365
    %483 = vmatprep.subr.bf16.mxu0 0
    %484 = vmatpush1.bf16.msra.mxu0 0
    %485 = vmatprep.subr.bf16.mxu0 0
    %486 = vmatpush1.bf16.msra.mxu0 0
    %487 = vmatprep.subr.bf16.mxu0 0
    %488 = vmatpush1.bf16.msra.mxu0 0
    %489 = vmatprep.subr.bf16.mxu0 0
    %490 = vmatpush1.bf16.msra.mxu0 0
    %491 = vmatprep.subr.bf16.mxu0 0
    %492 = vmatpush1.bf16.msra.mxu0 0
    %493 = vmatprep.subr.bf16.mxu0 0
    %494 = vmatpush1.bf16.msra.mxu0 0
    %495 = vmatprep.subr.bf16.mxu0 0
    %496 = vmatpush1.bf16.msra.mxu0 0
    %497 = vmatprep.subr.bf16.mxu0 0
    %498 = vmatpush1.bf16.msra.mxu0 0
    %499 = vmatprep.subr.bf16.mxu0 0
    %500 = vmatpush1.bf16.msra.mxu0 0
    %501 = vmatprep.subr.bf16.mxu0 0
    %502 = vmatpush1.bf16.msra.mxu0 0
    %503 = vmatprep.subr.bf16.mxu0 0
    %504 = vmatpush1.bf16.msra.mxu0 0
    %505 = vmatprep.subr.bf16.mxu0 0
    %506 = vmatpush1.bf16.msra.mxu0 0
    %507 = vmatprep.mubr.bf16.mxu0 0
    %508 = vmatmul.mubr.bf16.gmra.mrb[0].mxu0 %v473
    %v509 = vpop.f32.mrb[0].mxu0
    %v510 = vadd.f32 0.0, %v509
    %v511 = vpop.f32.mrb[0].mxu0
    %v512 = vadd.f32 0.0, %v511
    %v513 = vpop.f32.mrb[0].mxu0
    %v514 = vpop.f32.mrb[0].mxu0
    %515 = vdwg.mxu0
    %v516 = vadd.f32 %v466, %v510
    %v517 = vadd.f32 %v467, %v512
    %v518 = vxor.u32 %v516, 2147483648
    %v519 = vmul.f32 %v518, 1.442695
    %v520 = vpow.pop %v519
    %v521 = vadd.f32 %v520, 1.0
    %v522 = vrcp.pop %v521
    %v523 = vmul.f32 1.0, %v522
    %v524 = vtanh.pop %v517
    %v525 = vxor.u32 %v517, 2147483648
    %v526 = vmul.f32 %v525, 1.442695
    %v527 = vpow.pop %v526
    %v528 = vadd.f32 %v527, 1.0
    %v529 = vrcp.pop %v528
    %v530 = vmul.f32 1.0, %v529
    %v531 = vmul.f32 %v523, %v445
    %v532 = vmul.f32 %v523, %v524
    %534 = vrot.lane.b32.xlu0 %v532, 64
    %v535 = vpop.permute.xlu0 %534
    %v537 = vadd.f32 %v531, %v535
    %v538 = vtanh.pop %v537
    %v539 = vmul.f32 %v530, %v538
    %541 = vrot.lane.b32.xlu0 %v539, 64
    %v542 = vpop.permute.xlu0 %541
    %s544 = scalar_lea.vmem [#allocation3], 16
    %545 = vst.msk [vmem:[%s544] sm:$0xff] %vm315, %v542
    %s546 = scalar_lea.vmem [#allocation3], 40
    %547 = vst.msk [vmem:[%s546] sm:$0xff] %vm317, %v542
    %s548 = smul.u32 3, 2
    %s549 = smul.addr %s548, 8
    %s550 = scalar_lea.vmem [#allocation2], %s549
    %v551 = vld [vmem:[%s550] sm:$0xff]
    %v552 = vld [vmem:[%s550 + $0x8] sm:$0xff]
    %s553 = smul.u32 4, 2
    %s554 = smul.addr %s553, 8
    %s555 = scalar_lea.vmem [#allocation2], %s554
    %v556 = vld [vmem:[%s555] sm:$0xff]
    %v557 = vld [vmem:[%s555 + $0x8] sm:$0xff]
    %v558 = vsel %vm120, %v551, %v556
    %v559 = vsel %vm121, %v552, %v557
    %v560 = vpack.c.bf16 %v539, %v539
    %562 = vrot.lane.b32.xlu0 %v560, 64
    %v563 = vpop.permute.xlu0 %562
    %v565 = vsel %vm375, %v563, 0
    %567 = vmatprep.subr.bf16.mxu0 %v360
    %568 = vmatpush1.bf16.msra.mxu0 %v359
    %569 = vmatprep.subr.bf16.mxu0 %v362
    %570 = vmatpush1.bf16.msra.mxu0 %v361
    %571 = vmatprep.subr.bf16.mxu0 %v364
    %572 = vmatpush1.bf16.msra.mxu0 %v363
    %573 = vmatprep.subr.bf16.mxu0 %v366
    %574 = vmatpush1.bf16.msra.mxu0 %v365
    %575 = vmatprep.subr.bf16.mxu0 0
    %576 = vmatpush1.bf16.msra.mxu0 0
    %577 = vmatprep.subr.bf16.mxu0 0
    %578 = vmatpush1.bf16.msra.mxu0 0
    %579 = vmatprep.subr.bf16.mxu0 0
    %580 = vmatpush1.bf16.msra.mxu0 0
    %581 = vmatprep.subr.bf16.mxu0 0
    %582 = vmatpush1.bf16.msra.mxu0 0
    %583 = vmatprep.subr.bf16.mxu0 0
    %584 = vmatpush1.bf16.msra.mxu0 0
    %585 = vmatprep.subr.bf16.mxu0 0
    %586 = vmatpush1.bf16.msra.mxu0 0
    %587 = vmatprep.subr.bf16.mxu0 0
    %588 = vmatpush1.bf16.msra.mxu0 0
    %589 = vmatprep.subr.bf16.mxu0 0
    %590 = vmatpush1.bf16.msra.mxu0 0
    %591 = vmatprep.subr.bf16.mxu0 0
    %592 = vmatpush1.bf16.msra.mxu0 0
    %593 = vmatprep.subr.bf16.mxu0 0
    %594 = vmatpush1.bf16.msra.mxu0 0
    %595 = vmatprep.subr.bf16.mxu0 0
    %596 = vmatpush1.bf16.msra.mxu0 0
    %597 = vmatprep.subr.bf16.mxu0 0
    %598 = vmatpush1.bf16.msra.mxu0 0
    %599 = vmatprep.mubr.bf16.mxu0 0
    %600 = vmatmul.mubr.bf16.gmra.mrb[0].mxu0 %v565
    %v601 = vpop.f32.mrb[0].mxu0
    %v602 = vadd.f32 0.0, %v601
    %v603 = vpop.f32.mrb[0].mxu0
    %v604 = vadd.f32 0.0, %v603
    %v605 = vpop.f32.mrb[0].mxu0
    %v606 = vpop.f32.mrb[0].mxu0
    %607 = vdwg.mxu0
    %v608 = vadd.f32 %v558, %v602
    %v609 = vadd.f32 %v559, %v604
    %v610 = vxor.u32 %v608, 2147483648
    %v611 = vmul.f32 %v610, 1.442695
    %v612 = vpow.pop %v611
    %v613 = vadd.f32 %v612, 1.0
    %v614 = vrcp.pop %v613
    %v615 = vmul.f32 1.0, %v614
    %v616 = vtanh.pop %v609
    %v617 = vxor.u32 %v609, 2147483648
    %v618 = vmul.f32 %v617, 1.442695
    %v619 = vpow.pop %v618
    %v620 = vadd.f32 %v619, 1.0
    %v621 = vrcp.pop %v620
    %v622 = vmul.f32 1.0, %v621
    %v623 = vmul.f32 %v615, %v537
    %v624 = vmul.f32 %v615, %v616
    %626 = vrot.lane.b32.xlu0 %v624, 64
    %v627 = vpop.permute.xlu0 %626
    %v629 = vadd.f32 %v623, %v627
    %v630 = vtanh.pop %v629
    %v631 = vmul.f32 %v622, %v630
    %633 = vrot.lane.b32.xlu0 %v631, 64
    %v634 = vpop.permute.xlu0 %633
    %s636 = scalar_lea.vmem [#allocation3], 24
    %637 = vst.msk [vmem:[%s636] sm:$0xff] %vm315, %v634
    %s638 = scalar_lea.vmem [#allocation3], 32
    %639 = vst.msk [vmem:[%s638] sm:$0xff] %vm317, %v634
    %v640 = vld [vmem:[%s555] sm:$0xff]
    %v641 = vld [vmem:[%s555 + $0x8] sm:$0xff]
    %v642 = vld [vmem:[%s550] sm:$0xff]
    %v643 = vld [vmem:[%s550 + $0x8] sm:$0xff]
    %v644 = vsel %vm120, %v640, %v642
    %v645 = vsel %vm121, %v641, %v643
    %v646 = vpack.c.bf16 %v631, %v631
    %648 = vrot.lane.b32.xlu0 %v646, 64
    %v649 = vpop.permute.xlu0 %648
    %v651 = vsel %vm375, %v649, 0
    %653 = vmatprep.subr.bf16.mxu0 %v360
    %654 = vmatpush1.bf16.msra.mxu0 %v359
    %655 = vmatprep.subr.bf16.mxu0 %v362
    %656 = vmatpush1.bf16.msra.mxu0 %v361
    %657 = vmatprep.subr.bf16.mxu0 %v364
    %658 = vmatpush1.bf16.msra.mxu0 %v363
    %659 = vmatprep.subr.bf16.mxu0 %v366
    %660 = vmatpush1.bf16.msra.mxu0 %v365
    %661 = vmatprep.subr.bf16.mxu0 0
    %662 = vmatpush1.bf16.msra.mxu0 0
    %663 = vmatprep.subr.bf16.mxu0 0
    %664 = vmatpush1.bf16.msra.mxu0 0
    %665 = vmatprep.subr.bf16.mxu0 0
    %666 = vmatpush1.bf16.msra.mxu0 0
    %667 = vmatprep.subr.bf16.mxu0 0
    %668 = vmatpush1.bf16.msra.mxu0 0
    %669 = vmatprep.subr.bf16.mxu0 0
    %670 = vmatpush1.bf16.msra.mxu0 0
    %671 = vmatprep.subr.bf16.mxu0 0
    %672 = vmatpush1.bf16.msra.mxu0 0
    %673 = vmatprep.subr.bf16.mxu0 0
    %674 = vmatpush1.bf16.msra.mxu0 0
    %675 = vmatprep.subr.bf16.mxu0 0
    %676 = vmatpush1.bf16.msra.mxu0 0
    %677 = vmatprep.subr.bf16.mxu0 0
    %678 = vmatpush1.bf16.msra.mxu0 0
    %679 = vmatprep.subr.bf16.mxu0 0
    %680 = vmatpush1.bf16.msra.mxu0 0
    %681 = vmatprep.subr.bf16.mxu0 0
    %682 = vmatpush1.bf16.msra.mxu0 0
    %683 = vmatprep.subr.bf16.mxu0 0
    %684 = vmatpush1.bf16.msra.mxu0 0
    %685 = vmatprep.mubr.bf16.mxu0 0
    %686 = vmatmul.mubr.bf16.gmra.mrb[0].mxu0 %v651
    %v687 = vpop.f32.mrb[0].mxu0
    %v688 = vadd.f32 0.0, %v687
    %v689 = vpop.f32.mrb[0].mxu0
    %v690 = vadd.f32 0.0, %v689
    %v691 = vpop.f32.mrb[0].mxu0
    %v692 = vpop.f32.mrb[0].mxu0
    %693 = vdwg.mxu0
    %v694 = vadd.f32 %v644, %v688
    %v695 = vadd.f32 %v645, %v690
    %v696 = vxor.u32 %v694, 2147483648
    %v697 = vmul.f32 %v696, 1.442695
    %v698 = vpow.pop %v697
    %v699 = vadd.f32 %v698, 1.0
    %v700 = vrcp.pop %v699
    %v701 = vmul.f32 1.0, %v700
    %v702 = vtanh.pop %v695
    %v703 = vxor.u32 %v695, 2147483648
    %v704 = vmul.f32 %v703, 1.442695
    %v705 = vpow.pop %v704
    %v706 = vadd.f32 %v705, 1.0
    %v707 = vrcp.pop %v706
    %v708 = vmul.f32 1.0, %v707
    %v709 = vmul.f32 %v701, %v629
    %v710 = vmul.f32 %v701, %v702
    %712 = vrot.lane.b32.xlu0 %v710, 64
    %v713 = vpop.permute.xlu0 %712
    %v715 = vadd.f32 %v709, %v713
    %v716 = vtanh.pop %v715
    %v717 = vmul.f32 %v708, %v716
    %719 = vrot.lane.b32.xlu0 %v717, 64
    %v720 = vpop.permute.xlu0 %719
    %722 = vst.msk [vmem:[%s638] sm:$0xff] %vm315, %v720
    %723 = vst.msk [vmem:[%s636] sm:$0xff] %vm317, %v720
    %v724 = vld [vmem:[%s463] sm:$0xff]
    %v725 = vld [vmem:[%s463 + $0x8] sm:$0xff]
    %v726 = vld [vmem:[%s458] sm:$0xff]
    %v727 = vld [vmem:[%s458 + $0x8] sm:$0xff]
    %v728 = vsel %vm120, %v724, %v726
    %v729 = vsel %vm121, %v725, %v727
    %v730 = vpack.c.bf16 %v717, %v717
    %732 = vrot.lane.b32.xlu0 %v730, 64
    %v733 = vpop.permute.xlu0 %732
    %v735 = vsel %vm375, %v733, 0
    %737 = vmatprep.subr.bf16.mxu0 %v360
    %738 = vmatpush1.bf16.msra.mxu0 %v359
    %739 = vmatprep.subr.bf16.mxu0 %v362
    %740 = vmatpush1.bf16.msra.mxu0 %v361
    %741 = vmatprep.subr.bf16.mxu0 %v364
    %742 = vmatpush1.bf16.msra.mxu0 %v363
    %743 = vmatprep.subr.bf16.mxu0 %v366
    %744 = vmatpush1.bf16.msra.mxu0 %v365
    %745 = vmatprep.subr.bf16.mxu0 0
    %746 = vmatpush1.bf16.msra.mxu0 0
    %747 = vmatprep.subr.bf16.mxu0 0
    %748 = vmatpush1.bf16.msra.mxu0 0
    %749 = vmatprep.subr.bf16.mxu0 0
    %750 = vmatpush1.bf16.msra.mxu0 0
    %751 = vmatprep.subr.bf16.mxu0 0
    %752 = vmatpush1.bf16.msra.mxu0 0
    %753 = vmatprep.subr.bf16.mxu0 0
    %754 = vmatpush1.bf16.msra.mxu0 0
    %755 = vmatprep.subr.bf16.mxu0 0
    %756 = vmatpush1.bf16.msra.mxu0 0
    %757 = vmatprep.subr.bf16.mxu0 0
    %758 = vmatpush1.bf16.msra.mxu0 0
    %759 = vmatprep.subr.bf16.mxu0 0
    %760 = vmatpush1.bf16.msra.mxu0 0
    %761 = vmatprep.subr.bf16.mxu0 0
    %762 = vmatpush1.bf16.msra.mxu0 0
    %763 = vmatprep.subr.bf16.mxu0 0
    %764 = vmatpush1.bf16.msra.mxu0 0
    %765 = vmatprep.subr.bf16.mxu0 0
    %766 = vmatpush1.bf16.msra.mxu0 0
    %767 = vmatprep.subr.bf16.mxu0 0
    %768 = vmatpush1.bf16.msra.mxu0 0
    %769 = vmatprep.mubr.bf16.mxu0 0
    %770 = vmatmul.mubr.bf16.gmra.mrb[0].mxu0 %v735
    %v771 = vpop.f32.mrb[0].mxu0
    %v772 = vadd.f32 0.0, %v771
    %v773 = vpop.f32.mrb[0].mxu0
    %v774 = vadd.f32 0.0, %v773
    %v775 = vpop.f32.mrb[0].mxu0
    %v776 = vpop.f32.mrb[0].mxu0
    %777 = vdwg.mxu0
    %v778 = vadd.f32 %v728, %v772
    %v779 = vadd.f32 %v729, %v774
    %v780 = vxor.u32 %v778, 2147483648
    %v781 = vmul.f32 %v780, 1.442695
    %v782 = vpow.pop %v781
    %v783 = vadd.f32 %v782, 1.0
    %v784 = vrcp.pop %v783
    %v785 = vmul.f32 1.0, %v784
    %v786 = vtanh.pop %v779
    %v787 = vxor.u32 %v779, 2147483648
    %v788 = vmul.f32 %v787, 1.442695
    %v789 = vpow.pop %v788
    %v790 = vadd.f32 %v789, 1.0
    %v791 = vrcp.pop %v790
    %v792 = vmul.f32 1.0, %v791
    %v793 = vmul.f32 %v785, %v715
    %v794 = vmul.f32 %v785, %v786
    %796 = vrot.lane.b32.xlu0 %v794, 64
    %v797 = vpop.permute.xlu0 %796
    %v799 = vadd.f32 %v793, %v797
    %v800 = vtanh.pop %v799
    %v801 = vmul.f32 %v792, %v800
    %803 = vrot.lane.b32.xlu0 %v801, 64
    %v804 = vpop.permute.xlu0 %803
    %806 = vst.msk [vmem:[%s546] sm:$0xff] %vm315, %v804
    %807 = vst.msk [vmem:[%s544] sm:$0xff] %vm317, %v804
    %v808 = vld [vmem:[%s326] sm:$0xff]
    %v809 = vld [vmem:[%s326 + $0x8] sm:$0xff]
    %v810 = vld [vmem:[%s321] sm:$0xff]
    %v811 = vld [vmem:[%s321 + $0x8] sm:$0xff]
    %v812 = vsel %vm120, %v808, %v810
    %v813 = vsel %vm121, %v809, %v811
    %v814 = vpack.c.bf16 %v801, %v801
    %816 = vrot.lane.b32.xlu0 %v814, 64
    %v817 = vpop.permute.xlu0 %816
    %v819 = vsel %vm375, %v817, 0
    %821 = vmatprep.subr.bf16.mxu0 %v360
    %822 = vmatpush1.bf16.msra.mxu0 %v359
    %823 = vmatprep.subr.bf16.mxu0 %v362
    %824 = vmatpush1.bf16.msra.mxu0 %v361
    %825 = vmatprep.subr.bf16.mxu0 %v364
    %826 = vmatpush1.bf16.msra.mxu0 %v363
    %827 = vmatprep.subr.bf16.mxu0 %v366
    %828 = vmatpush1.bf16.msra.mxu0 %v365
    %829 = vmatprep.subr.bf16.mxu0 0
    %830 = vmatpush1.bf16.msra.mxu0 0
    %831 = vmatprep.subr.bf16.mxu0 0
    %832 = vmatpush1.bf16.msra.mxu0 0
    %833 = vmatprep.subr.bf16.mxu0 0
    %834 = vmatpush1.bf16.msra.mxu0 0
    %835 = vmatprep.subr.bf16.mxu0 0
    %836 = vmatpush1.bf16.msra.mxu0 0
    %837 = vmatprep.subr.bf16.mxu0 0
    %838 = vmatpush1.bf16.msra.mxu0 0
    %839 = vmatprep.subr.bf16.mxu0 0
    %840 = vmatpush1.bf16.msra.mxu0 0
    %841 = vmatprep.subr.bf16.mxu0 0
    %842 = vmatpush1.bf16.msra.mxu0 0
    %843 = vmatprep.subr.bf16.mxu0 0
    %844 = vmatpush1.bf16.msra.mxu0 0
    %845 = vmatprep.subr.bf16.mxu0 0
    %846 = vmatpush1.bf16.msra.mxu0 0
    %847 = vmatprep.subr.bf16.mxu0 0
    %848 = vmatpush1.bf16.msra.mxu0 0
    %849 = vmatprep.subr.bf16.mxu0 0
    %850 = vmatpush1.bf16.msra.mxu0 0
    %851 = vmatprep.subr.bf16.mxu0 0
    %852 = vmatpush1.bf16.msra.mxu0 0
    %853 = vmatprep.mubr.bf16.mxu0 0
    %854 = vmatmul.mubr.bf16.gmra.mrb[0].mxu0 %v819
    %v855 = vpop.f32.mrb[0].mxu0
    %v856 = vadd.f32 0.0, %v855
    %v857 = vpop.f32.mrb[0].mxu0
    %v858 = vadd.f32 0.0, %v857
    %v859 = vpop.f32.mrb[0].mxu0
    %v860 = vpop.f32.mrb[0].mxu0
    %861 = vdwg.mxu0
    %v862 = vadd.f32 %v812, %v856
    %v863 = vadd.f32 %v813, %v858
    %v864 = vxor.u32 %v862, 2147483648
    %v865 = vmul.f32 %v864, 1.442695
    %v866 = vpow.pop %v865
    %v867 = vadd.f32 %v866, 1.0
    %v868 = vrcp.pop %v867
    %v869 = vmul.f32 1.0, %v868
    %v870 = vtanh.pop %v863
    %v871 = vxor.u32 %v863, 2147483648
    %v872 = vmul.f32 %v871, 1.442695
    %v873 = vpow.pop %v872
    %v874 = vadd.f32 %v873, 1.0
    %v875 = vrcp.pop %v874
    %v876 = vmul.f32 1.0, %v875
    %v877 = vmul.f32 %v869, %v799
    %v878 = vmul.f32 %v869, %v870
    %880 = vrot.lane.b32.xlu0 %v878, 64
    %v881 = vpop.permute.xlu0 %880
    %v883 = vadd.f32 %v877, %v881
    %v884 = vtanh.pop %v883
    %v885 = vmul.f32 %v876, %v884
    %887 = vrot.lane.b32.xlu0 %v885, 64
    %v888 = vpop.permute.xlu0 %887
    %890 = vst.msk [vmem:[%s454] sm:$0xff] %vm315, %v888
    %891 = vst.msk [vmem:[%s452] sm:$0xff] %vm317, %v888
    %s892 = smul.u32 7, 2
    %s893 = smul.addr %s892, 8
    %s894 = scalar_lea.vmem [#allocation2], %s893
    %v895 = vld [vmem:[%s894] sm:$0xff]
    %v896 = vld [vmem:[%s894 + $0x8] sm:$0xff]
    %s897 = smul.u32 0, 2
    %s898 = smul.addr %s897, 8
    %s899 = scalar_lea.vmem [#allocation2], %s898
    %v900 = vld [vmem:[%s899] sm:$0xff]
    %v901 = vld [vmem:[%s899 + $0x8] sm:$0xff]
    %v902 = vsel %vm120, %v895, %v900
    %v903 = vsel %vm121, %v896, %v901
    %v904 = vpack.c.bf16 %v885, %v885
    %906 = vrot.lane.b32.xlu0 %v904, 64
    %v907 = vpop.permute.xlu0 %906
    %v909 = vsel %vm375, %v907, 0
    %911 = vmatprep.subr.bf16.mxu0 %v360
    %912 = vmatpush1.bf16.msra.mxu0 %v359
    %913 = vmatprep.subr.bf16.mxu0 %v362
    %914 = vmatpush1.bf16.msra.mxu0 %v361
    %915 = vmatprep.subr.bf16.mxu0 %v364
    %916 = vmatpush1.bf16.msra.mxu0 %v363
    %917 = vmatprep.subr.bf16.mxu0 %v366
    %918 = vmatpush1.bf16.msra.mxu0 %v365
    %919 = vmatprep.subr.bf16.mxu0 0
    %920 = vmatpush1.bf16.msra.mxu0 0
    %921 = vmatprep.subr.bf16.mxu0 0
    %922 = vmatpush1.bf16.msra.mxu0 0
    %923 = vmatprep.subr.bf16.mxu0 0
    %924 = vmatpush1.bf16.msra.mxu0 0
    %925 = vmatprep.subr.bf16.mxu0 0
    %926 = vmatpush1.bf16.msra.mxu0 0
    %927 = vmatprep.subr.bf16.mxu0 0
    %928 = vmatpush1.bf16.msra.mxu0 0
    %929 = vmatprep.subr.bf16.mxu0 0
    %930 = vmatpush1.bf16.msra.mxu0 0
    %931 = vmatprep.subr.bf16.mxu0 0
    %932 = vmatpush1.bf16.msra.mxu0 0
    %933 = vmatprep.subr.bf16.mxu0 0
    %934 = vmatpush1.bf16.msra.mxu0 0
    %935 = vmatprep.subr.bf16.mxu0 0
    %936 = vmatpush1.bf16.msra.mxu0 0
    %937 = vmatprep.subr.bf16.mxu0 0
    %938 = vmatpush1.bf16.msra.mxu0 0
    %939 = vmatprep.subr.bf16.mxu0 0
    %940 = vmatpush1.bf16.msra.mxu0 0
    %941 = vmatprep.subr.bf16.mxu0 0
    %942 = vmatpush1.bf16.msra.mxu0 0
    %943 = vmatprep.mubr.bf16.mxu0 0
    %944 = vmatmul.mubr.bf16.gmra.mrb[0].mxu0 %v909
    %v945 = vpop.f32.mrb[0].mxu0
    %v946 = vadd.f32 0.0, %v945
    %v947 = vpop.f32.mrb[0].mxu0
    %v948 = vadd.f32 0.0, %v947
    %v949 = vpop.f32.mrb[0].mxu0
    %v950 = vpop.f32.mrb[0].mxu0
    %951 = vdwg.mxu0
    %v952 = vadd.f32 %v902, %v946
    %v953 = vadd.f32 %v903, %v948
    %v954 = vxor.u32 %v952, 2147483648
    %v955 = vmul.f32 %v954, 1.442695
    %v956 = vpow.pop %v955
    %v957 = vadd.f32 %v956, 1.0
    %v958 = vrcp.pop %v957
    %v959 = vmul.f32 1.0, %v958
    %v960 = vtanh.pop %v953
    %v961 = vxor.u32 %v953, 2147483648
    %v962 = vmul.f32 %v961, 1.442695
    %v963 = vpow.pop %v962
    %v964 = vadd.f32 %v963, 1.0
    %v965 = vrcp.pop %v964
    %v966 = vmul.f32 1.0, %v965
    %v967 = vmul.f32 %v959, %v883
    %v968 = vmul.f32 %v959, %v960
    %970 = vrot.lane.b32.xlu0 %v968, 64
    %v971 = vpop.permute.xlu0 %970
    %v973 = vadd.f32 %v967, %v971
    %v974 = vtanh.pop %v973
    %v975 = vmul.f32 %v966, %v974
    %977 = vrot.lane.b32.xlu0 %v975, 64
    %v978 = vpop.permute.xlu0 %977
    %s980 = scalar_lea.vmem [#allocation3], 56
    %981 = vst.msk [vmem:[%s980] sm:$0xff] %vm315, %v978
    %982 = vst.msk [vmem:[#allocation3] sm:$0xff] %vm317, %v978
    %v983 = vld [vmem:[#allocation3] sm:$0xff]
    %v984 = vld [vmem:[#allocation3 + $0x8] sm:$0xff]
    %v985 = vld [vmem:[#allocation3 + $0x10] sm:$0xff]
    %v986 = vld [vmem:[#allocation3 + $0x18] sm:$0xff]
    %v987 = vld [vmem:[#allocation3 + $0x20] sm:$0xff]
    %v988 = vld [vmem:[#allocation3 + $0x28] sm:$0xff]
    %v989 = vld [vmem:[#allocation3 + $0x30] sm:$0xff]
    %v990 = vld [vmem:[#allocation3 + $0x38] sm:$0xff]
    %v991 = vpack.c.bf16 %v984, %v983
    %v992 = vpack.c.bf16 %v986, %v985
    %v993 = vpack.c.bf16 %v988, %v987
    %v994 = vpack.c.bf16 %v990, %v989
    %v995 = vld [vmem:[#allocation7] sm:$0xff]
    %v996 = vld [vmem:[#allocation7 + $0x8] sm:$0xff]
    %v997 = vld [vmem:[#allocation7 + $0x10] sm:$0xff]
    %v998 = vld [vmem:[#allocation7 + $0x18] sm:$0xff]
    %v999 = vld [vmem:[#allocation7 + $0x20] sm:$0xff]
    %v1000 = vld [vmem:[#allocation7 + $0x28] sm:$0xff]
    %v1001 = vld [vmem:[#allocation7 + $0x30] sm:$0xff]
    %v1002 = vld [vmem:[#allocation7 + $0x38] sm:$0xff]
    %v1003 = vld [vmem:[#allocation9] sm:$0x3]
    %v1005 = vlaneseq
    %v1006 = vshrl.u32 %v1005, 7
    %v1007 = vsub.s32 0, %v1006
    %v1008 = vrot.slane %v1003, %v1007
    %v1009 = vlaneseq
    %v1010 = vshrl.u32 %v1009, 7
    %v1011 = vsub.s32 1, %v1010
    %v1012 = vrot.slane %v1003, %v1011
    %v1023 = vunpack.c.l.b16 %v995
    %v1024 = vunpack.c.h.b16 %v995
    %v1025 = vunpack.c.l.b16 %v996
    %v1026 = vunpack.c.h.b16 %v996
    %v1027 = vunpack.c.l.b16 %v997
    %v1028 = vunpack.c.h.b16 %v997
    %v1029 = vunpack.c.l.b16 %v998
    %v1030 = vunpack.c.h.b16 %v998
    %v1031 = vunpack.c.l.b16 %v999
    %v1032 = vunpack.c.h.b16 %v999
    %v1033 = vunpack.c.l.b16 %v1000
    %v1034 = vunpack.c.h.b16 %v1000
    %v1035 = vunpack.c.l.b16 %v1001
    %v1036 = vunpack.c.h.b16 %v1001
    %v1037 = vunpack.c.l.b16 %v1002
    %v1038 = vunpack.c.h.b16 %v1002
    %v1039 = vpack.c.b16 %v1025, %v1023
    %v1040 = vpack.c.b16 %v1026, %v1024
    %v1041 = vpack.c.b16 %v1029, %v1027
    %v1042 = vpack.c.b16 %v1030, %v1028
    %v1043 = vpack.c.b16 %v1033, %v1031
    %v1044 = vpack.c.b16 %v1034, %v1032
    %v1045 = vpack.c.b16 %v1037, %v1035
    %v1046 = vpack.c.b16 %v1038, %v1036
    %v1056 = vsel %vm375, %v991, 0
    %v1059 = vsel %vm375, %v992, 0
    %v1062 = vsel %vm375, %v993, 0
    %v1065 = vsel %vm375, %v994, 0
    %1067 = vmatprep.subr.bf16.mxu0 %v1040
    %1068 = vmatpush1.bf16.msra.mxu0 %v1039
    %1069 = vmatprep.subr.bf16.mxu0 %v1042
    %1070 = vmatpush1.bf16.msra.mxu0 %v1041
    %1071 = vmatprep.subr.bf16.mxu0 %v1044
    %1072 = vmatpush1.bf16.msra.mxu0 %v1043
    %1073 = vmatprep.subr.bf16.mxu0 %v1046
    %1074 = vmatpush1.bf16.msra.mxu0 %v1045
    %1075 = vmatprep.subr.bf16.mxu0 0
    %1076 = vmatpush1.bf16.msra.mxu0 0
    %1077 = vmatprep.subr.bf16.mxu0 0
    %1078 = vmatpush1.bf16.msra.mxu0 0
    %1079 = vmatprep.subr.bf16.mxu0 0
    %1080 = vmatpush1.bf16.msra.mxu0 0
    %1081 = vmatprep.subr.bf16.mxu0 0
    %1082 = vmatpush1.bf16.msra.mxu0 0
    %1083 = vmatprep.subr.bf16.mxu0 0
    %1084 = vmatpush1.bf16.msra.mxu0 0
    %1085 = vmatprep.subr.bf16.mxu0 0
    %1086 = vmatpush1.bf16.msra.mxu0 0
    %1087 = vmatprep.subr.bf16.mxu0 0
    %1088 = vmatpush1.bf16.msra.mxu0 0
    %1089 = vmatprep.subr.bf16.mxu0 0
    %1090 = vmatpush1.bf16.msra.mxu0 0
    %1091 = vmatprep.subr.bf16.mxu0 0
    %1092 = vmatpush1.bf16.msra.mxu0 0
    %1093 = vmatprep.subr.bf16.mxu0 0
    %1094 = vmatpush1.bf16.msra.mxu0 0
    %1095 = vmatprep.subr.bf16.mxu0 0
    %1096 = vmatpush1.bf16.msra.mxu0 0
    %1097 = vmatprep.subr.bf16.mxu0 0
    %1098 = vmatpush1.bf16.msra.mxu0 0
    %1099 = vmatprep.mubr.bf16.mxu0 0
    %1100 = vmatmul.mubr.bf16.gmra.mrb[0].mxu0 %v1056
    %v1101 = vpop.f32.mrb[0].mxu0
    %v1102 = vadd.f32 %v1008, %v1101
    %v1103 = vpop.f32.mrb[0].mxu0
    %v1104 = vadd.f32 %v1012, %v1103
    %v1105 = vpop.f32.mrb[0].mxu0
    %v1106 = vadd.f32 %v1008, %v1105
    %v1107 = vpop.f32.mrb[0].mxu0
    %v1108 = vadd.f32 %v1012, %v1107
    %1109 = vmatprep.mubr.bf16.mxu0 0
    %1110 = vmatmul.mubr.bf16.gmra.mrb[0].mxu0 %v1059
    %v1111 = vpop.f32.mrb[0].mxu0
    %v1112 = vadd.f32 %v1008, %v1111
    %v1113 = vpop.f32.mrb[0].mxu0
    %v1114 = vadd.f32 %v1012, %v1113
    %v1115 = vpop.f32.mrb[0].mxu0
    %v1116 = vadd.f32 %v1008, %v1115
    %v1117 = vpop.f32.mrb[0].mxu0
    %v1118 = vadd.f32 %v1012, %v1117
    %1119 = vmatprep.mubr.bf16.mxu0 0
    %1120 = vmatmul.mubr.bf16.gmra.mrb[0].mxu0 %v1062
    %v1121 = vpop.f32.mrb[0].mxu0
    %v1122 = vadd.f32 %v1008, %v1121
    %v1123 = vpop.f32.mrb[0].mxu0
    %v1124 = vadd.f32 %v1012, %v1123
    %v1125 = vpop.f32.mrb[0].mxu0
    %v1126 = vadd.f32 %v1008, %v1125
    %v1127 = vpop.f32.mrb[0].mxu0
    %v1128 = vadd.f32 %v1012, %v1127
    %1129 = vmatprep.mubr.bf16.mxu0 0
    %1130 = vmatmul.mubr.bf16.gmra.mrb[0].mxu0 %v1065
    %v1131 = vpop.f32.mrb[0].mxu0
    %v1132 = vadd.f32 %v1008, %v1131
    %v1133 = vpop.f32.mrb[0].mxu0
    %v1134 = vadd.f32 %v1012, %v1133
    %v1135 = vpop.f32.mrb[0].mxu0
    %v1136 = vadd.f32 %v1008, %v1135
    %v1137 = vpop.f32.mrb[0].mxu0
    %v1138 = vadd.f32 %v1012, %v1137
    %1139 = vdwg.mxu0
    %1140 = vst [vmem:[#allocation2] sm:$0xff] %v1102
    %1141 = vst [vmem:[#allocation2 + $0x8] sm:$0xff] %v1104
    %1142 = vst [vmem:[#allocation2 + $0x10] sm:$0xff] %v1106
    %1143 = vst [vmem:[#allocation2 + $0x18] sm:$0xff] %v1108
    %1144 = vst [vmem:[#allocation2 + $0x20] sm:$0xff] %v1112
    %1145 = vst [vmem:[#allocation2 + $0x28] sm:$0xff] %v1114
    %1146 = vst [vmem:[#allocation2 + $0x30] sm:$0xff] %v1116
    %1147 = vst [vmem:[#allocation2 + $0x38] sm:$0xff] %v1118
    %1148 = vst [vmem:[#allocation2 + $0x40] sm:$0xff] %v1122
    %1149 = vst [vmem:[#allocation2 + $0x48] sm:$0xff] %v1124
    %1150 = vst [vmem:[#allocation2 + $0x50] sm:$0xff] %v1126
    %1151 = vst [vmem:[#allocation2 + $0x58] sm:$0xff] %v1128
    %1152 = vst [vmem:[#allocation2 + $0x60] sm:$0xff] %v1132
    %1153 = vst [vmem:[#allocation2 + $0x68] sm:$0xff] %v1134
    %1154 = vst [vmem:[#allocation2 + $0x70] sm:$0xff] %v1136
    %1155 = vst [vmem:[#allocation2 + $0x78] sm:$0xff] %v1138
    %v1156 = vld [vmem:[#allocation10] sm:$0xff]
    %v1157 = vld [vmem:[#allocation10 + $0x8] sm:$0xff]
    %v1158 = vld [vmem:[#allocation10 + $0x10] sm:$0xff]
    %v1159 = vld [vmem:[#allocation10 + $0x18] sm:$0xff]
    %v1160 = vld [vmem:[#allocation10 + $0x20] sm:$0xff]
    %v1161 = vld [vmem:[#allocation10 + $0x28] sm:$0xff]
    %v1162 = vld [vmem:[#allocation10 + $0x30] sm:$0xff]
    %v1163 = vld [vmem:[#allocation10 + $0x38] sm:$0xff]
    %v1164 = vld [vmem:[#allocation2] sm:$0xff]
    %v1165 = vld [vmem:[#allocation2 + $0x8] sm:$0xff]
    %v1166 = vld [vmem:[#allocation2 + $0x70] sm:$0xff]
    %v1167 = vld [vmem:[#allocation2 + $0x78] sm:$0xff]
    %v1168 = vsel %vm120, %v1164, %v1166
    %v1169 = vsel %vm121, %v1165, %v1167
    %v1170 = vxor.u32 %v1168, 2147483648
    %v1171 = vmul.f32 %v1170, 1.442695
    %v1172 = vpow.pop %v1171
    %v1173 = vadd.f32 %v1172, 1.0
    %v1174 = vrcp.pop %v1173
    %v1175 = vmul.f32 1.0, %v1174
    %v1176 = vtanh.pop %v1169
    %v1177 = vxor.u32 %v1169, 2147483648
    %v1178 = vmul.f32 %v1177, 1.442695
    %v1179 = vpow.pop %v1178
    %v1180 = vadd.f32 %v1179, 1.0
    %v1181 = vrcp.pop %v1180
    %v1182 = vmul.f32 1.0, %v1181
    %v1183 = vmul.f32 %v1175, %v1176
    %v1184 = vtanh.pop %v1183
    %1186 = vrot.lane.b32.xlu0 %v1184, 64
    %v1187 = vpop.permute.xlu0 %1186
    %v1189 = vmul.f32 %v1182, %v1187
    %v1190 = vld [vmem:[%s321] sm:$0xff]
    %v1191 = vld [vmem:[%s321 + $0x8] sm:$0xff]
    %v1192 = vld [vmem:[%s326] sm:$0xff]
    %v1193 = vld [vmem:[%s326 + $0x8] sm:$0xff]
    %v1194 = vsel %vm120, %v1190, %v1192
    %v1195 = vsel %vm121, %v1191, %v1193
    %v1196 = vpack.c.bf16 %v1189, %v1189
    %1198 = vrot.lane.b32.xlu0 %v1196, 64
    %v1199 = vpop.permute.xlu0 %1198
    %v1208 = vunpack.c.l.b16 %v1156
    %v1209 = vunpack.c.h.b16 %v1156
    %v1210 = vunpack.c.l.b16 %v1157
    %v1211 = vunpack.c.h.b16 %v1157
    %v1212 = vunpack.c.l.b16 %v1158
    %v1213 = vunpack.c.h.b16 %v1158
    %v1214 = vunpack.c.l.b16 %v1159
    %v1215 = vunpack.c.h.b16 %v1159
    %v1216 = vunpack.c.l.b16 %v1160
    %v1217 = vunpack.c.h.b16 %v1160
    %v1218 = vunpack.c.l.b16 %v1161
    %v1219 = vunpack.c.h.b16 %v1161
    %v1220 = vunpack.c.l.b16 %v1162
    %v1221 = vunpack.c.h.b16 %v1162
    %v1222 = vunpack.c.l.b16 %v1163
    %v1223 = vunpack.c.h.b16 %v1163
    %v1224 = vpack.c.b16 %v1210, %v1208
    %v1225 = vpack.c.b16 %v1211, %v1209
    %v1226 = vpack.c.b16 %v1214, %v1212
    %v1227 = vpack.c.b16 %v1215, %v1213
    %v1228 = vpack.c.b16 %v1218, %v1216
    %v1229 = vpack.c.b16 %v1219, %v1217
    %v1230 = vpack.c.b16 %v1222, %v1220
    %v1231 = vpack.c.b16 %v1223, %v1221
    %v1241 = vsel %vm375, %v1199, 0
    %1243 = vmatprep.subr.bf16.mxu0 %v1225
    %1244 = vmatpush1.bf16.msra.mxu0 %v1224
    %1245 = vmatprep.subr.bf16.mxu0 %v1227
    %1246 = vmatpush1.bf16.msra.mxu0 %v1226
    %1247 = vmatprep.subr.bf16.mxu0 %v1229
    %1248 = vmatpush1.bf16.msra.mxu0 %v1228
    %1249 = vmatprep.subr.bf16.mxu0 %v1231
    %1250 = vmatpush1.bf16.msra.mxu0 %v1230
    %1251 = vmatprep.subr.bf16.mxu0 0
    %1252 = vmatpush1.bf16.msra.mxu0 0
    %1253 = vmatprep.subr.bf16.mxu0 0
    %1254 = vmatpush1.bf16.msra.mxu0 0
    %1255 = vmatprep.subr.bf16.mxu0 0
    %1256 = vmatpush1.bf16.msra.mxu0 0
    %1257 = vmatprep.subr.bf16.mxu0 0
    %1258 = vmatpush1.bf16.msra.mxu0 0
    %1259 = vmatprep.subr.bf16.mxu0 0
    %1260 = vmatpush1.bf16.msra.mxu0 0
    %1261 = vmatprep.subr.bf16.mxu0 0
    %1262 = vmatpush1.bf16.msra.mxu0 0
    %1263 = vmatprep.subr.bf16.mxu0 0
    %1264 = vmatpush1.bf16.msra.mxu0 0
    %1265 = vmatprep.subr.bf16.mxu0 0
    %1266 = vmatpush1.bf16.msra.mxu0 0
    %1267 = vmatprep.subr.bf16.mxu0 0
    %1268 = vmatpush1.bf16.msra.mxu0 0
    %1269 = vmatprep.subr.bf16.mxu0 0
    %1270 = vmatpush1.bf16.msra.mxu0 0
    %1271 = vmatprep.subr.bf16.mxu0 0
    %1272 = vmatpush1.bf16.msra.mxu0 0
    %1273 = vmatprep.subr.bf16.mxu0 0
    %1274 = vmatpush1.bf16.msra.mxu0 0
    %1275 = vmatprep.mubr.bf16.mxu0 0
    %1276 = vmatmul.mubr.bf16.gmra.mrb[0].mxu0 %v1241
    %v1277 = vpop.f32.mrb[0].mxu0
    %v1278 = vadd.f32 0.0, %v1277
    %v1279 = vpop.f32.mrb[0].mxu0
    %v1280 = vadd.f32 0.0, %v1279
    %v1281 = vpop.f32.mrb[0].mxu0
    %v1282 = vpop.f32.mrb[0].mxu0
    %1283 = vdwg.mxu0
    %v1284 = vadd.f32 %v1194, %v1278
    %v1285 = vadd.f32 %v1195, %v1280
    %v1286 = vxor.u32 %v1284, 2147483648
    %v1287 = vmul.f32 %v1286, 1.442695
    %v1288 = vpow.pop %v1287
    %v1289 = vadd.f32 %v1288, 1.0
    %v1290 = vrcp.pop %v1289
    %v1291 = vmul.f32 1.0, %v1290
    %v1292 = vtanh.pop %v1285
    %v1293 = vxor.u32 %v1285, 2147483648
    %v1294 = vmul.f32 %v1293, 1.442695
    %v1295 = vpow.pop %v1294
    %v1296 = vadd.f32 %v1295, 1.0
    %v1297 = vrcp.pop %v1296
    %v1298 = vmul.f32 1.0, %v1297
    %1300 = vrot.lane.b32.xlu0 %v1183, 64
    %v1301 = vpop.permute.xlu0 %1300
    %v1303 = vmul.f32 %v1291, %v1301
    %v1304 = vmul.f32 %v1291, %v1292
    %1306 = vrot.lane.b32.xlu0 %v1304, 64
    %v1307 = vpop.permute.xlu0 %1306
    %v1309 = vadd.f32 %v1303, %v1307
    %v1310 = vtanh.pop %v1309
    %v1311 = vmul.f32 %v1298, %v1310
    %v1312 = vld [vmem:[%s458] sm:$0xff]
    %v1313 = vld [vmem:[%s458 + $0x8] sm:$0xff]
    %v1314 = vld [vmem:[%s463] sm:$0xff]
    %v1315 = vld [vmem:[%s463 + $0x8] sm:$0xff]
    %v1316 = vsel %vm120, %v1312, %v1314
    %v1317 = vsel %vm121, %v1313, %v1315
    %v1318 = vpack.c.bf16 %v1311, %v1311
    %1320 = vrot.lane.b32.xlu0 %v1318, 64
    %v1321 = vpop.permute.xlu0 %1320
    %v1323 = vsel %vm375, %v1321, 0
    %1325 = vmatprep.subr.bf16.mxu0 %v1225
    %1326 = vmatpush1.bf16.msra.mxu0 %v1224
    %1327 = vmatprep.subr.bf16.mxu0 %v1227
    %1328 = vmatpush1.bf16.msra.mxu0 %v1226
    %1329 = vmatprep.subr.bf16.mxu0 %v1229
    %1330 = vmatpush1.bf16.msra.mxu0 %v1228
    %1331 = vmatprep.subr.bf16.mxu0 %v1231
    %1332 = vmatpush1.bf16.msra.mxu0 %v1230
    %1333 = vmatprep.subr.bf16.mxu0 0
    %1334 = vmatpush1.bf16.msra.mxu0 0
    %1335 = vmatprep.subr.bf16.mxu0 0
    %1336 = vmatpush1.bf16.msra.mxu0 0
    %1337 = vmatprep.subr.bf16.mxu0 0
    %1338 = vmatpush1.bf16.msra.mxu0 0
    %1339 = vmatprep.subr.bf16.mxu0 0
    %1340 = vmatpush1.bf16.msra.mxu0 0
    %1341 = vmatprep.subr.bf16.mxu0 0
    %1342 = vmatpush1.bf16.msra.mxu0 0
    %1343 = vmatprep.subr.bf16.mxu0 0
    %1344 = vmatpush1.bf16.msra.mxu0 0
    %1345 = vmatprep.subr.bf16.mxu0 0
    %1346 = vmatpush1.bf16.msra.mxu0 0
    %1347 = vmatprep.subr.bf16.mxu0 0
    %1348 = vmatpush1.bf16.msra.mxu0 0
    %1349 = vmatprep.subr.bf16.mxu0 0
    %1350 = vmatpush1.bf16.msra.mxu0 0
    %1351 = vmatprep.subr.bf16.mxu0 0
    %1352 = vmatpush1.bf16.msra.mxu0 0
    %1353 = vmatprep.subr.bf16.mxu0 0
    %1354 = vmatpush1.bf16.msra.mxu0 0
    %1355 = vmatprep.subr.bf16.mxu0 0
    %1356 = vmatpush1.bf16.msra.mxu0 0
    %1357 = vmatprep.mubr.bf16.mxu0 0
    %1358 = vmatmul.mubr.bf16.gmra.mrb[0].mxu0 %v1323
    %v1359 = vpop.f32.mrb[0].mxu0
    %v1360 = vadd.f32 0.0, %v1359
    %v1361 = vpop.f32.mrb[0].mxu0
    %v1362 = vadd.f32 0.0, %v1361
    %v1363 = vpop.f32.mrb[0].mxu0
    %v1364 = vpop.f32.mrb[0].mxu0
    %1365 = vdwg.mxu0
    %v1366 = vadd.f32 %v1316, %v1360
    %v1367 = vadd.f32 %v1317, %v1362
    %v1368 = vxor.u32 %v1366, 2147483648
    %v1369 = vmul.f32 %v1368, 1.442695
    %v1370 = vpow.pop %v1369
    %v1371 = vadd.f32 %v1370, 1.0
    %v1372 = vrcp.pop %v1371
    %v1373 = vmul.f32 1.0, %v1372
    %v1374 = vtanh.pop %v1367
    %v1375 = vxor.u32 %v1367, 2147483648
    %v1376 = vmul.f32 %v1375, 1.442695
    %v1377 = vpow.pop %v1376
    %v1378 = vadd.f32 %v1377, 1.0
    %v1379 = vrcp.pop %v1378
    %v1380 = vmul.f32 1.0, %v1379
    %v1381 = vmul.f32 %v1373, %v1309
    %v1382 = vmul.f32 %v1373, %v1374
    %1384 = vrot.lane.b32.xlu0 %v1382, 64
    %v1385 = vpop.permute.xlu0 %1384
    %v1387 = vadd.f32 %v1381, %v1385
    %v1388 = vtanh.pop %v1387
    %v1389 = vmul.f32 %v1380, %v1388
    %v1390 = vld [vmem:[%s550] sm:$0xff]
    %v1391 = vld [vmem:[%s550 + $0x8] sm:$0xff]
    %v1392 = vld [vmem:[%s555] sm:$0xff]
    %v1393 = vld [vmem:[%s555 + $0x8] sm:$0xff]
    %v1394 = vsel %vm120, %v1390, %v1392
    %v1395 = vsel %vm121, %v1391, %v1393
    %v1396 = vpack.c.bf16 %v1389, %v1389
    %1398 = vrot.lane.b32.xlu0 %v1396, 64
    %v1399 = vpop.permute.xlu0 %1398
    %v1401 = vsel %vm375, %v1399, 0
    %1403 = vmatprep.subr.bf16.mxu0 %v1225
    %1404 = vmatpush1.bf16.msra.mxu0 %v1224
    %1405 = vmatprep.subr.bf16.mxu0 %v1227
    %1406 = vmatpush1.bf16.msra.mxu0 %v1226
    %1407 = vmatprep.subr.bf16.mxu0 %v1229
    %1408 = vmatpush1.bf16.msra.mxu0 %v1228
    %1409 = vmatprep.subr.bf16.mxu0 %v1231
    %1410 = vmatpush1.bf16.msra.mxu0 %v1230
    %1411 = vmatprep.subr.bf16.mxu0 0
    %1412 = vmatpush1.bf16.msra.mxu0 0
    %1413 = vmatprep.subr.bf16.mxu0 0
    %1414 = vmatpush1.bf16.msra.mxu0 0
    %1415 = vmatprep.subr.bf16.mxu0 0
    %1416 = vmatpush1.bf16.msra.mxu0 0
    %1417 = vmatprep.subr.bf16.mxu0 0
    %1418 = vmatpush1.bf16.msra.mxu0 0
    %1419 = vmatprep.subr.bf16.mxu0 0
    %1420 = vmatpush1.bf16.msra.mxu0 0
    %1421 = vmatprep.subr.bf16.mxu0 0
    %1422 = vmatpush1.bf16.msra.mxu0 0
    %1423 = vmatprep.subr.bf16.mxu0 0
    %1424 = vmatpush1.bf16.msra.mxu0 0
    %1425 = vmatprep.subr.bf16.mxu0 0
    %1426 = vmatpush1.bf16.msra.mxu0 0
    %1427 = vmatprep.subr.bf16.mxu0 0
    %1428 = vmatpush1.bf16.msra.mxu0 0
    %1429 = vmatprep.subr.bf16.mxu0 0
    %1430 = vmatpush1.bf16.msra.mxu0 0
    %1431 = vmatprep.subr.bf16.mxu0 0
    %1432 = vmatpush1.bf16.msra.mxu0 0
    %1433 = vmatprep.subr.bf16.mxu0 0
    %1434 = vmatpush1.bf16.msra.mxu0 0
    %1435 = vmatprep.mubr.bf16.mxu0 0
    %1436 = vmatmul.mubr.bf16.gmra.mrb[0].mxu0 %v1401
    %v1437 = vpop.f32.mrb[0].mxu0
    %v1438 = vadd.f32 0.0, %v1437
    %v1439 = vpop.f32.mrb[0].mxu0
    %v1440 = vadd.f32 0.0, %v1439
    %v1441 = vpop.f32.mrb[0].mxu0
    %v1442 = vpop.f32.mrb[0].mxu0
    %1443 = vdwg.mxu0
    %v1444 = vadd.f32 %v1394, %v1438
    %v1445 = vadd.f32 %v1395, %v1440
    %v1446 = vxor.u32 %v1444, 2147483648
    %v1447 = vmul.f32 %v1446, 1.442695
    %v1448 = vpow.pop %v1447
    %v1449 = vadd.f32 %v1448, 1.0
    %v1450 = vrcp.pop %v1449
    %v1451 = vmul.f32 1.0, %v1450
    %v1452 = vtanh.pop %v1445
    %v1453 = vxor.u32 %v1445, 2147483648
    %v1454 = vmul.f32 %v1453, 1.442695
    %v1455 = vpow.pop %v1454
    %v1456 = vadd.f32 %v1455, 1.0
    %v1457 = vrcp.pop %v1456
    %v1458 = vmul.f32 1.0, %v1457
    %v1459 = vmul.f32 %v1451, %v1387
    %v1460 = vmul.f32 %v1451, %v1452
    %1462 = vrot.lane.b32.xlu0 %v1460, 64
    %v1463 = vpop.permute.xlu0 %1462
    %v1465 = vadd.f32 %v1459, %v1463
    %v1466 = vtanh.pop %v1465
    %v1467 = vmul.f32 %v1458, %v1466
    %v1468 = vsel %vm120, %v1392, %v1390
    %v1469 = vsel %vm121, %v1393, %v1391
    %v1470 = vpack.c.bf16 %v1467, %v1467
    %1472 = vrot.lane.b32.xlu0 %v1470, 64
    %v1473 = vpop.permute.xlu0 %1472
    %v1475 = vsel %vm375, %v1473, 0
    %1477 = vmatprep.subr.bf16.mxu0 %v1225
    %1478 = vmatpush1.bf16.msra.mxu0 %v1224
    %1479 = vmatprep.subr.bf16.mxu0 %v1227
    %1480 = vmatpush1.bf16.msra.mxu0 %v1226
    %1481 = vmatprep.subr.bf16.mxu0 %v1229
    %1482 = vmatpush1.bf16.msra.mxu0 %v1228
    %1483 = vmatprep.subr.bf16.mxu0 %v1231
    %1484 = vmatpush1.bf16.msra.mxu0 %v1230
    %1485 = vmatprep.subr.bf16.mxu0 0
    %1486 = vmatpush1.bf16.msra.mxu0 0
    %1487 = vmatprep.subr.bf16.mxu0 0
    %1488 = vmatpush1.bf16.msra.mxu0 0
    %1489 = vmatprep.subr.bf16.mxu0 0
    %1490 = vmatpush1.bf16.msra.mxu0 0
    %1491 = vmatprep.subr.bf16.mxu0 0
    %1492 = vmatpush1.bf16.msra.mxu0 0
    %1493 = vmatprep.subr.bf16.mxu0 0
    %1494 = vmatpush1.bf16.msra.mxu0 0
    %1495 = vmatprep.subr.bf16.mxu0 0
    %1496 = vmatpush1.bf16.msra.mxu0 0
    %1497 = vmatprep.subr.bf16.mxu0 0
    %1498 = vmatpush1.bf16.msra.mxu0 0
    %1499 = vmatprep.subr.bf16.mxu0 0
    %1500 = vmatpush1.bf16.msra.mxu0 0
    %1501 = vmatprep.subr.bf16.mxu0 0
    %1502 = vmatpush1.bf16.msra.mxu0 0
    %1503 = vmatprep.subr.bf16.mxu0 0
    %1504 = vmatpush1.bf16.msra.mxu0 0
    %1505 = vmatprep.subr.bf16.mxu0 0
    %1506 = vmatpush1.bf16.msra.mxu0 0
    %1507 = vmatprep.subr.bf16.mxu0 0
    %1508 = vmatpush1.bf16.msra.mxu0 0
    %1509 = vmatprep.mubr.bf16.mxu0 0
    %1510 = vmatmul.mubr.bf16.gmra.mrb[0].mxu0 %v1475
    %v1511 = vpop.f32.mrb[0].mxu0
    %v1512 = vadd.f32 0.0, %v1511
    %v1513 = vpop.f32.mrb[0].mxu0
    %v1514 = vadd.f32 0.0, %v1513
    %v1515 = vpop.f32.mrb[0].mxu0
    %v1516 = vpop.f32.mrb[0].mxu0
    %1517 = vdwg.mxu0
    %v1518 = vadd.f32 %v1468, %v1512
    %v1519 = vadd.f32 %v1469, %v1514
    %v1520 = vxor.u32 %v1518, 2147483648
    %v1521 = vmul.f32 %v1520, 1.442695
    %v1522 = vpow.pop %v1521
    %v1523 = vadd.f32 %v1522, 1.0
    %v1524 = vrcp.pop %v1523
    %v1525 = vmul.f32 1.0, %v1524
    %v1526 = vtanh.pop %v1519
    %v1527 = vxor.u32 %v1519, 2147483648
    %v1528 = vmul.f32 %v1527, 1.442695
    %v1529 = vpow.pop %v1528
    %v1530 = vadd.f32 %v1529, 1.0
    %v1531 = vrcp.pop %v1530
    %v1532 = vmul.f32 1.0, %v1531
    %v1533 = vmul.f32 %v1525, %v1465
    %v1534 = vmul.f32 %v1525, %v1526
    %1536 = vrot.lane.b32.xlu0 %v1534, 64
    %v1537 = vpop.permute.xlu0 %1536
    %v1539 = vadd.f32 %v1533, %v1537
    %v1540 = vtanh.pop %v1539
    %v1541 = vmul.f32 %v1532, %v1540
    %v1542 = vsel %vm120, %v1314, %v1312
    %v1543 = vsel %vm121, %v1315, %v1313
    %v1544 = vpack.c.bf16 %v1541, %v1541
    %1546 = vrot.lane.b32.xlu0 %v1544, 64
    %v1547 = vpop.permute.xlu0 %1546
    %v1549 = vsel %vm375, %v1547, 0
    %1551 = vmatprep.subr.bf16.mxu0 %v1225
    %1552 = vmatpush1.bf16.msra.mxu0 %v1224
    %1553 = vmatprep.subr.bf16.mxu0 %v1227
    %1554 = vmatpush1.bf16.msra.mxu0 %v1226
    %1555 = vmatprep.subr.bf16.mxu0 %v1229
    %1556 = vmatpush1.bf16.msra.mxu0 %v1228
    %1557 = vmatprep.subr.bf16.mxu0 %v1231
    %1558 = vmatpush1.bf16.msra.mxu0 %v1230
    %1559 = vmatprep.subr.bf16.mxu0 0
    %1560 = vmatpush1.bf16.msra.mxu0 0
    %1561 = vmatprep.subr.bf16.mxu0 0
    %1562 = vmatpush1.bf16.msra.mxu0 0
    %1563 = vmatprep.subr.bf16.mxu0 0
    %1564 = vmatpush1.bf16.msra.mxu0 0
    %1565 = vmatprep.subr.bf16.mxu0 0
    %1566 = vmatpush1.bf16.msra.mxu0 0
    %1567 = vmatprep.subr.bf16.mxu0 0
    %1568 = vmatpush1.bf16.msra.mxu0 0
    %1569 = vmatprep.subr.bf16.mxu0 0
    %1570 = vmatpush1.bf16.msra.mxu0 0
    %1571 = vmatprep.subr.bf16.mxu0 0
    %1572 = vmatpush1.bf16.msra.mxu0 0
    %1573 = vmatprep.subr.bf16.mxu0 0
    %1574 = vmatpush1.bf16.msra.mxu0 0
    %1575 = vmatprep.subr.bf16.mxu0 0
    %1576 = vmatpush1.bf16.msra.mxu0 0
    %1577 = vmatprep.subr.bf16.mxu0 0
    %1578 = vmatpush1.bf16.msra.mxu0 0
    %1579 = vmatprep.subr.bf16.mxu0 0
    %1580 = vmatpush1.bf16.msra.mxu0 0
    %1581 = vmatprep.subr.bf16.mxu0 0
    %1582 = vmatpush1.bf16.msra.mxu0 0
    %1583 = vmatprep.mubr.bf16.mxu0 0
    %1584 = vmatmul.mubr.bf16.gmra.mrb[0].mxu0 %v1549
    %v1585 = vpop.f32.mrb[0].mxu0
    %v1586 = vadd.f32 0.0, %v1585
    %v1587 = vpop.f32.mrb[0].mxu0
    %v1588 = vadd.f32 0.0, %v1587
    %v1589 = vpop.f32.mrb[0].mxu0
    %v1590 = vpop.f32.mrb[0].mxu0
    %1591 = vdwg.mxu0
    %v1592 = vadd.f32 %v1542, %v1586
    %v1593 = vadd.f32 %v1543, %v1588
    %v1594 = vxor.u32 %v1592, 2147483648
    %v1595 = vmul.f32 %v1594, 1.442695
    %v1596 = vpow.pop %v1595
    %v1597 = vadd.f32 %v1596, 1.0
    %v1598 = vrcp.pop %v1597
    %v1599 = vmul.f32 1.0, %v1598
    %v1600 = vtanh.pop %v1593
    %v1601 = vxor.u32 %v1593, 2147483648
    %v1602 = vmul.f32 %v1601, 1.442695
    %v1603 = vpow.pop %v1602
    %v1604 = vadd.f32 %v1603, 1.0
    %v1605 = vrcp.pop %v1604
    %v1606 = vmul.f32 1.0, %v1605
    %v1607 = vmul.f32 %v1599, %v1539
    %v1608 = vmul.f32 %v1599, %v1600
    %1610 = vrot.lane.b32.xlu0 %v1608, 64
    %v1611 = vpop.permute.xlu0 %1610
    %v1613 = vadd.f32 %v1607, %v1611
    %v1614 = vtanh.pop %v1613
    %v1615 = vmul.f32 %v1606, %v1614
    %v1616 = vsel %vm120, %v1192, %v1190
    %v1617 = vsel %vm121, %v1193, %v1191
    %v1618 = vpack.c.bf16 %v1615, %v1615
    %1620 = vrot.lane.b32.xlu0 %v1618, 64
    %v1621 = vpop.permute.xlu0 %1620
    %v1623 = vsel %vm375, %v1621, 0
    %1625 = vmatprep.subr.bf16.mxu0 %v1225
    %1626 = vmatpush1.bf16.msra.mxu0 %v1224
    %1627 = vmatprep.subr.bf16.mxu0 %v1227
    %1628 = vmatpush1.bf16.msra.mxu0 %v1226
    %1629 = vmatprep.subr.bf16.mxu0 %v1229
    %1630 = vmatpush1.bf16.msra.mxu0 %v1228
    %1631 = vmatprep.subr.bf16.mxu0 %v1231
    %1632 = vmatpush1.bf16.msra.mxu0 %v1230
    %1633 = vmatprep.subr.bf16.mxu0 0
    %1634 = vmatpush1.bf16.msra.mxu0 0
    %1635 = vmatprep.subr.bf16.mxu0 0
    %1636 = vmatpush1.bf16.msra.mxu0 0
    %1637 = vmatprep.subr.bf16.mxu0 0
    %1638 = vmatpush1.bf16.msra.mxu0 0
    %1639 = vmatprep.subr.bf16.mxu0 0
    %1640 = vmatpush1.bf16.msra.mxu0 0
    %1641 = vmatprep.subr.bf16.mxu0 0
    %1642 = vmatpush1.bf16.msra.mxu0 0
    %1643 = vmatprep.subr.bf16.mxu0 0
    %1644 = vmatpush1.bf16.msra.mxu0 0
    %1645 = vmatprep.subr.bf16.mxu0 0
    %1646 = vmatpush1.bf16.msra.mxu0 0
    %1647 = vmatprep.subr.bf16.mxu0 0
    %1648 = vmatpush1.bf16.msra.mxu0 0
    %1649 = vmatprep.subr.bf16.mxu0 0
    %1650 = vmatpush1.bf16.msra.mxu0 0
    %1651 = vmatprep.subr.bf16.mxu0 0
    %1652 = vmatpush1.bf16.msra.mxu0 0
    %1653 = vmatprep.subr.bf16.mxu0 0
    %1654 = vmatpush1.bf16.msra.mxu0 0
    %1655 = vmatprep.subr.bf16.mxu0 0
    %1656 = vmatpush1.bf16.msra.mxu0 0
    %1657 = vmatprep.mubr.bf16.mxu0 0
    %1658 = vmatmul.mubr.bf16.gmra.mrb[0].mxu0 %v1623
    %v1659 = vpop.f32.mrb[0].mxu0
    %v1660 = vadd.f32 0.0, %v1659
    %v1661 = vpop.f32.mrb[0].mxu0
    %v1662 = vadd.f32 0.0, %v1661
    %v1663 = vpop.f32.mrb[0].mxu0
    %v1664 = vpop.f32.mrb[0].mxu0
    %1665 = vdwg.mxu0
    %v1666 = vadd.f32 %v1616, %v1660
    %v1667 = vadd.f32 %v1617, %v1662
    %v1668 = vxor.u32 %v1666, 2147483648
    %v1669 = vmul.f32 %v1668, 1.442695
    %v1670 = vpow.pop %v1669
    %v1671 = vadd.f32 %v1670, 1.0
    %v1672 = vrcp.pop %v1671
    %v1673 = vmul.f32 1.0, %v1672
    %v1674 = vtanh.pop %v1667
    %v1675 = vxor.u32 %v1667, 2147483648
    %v1676 = vmul.f32 %v1675, 1.442695
    %v1677 = vpow.pop %v1676
    %v1678 = vadd.f32 %v1677, 1.0
    %v1679 = vrcp.pop %v1678
    %v1680 = vmul.f32 1.0, %v1679
    %v1681 = vmul.f32 %v1673, %v1613
    %v1682 = vmul.f32 %v1673, %v1674
    %1684 = vrot.lane.b32.xlu0 %v1682, 64
    %v1685 = vpop.permute.xlu0 %1684
    %v1687 = vadd.f32 %v1681, %v1685
    %v1688 = vtanh.pop %v1687
    %v1689 = vmul.f32 %v1680, %v1688
    %v1690 = vld [vmem:[%s894] sm:$0xff]
    %v1691 = vld [vmem:[%s894 + $0x8] sm:$0xff]
    %v1692 = vld [vmem:[%s899] sm:$0xff]
    %v1693 = vld [vmem:[%s899 + $0x8] sm:$0xff]
    %v1694 = vsel %vm120, %v1690, %v1692
    %v1695 = vsel %vm121, %v1691, %v1693
    %v1696 = vpack.c.bf16 %v1689, %v1689
    %1698 = vrot.lane.b32.xlu0 %v1696, 64
    %v1699 = vpop.permute.xlu0 %1698
    %v1701 = vsel %vm375, %v1699, 0
    %1703 = vmatprep.subr.bf16.mxu0 %v1225
    %1704 = vmatpush1.bf16.msra.mxu0 %v1224
    %1705 = vmatprep.subr.bf16.mxu0 %v1227
    %1706 = vmatpush1.bf16.msra.mxu0 %v1226
    %1707 = vmatprep.subr.bf16.mxu0 %v1229
    %1708 = vmatpush1.bf16.msra.mxu0 %v1228
    %1709 = vmatprep.subr.bf16.mxu0 %v1231
    %1710 = vmatpush1.bf16.msra.mxu0 %v1230
    %1711 = vmatprep.subr.bf16.mxu0 0
    %1712 = vmatpush1.bf16.msra.mxu0 0
    %1713 = vmatprep.subr.bf16.mxu0 0
    %1714 = vmatpush1.bf16.msra.mxu0 0
    %1715 = vmatprep.subr.bf16.mxu0 0
    %1716 = vmatpush1.bf16.msra.mxu0 0
    %1717 = vmatprep.subr.bf16.mxu0 0
    %1718 = vmatpush1.bf16.msra.mxu0 0
    %1719 = vmatprep.subr.bf16.mxu0 0
    %1720 = vmatpush1.bf16.msra.mxu0 0
    %1721 = vmatprep.subr.bf16.mxu0 0
    %1722 = vmatpush1.bf16.msra.mxu0 0
    %1723 = vmatprep.subr.bf16.mxu0 0
    %1724 = vmatpush1.bf16.msra.mxu0 0
    %1725 = vmatprep.subr.bf16.mxu0 0
    %1726 = vmatpush1.bf16.msra.mxu0 0
    %1727 = vmatprep.subr.bf16.mxu0 0
    %1728 = vmatpush1.bf16.msra.mxu0 0
    %1729 = vmatprep.subr.bf16.mxu0 0
    %1730 = vmatpush1.bf16.msra.mxu0 0
    %1731 = vmatprep.subr.bf16.mxu0 0
    %1732 = vmatpush1.bf16.msra.mxu0 0
    %1733 = vmatprep.subr.bf16.mxu0 0
    %1734 = vmatpush1.bf16.msra.mxu0 0
    %1735 = vmatprep.mubr.bf16.mxu0 0
    %1736 = vmatmul.mubr.bf16.gmra.mrb[0].mxu0 %v1701
    %v1737 = vpop.f32.mrb[0].mxu0
    %v1738 = vadd.f32 0.0, %v1737
    %v1739 = vpop.f32.mrb[0].mxu0
    %v1740 = vadd.f32 0.0, %v1739
    %v1741 = vpop.f32.mrb[0].mxu0
    %v1742 = vpop.f32.mrb[0].mxu0
    %1743 = vdwg.mxu0
    %v1744 = vadd.f32 %v1694, %v1738
    %v1745 = vadd.f32 %v1695, %v1740
    %v1746 = vxor.u32 %v1744, 2147483648
    %v1747 = vmul.f32 %v1746, 1.442695
    %v1748 = vpow.pop %v1747
    %v1749 = vadd.f32 %v1748, 1.0
    %v1750 = vrcp.pop %v1749
    %v1751 = vmul.f32 1.0, %v1750
    %v1752 = vtanh.pop %v1745
    %v1753 = vxor.u32 %v1745, 2147483648
    %v1754 = vmul.f32 %v1753, 1.442695
    %v1755 = vpow.pop %v1754
    %v1756 = vadd.f32 %v1755, 1.0
    %v1757 = vrcp.pop %v1756
    %v1758 = vmul.f32 1.0, %v1757
    %v1759 = vmul.f32 %v1751, %v1687
    %v1760 = vmul.f32 %v1751, %v1752
    %1762 = vrot.lane.b32.xlu0 %v1760, 64
    %v1763 = vpop.permute.xlu0 %1762
    %v1765 = vadd.f32 %v1759, %v1763
    %v1766 = vtanh.pop %v1765
    %v1767 = vmul.f32 %v1758, %v1766
    %1769 = vrot.lane.b32.xlu0 %v1767, 64
    %v1770 = vpop.permute.xlu0 %1769
    %1773 = vrot.lane.b32.xlu0 %v1189, 64
    %v1774 = vpop.permute.xlu0 %1773
    %v1776 = vsel %vm122, %v1770, %v1774
    %v1777 = vpack.c.bf16 %v1776, %v1776
    %v1778 = vld [vmem:[%s7] sm:$0xf]
    %v1779 = vld [vmem:[%s7 + $0x4] sm:$0xf]
    %v1780 = vld [vmem:[%s7 + $0x8] sm:$0xf]
    %v1781 = vld [vmem:[%s7 + $0xc] sm:$0xf]
    %v1782 = vld [vmem:[%s7 + $0x10] sm:$0xf]
    %v1783 = vld [vmem:[%s7 + $0x14] sm:$0xf]
    %v1784 = vld [vmem:[%s7 + $0x18] sm:$0xf]
    %v1785 = vld [vmem:[%s7 + $0x1c] sm:$0xf]
    %v1786 = vld [vmem:[%s8] sm:$0x1]
    %v1788 = vlaneseq
    %v1789 = vshrl.u32 %v1788, 7
    %v1790 = vsub.s32 0, %v1789
    %v1791 = vrot.slane %v1786, %v1790
    %v1801 = vunpack.c.l.b16 %v1778
    %v1802 = vunpack.c.l.b16 %v1779
    %v1803 = vunpack.c.l.b16 %v1780
    %v1804 = vunpack.c.l.b16 %v1781
    %v1805 = vunpack.c.l.b16 %v1782
    %v1806 = vunpack.c.l.b16 %v1783
    %v1807 = vunpack.c.l.b16 %v1784
    %v1808 = vunpack.c.l.b16 %v1785
    %v1809 = vpack.c.b16 %v1802, %v1801
    %v1810 = vpack.c.b16 %v1804, %v1803
    %v1811 = vpack.c.b16 %v1806, %v1805
    %v1812 = vpack.c.b16 %v1808, %v1807
    %v1818 = vsel %vm375, %v1777, 0
    %1820 = vmatprep.subr.bf16.mxu0 0
    %1821 = vmatpush1.bf16.msra.mxu0 %v1809
    %1822 = vmatprep.subr.bf16.mxu0 0
    %1823 = vmatpush1.bf16.msra.mxu0 %v1810
    %1824 = vmatprep.subr.bf16.mxu0 0
    %1825 = vmatpush1.bf16.msra.mxu0 %v1811
    %1826 = vmatprep.subr.bf16.mxu0 0
    %1827 = vmatpush1.bf16.msra.mxu0 %v1812
    %1828 = vmatprep.subr.bf16.mxu0 0
    %1829 = vmatpush1.bf16.msra.mxu0 0
    %1830 = vmatprep.subr.bf16.mxu0 0
    %1831 = vmatpush1.bf16.msra.mxu0 0
    %1832 = vmatprep.subr.bf16.mxu0 0
    %1833 = vmatpush1.bf16.msra.mxu0 0
    %1834 = vmatprep.subr.bf16.mxu0 0
    %1835 = vmatpush1.bf16.msra.mxu0 0
    %1836 = vmatprep.subr.bf16.mxu0 0
    %1837 = vmatpush1.bf16.msra.mxu0 0
    %1838 = vmatprep.subr.bf16.mxu0 0
    %1839 = vmatpush1.bf16.msra.mxu0 0
    %1840 = vmatprep.subr.bf16.mxu0 0
    %1841 = vmatpush1.bf16.msra.mxu0 0
    %1842 = vmatprep.subr.bf16.mxu0 0
    %1843 = vmatpush1.bf16.msra.mxu0 0
    %1844 = vmatprep.subr.bf16.mxu0 0
    %1845 = vmatpush1.bf16.msra.mxu0 0
    %1846 = vmatprep.subr.bf16.mxu0 0
    %1847 = vmatpush1.bf16.msra.mxu0 0
    %1848 = vmatprep.subr.bf16.mxu0 0
    %1849 = vmatpush1.bf16.msra.mxu0 0
    %1850 = vmatprep.subr.bf16.mxu0 0
    %1851 = vmatpush1.bf16.msra.mxu0 0
    %1852 = vmatprep.mubr.bf16.mxu0 0
    %1853 = vmatmul.mubr.bf16.gmra.mrb[0].mxu0 %v1818
    %v1854 = vpop.f32.mrb[0].mxu0
    %v1855 = vadd.f32 %v1791, %v1854
    %v1856 = vpop.f32.mrb[0].mxu0
    %v1857 = vpop.f32.mrb[0].mxu0
    %v1858 = vpop.f32.mrb[0].mxu0
    %1859 = vdwg.mxu0
    %v1860 = vmax.f32 %v1855, 0.0
    %v1861 = vpack.c.bf16 %v1860, %v1860
    %v1862 = vld [vmem:[%s9] sm:$0xf]
    %v1863 = vld [vmem:[%s9 + $0x4] sm:$0xf]
    %v1864 = vld [vmem:[%s9 + $0x8] sm:$0xf]
    %v1865 = vld [vmem:[%s9 + $0xc] sm:$0xf]
    %v1866 = vld [vmem:[%s9 + $0x10] sm:$0xf]
    %v1867 = vld [vmem:[%s9 + $0x14] sm:$0xf]
    %v1868 = vld [vmem:[%s9 + $0x18] sm:$0xf]
    %v1869 = vld [vmem:[%s9 + $0x1c] sm:$0xf]
    %v1870 = vld [vmem:[%s10] sm:$0x1]
    %v1872 = vlaneseq
    %v1873 = vshrl.u32 %v1872, 7
    %v1874 = vsub.s32 0, %v1873
    %v1875 = vrot.slane %v1870, %v1874
    %v1885 = vunpack.c.l.b16 %v1862
    %v1886 = vunpack.c.l.b16 %v1863
    %v1887 = vunpack.c.l.b16 %v1864
    %v1888 = vunpack.c.l.b16 %v1865
    %v1889 = vunpack.c.l.b16 %v1866
    %v1890 = vunpack.c.l.b16 %v1867
    %v1891 = vunpack.c.l.b16 %v1868
    %v1892 = vunpack.c.l.b16 %v1869
    %v1893 = vpack.c.b16 %v1886, %v1885
    %v1894 = vpack.c.b16 %v1888, %v1887
    %v1895 = vpack.c.b16 %v1890, %v1889
    %v1896 = vpack.c.b16 %v1892, %v1891
    %v1902 = vsel %vm375, %v1861, 0
    %1904 = vmatprep.subr.bf16.mxu0 0
    %1905 = vmatpush1.bf16.msra.mxu0 %v1893
    %1906 = vmatprep.subr.bf16.mxu0 0
    %1907 = vmatpush1.bf16.msra.mxu0 %v1894
    %1908 = vmatprep.subr.bf16.mxu0 0
    %1909 = vmatpush1.bf16.msra.mxu0 %v1895
    %1910 = vmatprep.subr.bf16.mxu0 0
    %1911 = vmatpush1.bf16.msra.mxu0 %v1896
    %1912 = vmatprep.subr.bf16.mxu0 0
    %1913 = vmatpush1.bf16.msra.mxu0 0
    %1914 = vmatprep.subr.bf16.mxu0 0
    %1915 = vmatpush1.bf16.msra.mxu0 0
    %1916 = vmatprep.subr.bf16.mxu0 0
    %1917 = vmatpush1.bf16.msra.mxu0 0
    %1918 = vmatprep.subr.bf16.mxu0 0
    %1919 = vmatpush1.bf16.msra.mxu0 0
    %1920 = vmatprep.subr.bf16.mxu0 0
    %1921 = vmatpush1.bf16.msra.mxu0 0
    %1922 = vmatprep.subr.bf16.mxu0 0
    %1923 = vmatpush1.bf16.msra.mxu0 0
    %1924 = vmatprep.subr.bf16.mxu0 0
    %1925 = vmatpush1.bf16.msra.mxu0 0
    %1926 = vmatprep.subr.bf16.mxu0 0
    %1927 = vmatpush1.bf16.msra.mxu0 0
    %1928 = vmatprep.subr.bf16.mxu0 0
    %1929 = vmatpush1.bf16.msra.mxu0 0
    %1930 = vmatprep.subr.bf16.mxu0 0
    %1931 = vmatpush1.bf16.msra.mxu0 0
    %1932 = vmatprep.subr.bf16.mxu0 0
    %1933 = vmatpush1.bf16.msra.mxu0 0
    %1934 = vmatprep.subr.bf16.mxu0 0
    %1935 = vmatpush1.bf16.msra.mxu0 0
    %1936 = vmatprep.mubr.bf16.mxu0 0
    %1937 = vmatmul.mubr.bf16.gmra.mrb[0].mxu0 %v1902
    %v1938 = vpop.f32.mrb[0].mxu0
    %v1939 = vadd.f32 %v1875, %v1938
    %v1940 = vpop.f32.mrb[0].mxu0
    %v1941 = vpop.f32.mrb[0].mxu0
    %v1942 = vpop.f32.mrb[0].mxu0
    %1943 = vdwg.mxu0
    %vm1944 = vcmask 64512
    %1945 = vst.msk [vmem:[#allocation12] sm:$0xff] %vm1944, %v1939
    // Predicated region
    $region62: #{tpu_custom_call.1} parent=1 // pred_check
      _
    $region63: #{tpu_custom_call.1} parent=1 // pred_check_branch
      %1947 = sbr.rel (0) target = $region65
    $region64: #{tpu_custom_call.1} parent=1 // pred_region
      %s1949 = ssub.s32 128, 128
      %1950 = vsyncadd [#allocation6], %s1949
      %s1952 = sshll.u32 [#allocation12], 4
      %s1953 = int_to_ptr.vmem [resolvable:$true] %s1952
      %1955 = dma.vmem_to_hbm [thread:$0]  %s1953, 128, %s11, [#allocation6]
    $region65: #{tpu_custom_call.1} parent=1 // pred_fallthru
      _
    // Predicated region
    $region66: #{tpu_custom_call.1} parent=1 // pred_check
      _
    $region67: #{tpu_custom_call.1} parent=1 // pred_check_branch
      %1957 = sbr.rel (0) target = $region69
    $region68: #{tpu_custom_call.1} parent=1 // pred_region
      %1958 = dma.done [#allocation6], 128
    $region69: #{tpu_custom_call.1} parent=1 // pred_fallthru
      _
    %1959 = vsyncpa [#allocation5], 1
    %1960 = vsyncpa [#allocation8], 1
    %1961 = vsyncpa [#allocation11], 1
    %1962 = vsyncpa [#allocation6], 1

</llo_original>
